<compile_context>
chip_gen: v7x
topology: tpu7x:2x2x1
jax: 0.10.0
libtpu: 0.0.40
codegen_flags: <defaults>
</compile_context>

<pallas_src>
import math

import jax
import jax.numpy as jnp
from jax.experimental import pallas as pl
from jax.experimental.pallas import tpu as pltpu


# Packed gate-slot order [i | f | o | g]; PT_OF_SLOT[s] = PyTorch gate index
# (PyTorch order [i, f, g, o]) stored in packed slot s.  Keeps all
# sigmoid-activated gates lane-contiguous.
PT_OF_SLOT = (0, 1, 3, 2)


# ----------------------------------------------------------------------------
# Fused kernel: lane-packed per-neuron stacked LSTM + shared fc(T->1) + final fc
# ----------------------------------------------------------------------------
def _make_fused_kernel(num_layers, nblk, hidden):
    L = num_layers
    PH = nblk * hidden          # packed hidden width (neurons on lanes)
    Gp = 4 * PH                 # packed gate width

    def body(x_ref, w0_ref, b0_ref, whh0_ref, wcat_ref, brest_ref,
             fcw_ref, wf_ref, out_ref, gin0_ref):
        T = fcw_ref.shape[0]
        Bp = out_ref.shape[1]

        # ---- one-time work outside the serial recurrence ---------------------
        # Layer-0 gate inputs (input_size == 1) for the whole sequence: a single
        # (T*Bp, Pk) x (Pk, 4*P*H) matmul into VMEM scratch, bias folded in.
        gin0_ref[...] = (
            jnp.dot(x_ref[0], w0_ref[0], preferred_element_type=jnp.float32)
            + b0_ref[0])

        def cell(gates, c):
            # Packed gate layout [i | f | o | g], each P*H lanes wide: one
            # sigmoid over 3*P*H lanes + one tanh over P*H lanes covers the
            # whole neuron block (3 sigmoid + 2 tanh vregs per layer/step).
            sg = jax.nn.sigmoid(gates[:, :3 * PH])
            i = sg[:, :PH]
            f = sg[:, PH:2 * PH]
            o = sg[:, 2 * PH:3 * PH]
            g = jnp.tanh(gates[:, 3 * PH:])
            c_new = f * c + i * g
            return o * jnp.tanh(c_new), c_new

        zeros = jnp.zeros((Bp, PH), jnp.float32)
        carry0 = (tuple(zeros for _ in range(L)),     # h, lane-packed per layer
                  tuple(zeros for _ in range(L)),     # c, lane-packed per layer
                  zeros)                              # online shared-fc accumulator

        def step(t, carry):
            hs, cs, acc = carry
            fcw_t = fcw_ref[t]                        # scalar from SMEM
            row = pl.multiple_of(t * Bp, Bp)          # aligned sublane slice
            # Layer 0: one block-diagonal K=P*H matmul for the whole block.
            gates = gin0_ref[pl.ds(row, Bp), :] + jnp.dot(
                hs[0], whh0_ref[0], preferred_element_type=jnp.float32)
            h, c = cell(gates, cs[0])
            new_h, new_c = [h], [c]
            # Layers >= 1: one fused [W_ih; W_hh] block-diagonal K=2*P*H matmul
            # per layer; bias read (sublane-broadcast) at the add site.
            for l in range(L - 1):
                hc = jnp.concatenate([new_h[l], hs[l + 1]], axis=1)
                gates = jnp.dot(hc, wcat_ref[0, l],
                                preferred_element_type=jnp.float32) + brest_ref[0, l]
                h, c = cell(gates, cs[l + 1])
                new_h.append(h)
                new_c.append(c)
            # Online shared-fc accumulation: one full-vreg FMA for the block.
            acc = acc + fcw_t * new_h[L - 1]
            return tuple(new_h), tuple(new_c), acc

        unroll = T if T <= 16 else 4                  # partial unroll for long T
        _, _, acc = jax.lax.fori_loop(0, T, step, carry0, unroll=unroll)

        # Shared-fc column selection (feature H-1 of each neuron) and the final
        # fc(num_neurons -> O) are fused into one matmul against a row-sparse
        # weight.  Each block writes its own partial-output block; the wrapper
        # sums over blocks and adds the (folded) biases.
        out_ref[0] = jnp.dot(acc, wf_ref[0], preferred_element_type=jnp.float32)

    if L > 1:
        return body

    def body_l1(x_ref, w0_ref, b0_ref, whh0_ref, fcw_ref, wf_ref,
                out_ref, gin0_ref):
        # L == 1: the dummy wcat / brest blocks are not passed (no wasted DMA).
        return body(x_ref, w0_ref, b0_ref, whh0_ref, None, None,
                    fcw_ref, wf_ref, out_ref, gin0_ref)

    return body_l1


# ----------------------------------------------------------------------------
# Block sizing
# ----------------------------------------------------------------------------
def _pick_nblk(N, H, T, Bp):
    """Neurons per block: match NBLK*H to the MXU K width (128 on v5e, 256 on
    v6e/v7x), never exceed N, and keep the per-block VMEM footprint (dominated
    by the (T*Bp, 4*NBLK*H) layer-0 gate-input scratch) bounded."""
    target_k = 128
    try:
        kind = jax.devices()[0].device_kind.lower()
        if "v6" in kind or "v7" in kind:
            target_k = 256
    except Exception:
        pass
    nblk = max(1, min(target_k // max(H, 1), N))
    # TODO(synk): for very long sequences, chunk the gin0 precompute over T
    # inside the kernel instead of shrinking the neuron block.
    while nblk > 1 and T * Bp * 4 * nblk * H * 4 > (8 << 20):
        nblk = max(1, nblk // 2)
    return nblk


# ----------------------------------------------------------------------------
# Host-side packing: lane-packed, gate-major, block-diagonal operands
# ----------------------------------------------------------------------------
def pack_params_and_input(x, p, nblk, Bp):
    w_ih0, w_ihr, w_hh = p["w_ih0"], p["w_ihr"], p["w_hh"]
    bias = p["b_ih"] + p["b_hh"]                       # (N, L, 4H)
    fc_w, fc_b, wf, bf = p["fc_w"], p["fc_b"], p["wf"], p["bf"]

    B, N, T = x.shape
    L, H = w_hh.shape[1], w_hh.shape[-1]
    O = wf.shape[0]
    P = nblk
    Np = -(-N // P) * P                                # pad N to a multiple of P
    nblocks = Np // P
    PH, Gp = P * H, 4 * P * H
    Pk = -(-P // 8) * 8                                # K of the gin0 matmul
    perm = list(PT_OF_SLOT)
    eye = jnp.eye(P, dtype=jnp.float32)

    def pad_n(a):
        return jnp.pad(a, [(0, Np - N)] + [(0, 0)] * (a.ndim - 1))

    # x: (B, N, T) -> (nblocks, T*Bp, Pk); zero rows/cols for padded batch/neurons.
    xp = jnp.pad(x, ((0, Bp - B), (0, Np - N), (0, 0)))
    xp = jnp.transpose(xp, (1, 2, 0)).reshape(nblocks, P, T, Bp)
    x_pack = jnp.transpose(xp, (0, 2, 3, 1)).reshape(nblocks, T * Bp, P)
    x_pack = jnp.pad(x_pack, ((0, 0), (0, 0), (0, Pk - P)))

    # Layer-0 input weights (N, 4H, 1) -> (nblocks, Pk, 4*P*H), gate-major.
    w0 = pad_n(w_ih0[..., 0]).reshape(Np, 4, H)[:, perm].reshape(nblocks, P, 4, H)
    w0_pack = jnp.einsum("bngj,nm->bngmj", w0, eye).reshape(nblocks, P, Gp)
    w0_pack = jnp.pad(w0_pack, ((0, 0), (0, Pk - P), (0, 0)))

    def pack_bias(bl):                                 # (N, 4H) -> (nblocks, 1, Gp)
        bl = pad_n(bl).reshape(Np, 4, H)[:, perm].reshape(nblocks, P, 4, H)
        return jnp.transpose(bl, (0, 2, 1, 3)).reshape(nblocks, 1, Gp)

    def pack_blockdiag(w):                             # (N, 4H, H) -> (nblocks, P*H, Gp)
        w = pad_n(w).reshape(Np, 4, H, H)[:, perm]     # (Np, slot, H_out, H_in)
        w = jnp.transpose(w, (0, 3, 1, 2)).reshape(nblocks, P, H, 4, H)
        w = jnp.einsum("bnkgj,nm->bnkgmj", w, eye)
        return w.reshape(nblocks, PH, Gp)

    packed = dict(
        x=x_pack,
        w0=w0_pack,
        b0=pack_bias(bias[:, 0]),
        whh0=pack_blockdiag(w_hh[:, 0]),
        fc_w=fc_w,
    )
    if L > 1:
        wcat = [jnp.concatenate([pack_blockdiag(w_ihr[:, l]),
                                 pack_blockdiag(w_hh[:, l + 1])], axis=1)
                for l in range(L - 1)]
        packed["wcat"] = jnp.stack(wcat, axis=1)                 # (nb, L-1, 2PH, Gp)
        packed["brest"] = jnp.stack(
            [pack_bias(bias[:, l + 1]) for l in range(L - 1)], axis=1)  # (nb, L-1, 1, Gp)

    # Fused shared-fc column select + final fc: row-sparse (P*H, O) weight with
    # neuron n's final-fc row at row n*H + H - 1 (zero rows for padded neurons).
    wf_rows = pad_n(wf.T)                                        # (Np, O)
    wf_pack = jnp.zeros((Np, H, O), jnp.float32).at[:, H - 1, :].set(wf_rows)
    packed["wf"] = wf_pack.reshape(nblocks, PH, O)
    # Shared-fc bias folds into the output bias: + fc_b * sum_n wf[:, n].
    packed["bf_eff"] = bf + fc_b[0] * jnp.sum(wf, axis=1)[None, :]
    return packed, nblocks


# ----------------------------------------------------------------------------
# Forward wrapper
# ----------------------------------------------------------------------------
def single_sample_nn_forward(x, params):
    """x: (B, num_neurons, seq_len) float32  ->  (B, output_size) float32."""
    B, N, T = x.shape
    L, H = params["w_hh"].shape[1], params["w_hh"].shape[-1]
    O = params["wf"].shape[0]

    Bp = -(-B // 8) * 8                  # pad batch to the 8-row sublane height
    nblk = _pick_nblk(N, H, T, Bp)
    packed, nblocks = pack_params_and_input(x, params, nblk, Bp)
    PH, Gp = nblk * H, 4 * nblk * H
    Pk = packed["x"].shape[-1]

    in_specs = [
        pl.BlockSpec((1, T * Bp, Pk), lambda i: (i, 0, 0)),              # x
        pl.BlockSpec((1, Pk, Gp), lambda i: (i, 0, 0)),                  # w0
        pl.BlockSpec((1, 1, Gp), lambda i: (i, 0, 0)),                   # b0
        pl.BlockSpec((1, PH, Gp), lambda i: (i, 0, 0)),                  # whh0
    ]
    operands = [packed["x"], packed["w0"], packed["b0"], packed["whh0"]]
    if L > 1:
        in_specs += [
            pl.BlockSpec((1, L - 1, 2 * PH, Gp), lambda i: (i, 0, 0, 0)),  # wcat
            pl.BlockSpec((1, L - 1, 1, Gp), lambda i: (i, 0, 0, 0)),       # brest
        ]
        operands += [packed["wcat"], packed["brest"]]
    in_specs += [
        pl.BlockSpec(memory_space=pltpu.MemorySpace.SMEM),               # fc_w
        pl.BlockSpec((1, PH, O), lambda i: (i, 0, 0)),                   # wf (row-sparse)
    ]
    operands += [packed["fc_w"], packed["wf"]]

    partials = pl.pallas_call(
        _make_fused_kernel(L, nblk, H),
        out_shape=jax.ShapeDtypeStruct((nblocks, Bp, O), jnp.float32),
        grid_spec=pltpu.PrefetchScalarGridSpec(
            num_scalar_prefetch=0,
            grid=(nblocks,),
            in_specs=in_specs,
            out_specs=pl.BlockSpec((1, Bp, O), lambda i: (i, 0, 0)),
            scratch_shapes=[pltpu.VMEM((T * Bp, Gp), jnp.float32)],
        ),
        compiler_params=pltpu.CompilerParams(
            # Each neuron block writes its own partial-output block -> the grid
            # axis is truly parallel (v7x spreads blocks over both TensorCores).
            dimension_semantics=("parallel",),
        ),
    )(*operands)

    return jnp.sum(partials, axis=0)[:B] + packed["bf_eff"]


# ----------------------------------------------------------------------------
# Parameter init (deterministic, PyTorch-like uniform ranges), raw layout
# ----------------------------------------------------------------------------
def init_params(key, seq_len, hidden, layers, neurons, out_size):
    H, L, N, T, O = hidden, layers, neurons, seq_len, out_size
    Lr = max(L - 1, 1)
    k = jax.random.split(key, 9)
    kl = 1.0 / math.sqrt(H)
    kf = 1.0 / math.sqrt(T)
    ko = 1.0 / math.sqrt(N)
    return dict(
        w_ih0=jax.random.uniform(k[0], (N, 4 * H, 1), jnp.float32, -kl, kl),
        w_ihr=jax.random.uniform(k[1], (N, Lr, 4 * H, H), jnp.float32, -kl, kl),
        w_hh=jax.random.uniform(k[2], (N, L, 4 * H, H), jnp.float32, -kl, kl),
        b_ih=jax.random.uniform(k[3], (N, L, 4 * H), jnp.float32, -kl, kl),
        b_hh=jax.random.uniform(k[4], (N, L, 4 * H), jnp.float32, -kl, kl),
        fc_w=jax.random.uniform(k[5], (T,), jnp.float32, -kf, kf),
        fc_b=jax.random.uniform(k[6], (1,), jnp.float32, -kf, kf),
        wf=jax.random.uniform(k[7], (O, N), jnp.float32, -ko, ko),
        bf=jax.random.uniform(k[8], (1, O), jnp.float32, -ko, ko),
    )


# ----------------------------------------------------------------------------
# Pure-JAX reference (mirrors the PyTorch forward exactly, raw weights)
# ----------------------------------------------------------------------------
def reference_forward(x, p):
    B, N, T = x.shape
    L, H = p["w_hh"].shape[1], p["w_hh"].shape[-1]
    b = p["b_ih"] + p["b_hh"]

    def cell(gates, c):
        i = jax.nn.sigmoid(gates[:, 0:H])
        f = jax.nn.sigmoid(gates[:, H:2 * H])
        g = jnp.tanh(gates[:, 2 * H:3 * H])
        o = jax.nn.sigmoid(gates[:, 3 * H:4 * H])
        c_new = f * c + i * g
        return o * jnp.tanh(c_new), c_new

    preds = []
    for n in range(N):
        hs = [jnp.zeros((B, H), jnp.float32) for _ in range(L)]
        cs = [jnp.zeros((B, H), jnp.float32) for _ in range(L)]
        lasts = []
        for t in range(T):
            xt = x[:, n, t][:, None]                                    # (B, 1)
            gates = (xt * p["w_ih0"][n, :, 0][None, :]
                     + hs[0] @ p["w_hh"][n, 0].T + b[n, 0][None, :])
            hs[0], cs[0] = cell(gates, cs[0])
            inp = hs[0]
            for l in range(1, L):
                gates = (inp @ p["w_ihr"][n, l - 1].T
                         + hs[l] @ p["w_hh"][n, l].T + b[n, l][None, :])
                hs[l], cs[l] = cell(gates, cs[l])
                inp = hs[l]
            lasts.append(inp[:, H - 1])                 # lstm_out[:, :, -1]
        last = jnp.stack(lasts, axis=1)                 # (B, T)
        preds.append(last @ p["fc_w"] + p["fc_b"][0])   # shared fc(T -> 1)
    preds = jnp.stack(preds, axis=1)                    # (B, N)
    return preds @ p["wf"].T + p["bf"]                  # final fc(N -> O)


if __name__ == "__main__":
    # Small shapes consistent with the module.
    B, N, T = 2, 4, 8                # batch, num_neurons, sequence_length
    H, L, O = 32, 2, 3               # hidden_size, num_layers, output_size

    key = jax.random.PRNGKey(0)
    k_x, k_p = jax.random.split(key)
    x = jax.random.normal(k_x, (B, N, T), jnp.float32)
    params = init_params(k_p, T, H, L, N, O)

    out = jax.block_until_ready(single_sample_nn_forward(x, params))
    ref = reference_forward(x, params)

    assert out.shape == (B, O)
    # In-kernel f32 dots run at the MXU's default (bf16-pass) precision; the
    # 2e-3 tolerance absorbs that vs. the pure-JAX reference.
    assert jnp.allclose(out, ref, atol=2e-3, rtol=2e-3), (
        f"max abs diff {float(jnp.max(jnp.abs(out - ref)))}")

    print("KERNEL_OK")
</pallas_src>

<mosaic_0001>
module attributes {stable_mosaic.version = 11 : i64} {
  func.func @body(%arg0: i32, %arg1: memref<1x64x8xf32, #tpu.memory_space<vmem>>, %arg2: memref<1x8x512xf32, #tpu.memory_space<vmem>>, %arg3: memref<1x1x512xf32, #tpu.memory_space<vmem>>, %arg4: memref<1x128x512xf32, #tpu.memory_space<vmem>>, %arg5: memref<1x1x256x512xf32, #tpu.memory_space<vmem>>, %arg6: memref<1x1x1x512xf32, #tpu.memory_space<vmem>>, %arg7: memref<8xf32, #tpu.memory_space<smem>>, %arg8: memref<1x128x3xf32, #tpu.memory_space<vmem>>, %arg9: memref<1x8x3xf32, #tpu.memory_space<vmem>>, %arg10: memref<64x512xf32, #tpu.memory_space<vmem>>) attributes {dimension_semantics = [#tpu.dimension_semantics<parallel>], iteration_bounds = array<i64: 1>, scalar_prefetch = 0 : i64, scratch_operands = 1 : i64, tpu.core_type = #tpu.core_type<tc>, window_params = [{transform_indices = @transform_0, window_bounds = array<i64: 1, 64, 8>}, {transform_indices = @transform_1, window_bounds = array<i64: 1, 8, 512>}, {transform_indices = @transform_2, window_bounds = array<i64: 1, 1, 512>}, {transform_indices = @transform_3, window_bounds = array<i64: 1, 128, 512>}, {transform_indices = @transform_4, window_bounds = array<i64: 1, 1, 256, 512>}, {transform_indices = @transform_5, window_bounds = array<i64: 1, 1, 1, 512>}, {transform_indices = @transform_6, window_bounds = array<i64: 8>}, {transform_indices = @transform_7, window_bounds = array<i64: 1, 128, 3>}, {transform_indices = @transform_8, window_bounds = array<i64: 1, 8, 3>}]} {
    %c0 = arith.constant 0 : index
    %c0_0 = arith.constant 0 : index
    %c0_1 = arith.constant 0 : index
    %0 = vector.load %arg1[%c0, %c0_0, %c0_1] : memref<1x64x8xf32, #tpu.memory_space<vmem>>, vector<1x64x8xf32>
    %1 = vector.shape_cast %0 : vector<1x64x8xf32> to vector<64x8xf32>
    %c0_2 = arith.constant 0 : index
    %c0_3 = arith.constant 0 : index
    %c0_4 = arith.constant 0 : index
    %2 = vector.load %arg2[%c0_2, %c0_3, %c0_4] : memref<1x8x512xf32, #tpu.memory_space<vmem>>, vector<1x8x512xf32>
    %3 = vector.shape_cast %2 : vector<1x8x512xf32> to vector<8x512xf32>
    %cst = arith.constant dense<0.000000e+00> : vector<64x512xf32>
    %4 = tpu.matmul %1, %3, %cst {dimension_numbers = #tpu.dot_dimension_numbers<[1], [0], [0], [1], [0, 0, 1, 1], [], []>} : vector<64x8xf32>, vector<8x512xf32>, vector<64x512xf32> -> vector<64x512xf32>
    %c0_5 = arith.constant 0 : index
    %c0_6 = arith.constant 0 : index
    %c0_7 = arith.constant 0 : index
    %5 = vector.load %arg3[%c0_5, %c0_6, %c0_7] : memref<1x1x512xf32, #tpu.memory_space<vmem>>, vector<1x1x512xf32>
    %6 = vector.shape_cast %5 : vector<1x1x512xf32> to vector<1x512xf32>
    %7 = vector.broadcast %6 : vector<1x512xf32> to vector<64x512xf32>
    %8 = arith.addf %4, %7 : vector<64x512xf32>
    %c0_8 = arith.constant 0 : index
    %c0_9 = arith.constant 0 : index
    %9 = vector.load %arg10[%c0_8, %c0_9] : memref<64x512xf32, #tpu.memory_space<vmem>>, vector<64x512xf32>
    tpu.vector_store %arg10[%c0_8, %c0_9], %8 {strides = array<i32>} : memref<64x512xf32, #tpu.memory_space<vmem>>, vector<64x512xf32>,
    %cst_10 = arith.constant 0.000000e+00 : f32
    %10 = vector.broadcast %cst_10 : f32 to vector<8x128xf32>
    %c0_i32 = arith.constant 0 : i32
    %11 = arith.index_cast %c0_i32 : i32 to index
    %12 = memref.load %arg7[%11] : memref<8xf32, #tpu.memory_space<smem>>
    %c8_i32 = arith.constant 8 : i32
    %13 = arith.muli %c0_i32, %c8_i32 : i32
    %14 = tpu.assume_multiple %13, 8 : i32
    %15 = arith.index_cast %14 : i32 to index
    %c0_11 = arith.constant 0 : index
    %16 = vector.load %arg10[%15, %c0_11] : memref<64x512xf32, #tpu.memory_space<vmem>>, vector<8x512xf32>
    %c0_12 = arith.constant 0 : index
    %c0_13 = arith.constant 0 : index
    %c0_14 = arith.constant 0 : index
    %17 = vector.load %arg4[%c0_12, %c0_13, %c0_14] : memref<1x128x512xf32, #tpu.memory_space<vmem>>, vector<1x128x512xf32>
    %18 = vector.shape_cast %17 : vector<1x128x512xf32> to vector<128x512xf32>
    %cst_15 = arith.constant dense<0.000000e+00> : vector<8x512xf32>
    %19 = tpu.matmul %10, %18, %cst_15 {dimension_numbers = #tpu.dot_dimension_numbers<[1], [0], [0], [1], [0, 0, 1, 1], [], []>} : vector<8x128xf32>, vector<128x512xf32>, vector<8x512xf32> -> vector<8x512xf32>
    %20 = arith.addf %16, %19 : vector<8x512xf32>
    %21 = vector.extract_strided_slice %20 {offsets = [0, 0], sizes = [8, 384], strides = [1, 1]} : vector<8x512xf32> to vector<8x384xf32>
    %22 = arith.negf %21 : vector<8x384xf32>
    %23 = math.exp %22 : vector<8x384xf32>
    %cst_16 = arith.constant 1.000000e+00 : f32
    %24 = vector.broadcast %cst_16 : f32 to vector<8x384xf32>
    %25 = arith.addf %24, %23 : vector<8x384xf32>
    %26 = arith.divf %24, %25 : vector<8x384xf32>
    %27 = vector.extract_strided_slice %26 {offsets = [0, 0], sizes = [8, 128], strides = [1, 1]} : vector<8x384xf32> to vector<8x128xf32>
    %28 = vector.extract_strided_slice %26 {offsets = [0, 128], sizes = [8, 128], strides = [1, 1]} : vector<8x384xf32> to vector<8x128xf32>
    %29 = vector.extract_strided_slice %26 {offsets = [0, 256], sizes = [8, 128], strides = [1, 1]} : vector<8x384xf32> to vector<8x128xf32>
    %30 = vector.extract_strided_slice %20 {offsets = [0, 384], sizes = [8, 128], strides = [1, 1]} : vector<8x512xf32> to vector<8x128xf32>
    %31 = math.tanh %30 : vector<8x128xf32>
    %32 = arith.mulf %28, %10 : vector<8x128xf32>
    %33 = arith.mulf %27, %31 : vector<8x128xf32>
    %34 = arith.addf %32, %33 : vector<8x128xf32>
    %35 = math.tanh %34 : vector<8x128xf32>
    %36 = arith.mulf %29, %35 : vector<8x128xf32>
    %37 = tpu.concatenate %36, %10 in 1 : vector<8x128xf32>, vector<8x128xf32> -> vector<8x256xf32>
    %c0_17 = arith.constant 0 : index
    %c0_18 = arith.constant 0 : index
    %c0_19 = arith.constant 0 : index
    %c0_20 = arith.constant 0 : index
    %38 = vector.load %arg5[%c0_17, %c0_18, %c0_19, %c0_20] : memref<1x1x256x512xf32, #tpu.memory_space<vmem>>, vector<1x1x256x512xf32>
    %39 = vector.shape_cast %38 : vector<1x1x256x512xf32> to vector<256x512xf32>
    %cst_21 = arith.constant dense<0.000000e+00> : vector<8x512xf32>
    %40 = tpu.matmul %37, %39, %cst_21 {dimension_numbers = #tpu.dot_dimension_numbers<[1], [0], [0], [1], [0, 0, 1, 1], [], []>} : vector<8x256xf32>, vector<256x512xf32>, vector<8x512xf32> -> vector<8x512xf32>
    %c0_22 = arith.constant 0 : index
    %c0_23 = arith.constant 0 : index
    %c0_24 = arith.constant 0 : index
    %c0_25 = arith.constant 0 : index
    %41 = vector.load %arg6[%c0_22, %c0_23, %c0_24, %c0_25] : memref<1x1x1x512xf32, #tpu.memory_space<vmem>>, vector<1x1x1x512xf32>
    %42 = vector.shape_cast %41 : vector<1x1x1x512xf32> to vector<1x512xf32>
    %43 = vector.broadcast %42 : vector<1x512xf32> to vector<8x512xf32>
    %44 = arith.addf %40, %43 : vector<8x512xf32>
    %45 = vector.extract_strided_slice %44 {offsets = [0, 0], sizes = [8, 384], strides = [1, 1]} : vector<8x512xf32> to vector<8x384xf32>
    %46 = arith.negf %45 : vector<8x384xf32>
    %47 = math.exp %46 : vector<8x384xf32>
    %cst_26 = arith.constant 1.000000e+00 : f32
    %48 = vector.broadcast %cst_26 : f32 to vector<8x384xf32>
    %49 = arith.addf %48, %47 : vector<8x384xf32>
    %50 = arith.divf %48, %49 : vector<8x384xf32>
    %51 = vector.extract_strided_slice %50 {offsets = [0, 0], sizes = [8, 128], strides = [1, 1]} : vector<8x384xf32> to vector<8x128xf32>
    %52 = vector.extract_strided_slice %50 {offsets = [0, 128], sizes = [8, 128], strides = [1, 1]} : vector<8x384xf32> to vector<8x128xf32>
    %53 = vector.extract_strided_slice %50 {offsets = [0, 256], sizes = [8, 128], strides = [1, 1]} : vector<8x384xf32> to vector<8x128xf32>
    %54 = vector.extract_strided_slice %44 {offsets = [0, 384], sizes = [8, 128], strides = [1, 1]} : vector<8x512xf32> to vector<8x128xf32>
    %55 = math.tanh %54 : vector<8x128xf32>
    %56 = arith.mulf %52, %10 : vector<8x128xf32>
    %57 = arith.mulf %51, %55 : vector<8x128xf32>
    %58 = arith.addf %56, %57 : vector<8x128xf32>
    %59 = math.tanh %58 : vector<8x128xf32>
    %60 = arith.mulf %53, %59 : vector<8x128xf32>
    %61 = vector.broadcast %12 : f32 to vector<8x128xf32>
    %62 = arith.mulf %61, %60 : vector<8x128xf32>
    %63 = arith.addf %10, %62 : vector<8x128xf32>
    %c1_i32 = arith.constant 1 : i32
    %64 = arith.index_cast %c1_i32 : i32 to index
    %65 = memref.load %arg7[%64] : memref<8xf32, #tpu.memory_space<smem>>
    %c8_i32_27 = arith.constant 8 : i32
    %66 = arith.muli %c1_i32, %c8_i32_27 : i32
    %67 = tpu.assume_multiple %66, 8 : i32
    %68 = arith.index_cast %67 : i32 to index
    %c0_28 = arith.constant 0 : index
    %69 = vector.load %arg10[%68, %c0_28] : memref<64x512xf32, #tpu.memory_space<vmem>>, vector<8x512xf32>
    %c0_29 = arith.constant 0 : index
    %c0_30 = arith.constant 0 : index
    %c0_31 = arith.constant 0 : index
    %70 = vector.load %arg4[%c0_29, %c0_30, %c0_31] : memref<1x128x512xf32, #tpu.memory_space<vmem>>, vector<1x128x512xf32>
    %71 = vector.shape_cast %70 : vector<1x128x512xf32> to vector<128x512xf32>
    %cst_32 = arith.constant dense<0.000000e+00> : vector<8x512xf32>
    %72 = tpu.matmul %36, %71, %cst_32 {dimension_numbers = #tpu.dot_dimension_numbers<[1], [0], [0], [1], [0, 0, 1, 1], [], []>} : vector<8x128xf32>, vector<128x512xf32>, vector<8x512xf32> -> vector<8x512xf32>
    %73 = arith.addf %69, %72 : vector<8x512xf32>
    %74 = vector.extract_strided_slice %73 {offsets = [0, 0], sizes = [8, 384], strides = [1, 1]} : vector<8x512xf32> to vector<8x384xf32>
    %75 = arith.negf %74 : vector<8x384xf32>
    %76 = math.exp %75 : vector<8x384xf32>
    %cst_33 = arith.constant 1.000000e+00 : f32
    %77 = vector.broadcast %cst_33 : f32 to vector<8x384xf32>
    %78 = arith.addf %77, %76 : vector<8x384xf32>
    %79 = arith.divf %77, %78 : vector<8x384xf32>
    %80 = vector.extract_strided_slice %79 {offsets = [0, 0], sizes = [8, 128], strides = [1, 1]} : vector<8x384xf32> to vector<8x128xf32>
    %81 = vector.extract_strided_slice %79 {offsets = [0, 128], sizes = [8, 128], strides = [1, 1]} : vector<8x384xf32> to vector<8x128xf32>
    %82 = vector.extract_strided_slice %79 {offsets = [0, 256], sizes = [8, 128], strides = [1, 1]} : vector<8x384xf32> to vector<8x128xf32>
    %83 = vector.extract_strided_slice %73 {offsets = [0, 384], sizes = [8, 128], strides = [1, 1]} : vector<8x512xf32> to vector<8x128xf32>
    %84 = math.tanh %83 : vector<8x128xf32>
    %85 = arith.mulf %81, %34 : vector<8x128xf32>
    %86 = arith.mulf %80, %84 : vector<8x128xf32>
    %87 = arith.addf %85, %86 : vector<8x128xf32>
    %88 = math.tanh %87 : vector<8x128xf32>
    %89 = arith.mulf %82, %88 : vector<8x128xf32>
    %90 = tpu.concatenate %89, %60 in 1 : vector<8x128xf32>, vector<8x128xf32> -> vector<8x256xf32>
    %c0_34 = arith.constant 0 : index
    %c0_35 = arith.constant 0 : index
    %c0_36 = arith.constant 0 : index
    %c0_37 = arith.constant 0 : index
    %91 = vector.load %arg5[%c0_34, %c0_35, %c0_36, %c0_37] : memref<1x1x256x512xf32, #tpu.memory_space<vmem>>, vector<1x1x256x512xf32>
    %92 = vector.shape_cast %91 : vector<1x1x256x512xf32> to vector<256x512xf32>
    %cst_38 = arith.constant dense<0.000000e+00> : vector<8x512xf32>
    %93 = tpu.matmul %90, %92, %cst_38 {dimension_numbers = #tpu.dot_dimension_numbers<[1], [0], [0], [1], [0, 0, 1, 1], [], []>} : vector<8x256xf32>, vector<256x512xf32>, vector<8x512xf32> -> vector<8x512xf32>
    %c0_39 = arith.constant 0 : index
    %c0_40 = arith.constant 0 : index
    %c0_41 = arith.constant 0 : index
    %c0_42 = arith.constant 0 : index
    %94 = vector.load %arg6[%c0_39, %c0_40, %c0_41, %c0_42] : memref<1x1x1x512xf32, #tpu.memory_space<vmem>>, vector<1x1x1x512xf32>
    %95 = vector.shape_cast %94 : vector<1x1x1x512xf32> to vector<1x512xf32>
    %96 = vector.broadcast %95 : vector<1x512xf32> to vector<8x512xf32>
    %97 = arith.addf %93, %96 : vector<8x512xf32>
    %98 = vector.extract_strided_slice %97 {offsets = [0, 0], sizes = [8, 384], strides = [1, 1]} : vector<8x512xf32> to vector<8x384xf32>
    %99 = arith.negf %98 : vector<8x384xf32>
    %100 = math.exp %99 : vector<8x384xf32>
    %cst_43 = arith.constant 1.000000e+00 : f32
    %101 = vector.broadcast %cst_43 : f32 to vector<8x384xf32>
    %102 = arith.addf %101, %100 : vector<8x384xf32>
    %103 = arith.divf %101, %102 : vector<8x384xf32>
    %104 = vector.extract_strided_slice %103 {offsets = [0, 0], sizes = [8, 128], strides = [1, 1]} : vector<8x384xf32> to vector<8x128xf32>
    %105 = vector.extract_strided_slice %103 {offsets = [0, 128], sizes = [8, 128], strides = [1, 1]} : vector<8x384xf32> to vector<8x128xf32>
    %106 = vector.extract_strided_slice %103 {offsets = [0, 256], sizes = [8, 128], strides = [1, 1]} : vector<8x384xf32> to vector<8x128xf32>
    %107 = vector.extract_strided_slice %97 {offsets = [0, 384], sizes = [8, 128], strides = [1, 1]} : vector<8x512xf32> to vector<8x128xf32>
    %108 = math.tanh %107 : vector<8x128xf32>
    %109 = arith.mulf %105, %58 : vector<8x128xf32>
    %110 = arith.mulf %104, %108 : vector<8x128xf32>
    %111 = arith.addf %109, %110 : vector<8x128xf32>
    %112 = math.tanh %111 : vector<8x128xf32>
    %113 = arith.mulf %106, %112 : vector<8x128xf32>
    %114 = vector.broadcast %65 : f32 to vector<8x128xf32>
    %115 = arith.mulf %114, %113 : vector<8x128xf32>
    %116 = arith.addf %63, %115 : vector<8x128xf32>
    %c2_i32 = arith.constant 2 : i32
    %117 = arith.index_cast %c2_i32 : i32 to index
    %118 = memref.load %arg7[%117] : memref<8xf32, #tpu.memory_space<smem>>
    %c8_i32_44 = arith.constant 8 : i32
    %119 = arith.muli %c2_i32, %c8_i32_44 : i32
    %120 = tpu.assume_multiple %119, 8 : i32
    %121 = arith.index_cast %120 : i32 to index
    %c0_45 = arith.constant 0 : index
    %122 = vector.load %arg10[%121, %c0_45] : memref<64x512xf32, #tpu.memory_space<vmem>>, vector<8x512xf32>
    %c0_46 = arith.constant 0 : index
    %c0_47 = arith.constant 0 : index
    %c0_48 = arith.constant 0 : index
    %123 = vector.load %arg4[%c0_46, %c0_47, %c0_48] : memref<1x128x512xf32, #tpu.memory_space<vmem>>, vector<1x128x512xf32>
    %124 = vector.shape_cast %123 : vector<1x128x512xf32> to vector<128x512xf32>
    %cst_49 = arith.constant dense<0.000000e+00> : vector<8x512xf32>
    %125 = tpu.matmul %89, %124, %cst_49 {dimension_numbers = #tpu.dot_dimension_numbers<[1], [0], [0], [1], [0, 0, 1, 1], [], []>} : vector<8x128xf32>, vector<128x512xf32>, vector<8x512xf32> -> vector<8x512xf32>
    %126 = arith.addf %122, %125 : vector<8x512xf32>
    %127 = vector.extract_strided_slice %126 {offsets = [0, 0], sizes = [8, 384], strides = [1, 1]} : vector<8x512xf32> to vector<8x384xf32>
    %128 = arith.negf %127 : vector<8x384xf32>
    %129 = math.exp %128 : vector<8x384xf32>
    %cst_50 = arith.constant 1.000000e+00 : f32
    %130 = vector.broadcast %cst_50 : f32 to vector<8x384xf32>
    %131 = arith.addf %130, %129 : vector<8x384xf32>
    %132 = arith.divf %130, %131 : vector<8x384xf32>
    %133 = vector.extract_strided_slice %132 {offsets = [0, 0], sizes = [8, 128], strides = [1, 1]} : vector<8x384xf32> to vector<8x128xf32>
    %134 = vector.extract_strided_slice %132 {offsets = [0, 128], sizes = [8, 128], strides = [1, 1]} : vector<8x384xf32> to vector<8x128xf32>
    %135 = vector.extract_strided_slice %132 {offsets = [0, 256], sizes = [8, 128], strides = [1, 1]} : vector<8x384xf32> to vector<8x128xf32>
    %136 = vector.extract_strided_slice %126 {offsets = [0, 384], sizes = [8, 128], strides = [1, 1]} : vector<8x512xf32> to vector<8x128xf32>
    %137 = math.tanh %136 : vector<8x128xf32>
    %138 = arith.mulf %134, %87 : vector<8x128xf32>
    %139 = arith.mulf %133, %137 : vector<8x128xf32>
    %140 = arith.addf %138, %139 : vector<8x128xf32>
    %141 = math.tanh %140 : vector<8x128xf32>
    %142 = arith.mulf %135, %141 : vector<8x128xf32>
    %143 = tpu.concatenate %142, %113 in 1 : vector<8x128xf32>, vector<8x128xf32> -> vector<8x256xf32>
    %c0_51 = arith.constant 0 : index
    %c0_52 = arith.constant 0 : index
    %c0_53 = arith.constant 0 : index
    %c0_54 = arith.constant 0 : index
    %144 = vector.load %arg5[%c0_51, %c0_52, %c0_53, %c0_54] : memref<1x1x256x512xf32, #tpu.memory_space<vmem>>, vector<1x1x256x512xf32>
    %145 = vector.shape_cast %144 : vector<1x1x256x512xf32> to vector<256x512xf32>
    %cst_55 = arith.constant dense<0.000000e+00> : vector<8x512xf32>
    %146 = tpu.matmul %143, %145, %cst_55 {dimension_numbers = #tpu.dot_dimension_numbers<[1], [0], [0], [1], [0, 0, 1, 1], [], []>} : vector<8x256xf32>, vector<256x512xf32>, vector<8x512xf32> -> vector<8x512xf32>
    %c0_56 = arith.constant 0 : index
    %c0_57 = arith.constant 0 : index
    %c0_58 = arith.constant 0 : index
    %c0_59 = arith.constant 0 : index
    %147 = vector.load %arg6[%c0_56, %c0_57, %c0_58, %c0_59] : memref<1x1x1x512xf32, #tpu.memory_space<vmem>>, vector<1x1x1x512xf32>
    %148 = vector.shape_cast %147 : vector<1x1x1x512xf32> to vector<1x512xf32>
    %149 = vector.broadcast %148 : vector<1x512xf32> to vector<8x512xf32>
    %150 = arith.addf %146, %149 : vector<8x512xf32>
    %151 = vector.extract_strided_slice %150 {offsets = [0, 0], sizes = [8, 384], strides = [1, 1]} : vector<8x512xf32> to vector<8x384xf32>
    %152 = arith.negf %151 : vector<8x384xf32>
    %153 = math.exp %152 : vector<8x384xf32>
    %cst_60 = arith.constant 1.000000e+00 : f32
    %154 = vector.broadcast %cst_60 : f32 to vector<8x384xf32>
    %155 = arith.addf %154, %153 : vector<8x384xf32>
    %156 = arith.divf %154, %155 : vector<8x384xf32>
    %157 = vector.extract_strided_slice %156 {offsets = [0, 0], sizes = [8, 128], strides = [1, 1]} : vector<8x384xf32> to vector<8x128xf32>
    %158 = vector.extract_strided_slice %156 {offsets = [0, 128], sizes = [8, 128], strides = [1, 1]} : vector<8x384xf32> to vector<8x128xf32>
    %159 = vector.extract_strided_slice %156 {offsets = [0, 256], sizes = [8, 128], strides = [1, 1]} : vector<8x384xf32> to vector<8x128xf32>
    %160 = vector.extract_strided_slice %150 {offsets = [0, 384], sizes = [8, 128], strides = [1, 1]} : vector<8x512xf32> to vector<8x128xf32>
    %161 = math.tanh %160 : vector<8x128xf32>
    %162 = arith.mulf %158, %111 : vector<8x128xf32>
    %163 = arith.mulf %157, %161 : vector<8x128xf32>
    %164 = arith.addf %162, %163 : vector<8x128xf32>
    %165 = math.tanh %164 : vector<8x128xf32>
    %166 = arith.mulf %159, %165 : vector<8x128xf32>
    %167 = vector.broadcast %118 : f32 to vector<8x128xf32>
    %168 = arith.mulf %167, %166 : vector<8x128xf32>
    %169 = arith.addf %116, %168 : vector<8x128xf32>
    %c3_i32 = arith.constant 3 : i32
    %170 = arith.index_cast %c3_i32 : i32 to index
    %171 = memref.load %arg7[%170] : memref<8xf32, #tpu.memory_space<smem>>
    %c8_i32_61 = arith.constant 8 : i32
    %172 = arith.muli %c3_i32, %c8_i32_61 : i32
    %173 = tpu.assume_multiple %172, 8 : i32
    %174 = arith.index_cast %173 : i32 to index
    %c0_62 = arith.constant 0 : index
    %175 = vector.load %arg10[%174, %c0_62] : memref<64x512xf32, #tpu.memory_space<vmem>>, vector<8x512xf32>
    %c0_63 = arith.constant 0 : index
    %c0_64 = arith.constant 0 : index
    %c0_65 = arith.constant 0 : index
    %176 = vector.load %arg4[%c0_63, %c0_64, %c0_65] : memref<1x128x512xf32, #tpu.memory_space<vmem>>, vector<1x128x512xf32>
    %177 = vector.shape_cast %176 : vector<1x128x512xf32> to vector<128x512xf32>
    %cst_66 = arith.constant dense<0.000000e+00> : vector<8x512xf32>
    %178 = tpu.matmul %142, %177, %cst_66 {dimension_numbers = #tpu.dot_dimension_numbers<[1], [0], [0], [1], [0, 0, 1, 1], [], []>} : vector<8x128xf32>, vector<128x512xf32>, vector<8x512xf32> -> vector<8x512xf32>
    %179 = arith.addf %175, %178 : vector<8x512xf32>
    %180 = vector.extract_strided_slice %179 {offsets = [0, 0], sizes = [8, 384], strides = [1, 1]} : vector<8x512xf32> to vector<8x384xf32>
    %181 = arith.negf %180 : vector<8x384xf32>
    %182 = math.exp %181 : vector<8x384xf32>
    %cst_67 = arith.constant 1.000000e+00 : f32
    %183 = vector.broadcast %cst_67 : f32 to vector<8x384xf32>
    %184 = arith.addf %183, %182 : vector<8x384xf32>
    %185 = arith.divf %183, %184 : vector<8x384xf32>
    %186 = vector.extract_strided_slice %185 {offsets = [0, 0], sizes = [8, 128], strides = [1, 1]} : vector<8x384xf32> to vector<8x128xf32>
    %187 = vector.extract_strided_slice %185 {offsets = [0, 128], sizes = [8, 128], strides = [1, 1]} : vector<8x384xf32> to vector<8x128xf32>
    %188 = vector.extract_strided_slice %185 {offsets = [0, 256], sizes = [8, 128], strides = [1, 1]} : vector<8x384xf32> to vector<8x128xf32>
    %189 = vector.extract_strided_slice %179 {offsets = [0, 384], sizes = [8, 128], strides = [1, 1]} : vector<8x512xf32> to vector<8x128xf32>
    %190 = math.tanh %189 : vector<8x128xf32>
    %191 = arith.mulf %187, %140 : vector<8x128xf32>
    %192 = arith.mulf %186, %190 : vector<8x128xf32>
    %193 = arith.addf %191, %192 : vector<8x128xf32>
    %194 = math.tanh %193 : vector<8x128xf32>
    %195 = arith.mulf %188, %194 : vector<8x128xf32>
    %196 = tpu.concatenate %195, %166 in 1 : vector<8x128xf32>, vector<8x128xf32> -> vector<8x256xf32>
    %c0_68 = arith.constant 0 : index
    %c0_69 = arith.constant 0 : index
    %c0_70 = arith.constant 0 : index
    %c0_71 = arith.constant 0 : index
    %197 = vector.load %arg5[%c0_68, %c0_69, %c0_70, %c0_71] : memref<1x1x256x512xf32, #tpu.memory_space<vmem>>, vector<1x1x256x512xf32>
    %198 = vector.shape_cast %197 : vector<1x1x256x512xf32> to vector<256x512xf32>
    %cst_72 = arith.constant dense<0.000000e+00> : vector<8x512xf32>
    %199 = tpu.matmul %196, %198, %cst_72 {dimension_numbers = #tpu.dot_dimension_numbers<[1], [0], [0], [1], [0, 0, 1, 1], [], []>} : vector<8x256xf32>, vector<256x512xf32>, vector<8x512xf32> -> vector<8x512xf32>
    %c0_73 = arith.constant 0 : index
    %c0_74 = arith.constant 0 : index
    %c0_75 = arith.constant 0 : index
    %c0_76 = arith.constant 0 : index
    %200 = vector.load %arg6[%c0_73, %c0_74, %c0_75, %c0_76] : memref<1x1x1x512xf32, #tpu.memory_space<vmem>>, vector<1x1x1x512xf32>
    %201 = vector.shape_cast %200 : vector<1x1x1x512xf32> to vector<1x512xf32>
    %202 = vector.broadcast %201 : vector<1x512xf32> to vector<8x512xf32>
    %203 = arith.addf %199, %202 : vector<8x512xf32>
    %204 = vector.extract_strided_slice %203 {offsets = [0, 0], sizes = [8, 384], strides = [1, 1]} : vector<8x512xf32> to vector<8x384xf32>
    %205 = arith.negf %204 : vector<8x384xf32>
    %206 = math.exp %205 : vector<8x384xf32>
    %cst_77 = arith.constant 1.000000e+00 : f32
    %207 = vector.broadcast %cst_77 : f32 to vector<8x384xf32>
    %208 = arith.addf %207, %206 : vector<8x384xf32>
    %209 = arith.divf %207, %208 : vector<8x384xf32>
    %210 = vector.extract_strided_slice %209 {offsets = [0, 0], sizes = [8, 128], strides = [1, 1]} : vector<8x384xf32> to vector<8x128xf32>
    %211 = vector.extract_strided_slice %209 {offsets = [0, 128], sizes = [8, 128], strides = [1, 1]} : vector<8x384xf32> to vector<8x128xf32>
    %212 = vector.extract_strided_slice %209 {offsets = [0, 256], sizes = [8, 128], strides = [1, 1]} : vector<8x384xf32> to vector<8x128xf32>
    %213 = vector.extract_strided_slice %203 {offsets = [0, 384], sizes = [8, 128], strides = [1, 1]} : vector<8x512xf32> to vector<8x128xf32>
    %214 = math.tanh %213 : vector<8x128xf32>
    %215 = arith.mulf %211, %164 : vector<8x128xf32>
    %216 = arith.mulf %210, %214 : vector<8x128xf32>
    %217 = arith.addf %215, %216 : vector<8x128xf32>
    %218 = math.tanh %217 : vector<8x128xf32>
    %219 = arith.mulf %212, %218 : vector<8x128xf32>
    %220 = vector.broadcast %171 : f32 to vector<8x128xf32>
    %221 = arith.mulf %220, %219 : vector<8x128xf32>
    %222 = arith.addf %169, %221 : vector<8x128xf32>
    %c4_i32 = arith.constant 4 : i32
    %223 = arith.index_cast %c4_i32 : i32 to index
    %224 = memref.load %arg7[%223] : memref<8xf32, #tpu.memory_space<smem>>
    %c8_i32_78 = arith.constant 8 : i32
    %225 = arith.muli %c4_i32, %c8_i32_78 : i32
    %226 = tpu.assume_multiple %225, 8 : i32
    %227 = arith.index_cast %226 : i32 to index
    %c0_79 = arith.constant 0 : index
    %228 = vector.load %arg10[%227, %c0_79] : memref<64x512xf32, #tpu.memory_space<vmem>>, vector<8x512xf32>
    %c0_80 = arith.constant 0 : index
    %c0_81 = arith.constant 0 : index
    %c0_82 = arith.constant 0 : index
    %229 = vector.load %arg4[%c0_80, %c0_81, %c0_82] : memref<1x128x512xf32, #tpu.memory_space<vmem>>, vector<1x128x512xf32>
    %230 = vector.shape_cast %229 : vector<1x128x512xf32> to vector<128x512xf32>
    %cst_83 = arith.constant dense<0.000000e+00> : vector<8x512xf32>
    %231 = tpu.matmul %195, %230, %cst_83 {dimension_numbers = #tpu.dot_dimension_numbers<[1], [0], [0], [1], [0, 0, 1, 1], [], []>} : vector<8x128xf32>, vector<128x512xf32>, vector<8x512xf32> -> vector<8x512xf32>
    %232 = arith.addf %228, %231 : vector<8x512xf32>
    %233 = vector.extract_strided_slice %232 {offsets = [0, 0], sizes = [8, 384], strides = [1, 1]} : vector<8x512xf32> to vector<8x384xf32>
    %234 = arith.negf %233 : vector<8x384xf32>
    %235 = math.exp %234 : vector<8x384xf32>
    %cst_84 = arith.constant 1.000000e+00 : f32
    %236 = vector.broadcast %cst_84 : f32 to vector<8x384xf32>
    %237 = arith.addf %236, %235 : vector<8x384xf32>
    %238 = arith.divf %236, %237 : vector<8x384xf32>
    %239 = vector.extract_strided_slice %238 {offsets = [0, 0], sizes = [8, 128], strides = [1, 1]} : vector<8x384xf32> to vector<8x128xf32>
    %240 = vector.extract_strided_slice %238 {offsets = [0, 128], sizes = [8, 128], strides = [1, 1]} : vector<8x384xf32> to vector<8x128xf32>
    %241 = vector.extract_strided_slice %238 {offsets = [0, 256], sizes = [8, 128], strides = [1, 1]} : vector<8x384xf32> to vector<8x128xf32>
    %242 = vector.extract_strided_slice %232 {offsets = [0, 384], sizes = [8, 128], strides = [1, 1]} : vector<8x512xf32> to vector<8x128xf32>
    %243 = math.tanh %242 : vector<8x128xf32>
    %244 = arith.mulf %240, %193 : vector<8x128xf32>
    %245 = arith.mulf %239, %243 : vector<8x128xf32>
    %246 = arith.addf %244, %245 : vector<8x128xf32>
    %247 = math.tanh %246 : vector<8x128xf32>
    %248 = arith.mulf %241, %247 : vector<8x128xf32>
    %249 = tpu.concatenate %248, %219 in 1 : vector<8x128xf32>, vector<8x128xf32> -> vector<8x256xf32>
    %c0_85 = arith.constant 0 : index
    %c0_86 = arith.constant 0 : index
    %c0_87 = arith.constant 0 : index
    %c0_88 = arith.constant 0 : index
    %250 = vector.load %arg5[%c0_85, %c0_86, %c0_87, %c0_88] : memref<1x1x256x512xf32, #tpu.memory_space<vmem>>, vector<1x1x256x512xf32>
    %251 = vector.shape_cast %250 : vector<1x1x256x512xf32> to vector<256x512xf32>
    %cst_89 = arith.constant dense<0.000000e+00> : vector<8x512xf32>
    %252 = tpu.matmul %249, %251, %cst_89 {dimension_numbers = #tpu.dot_dimension_numbers<[1], [0], [0], [1], [0, 0, 1, 1], [], []>} : vector<8x256xf32>, vector<256x512xf32>, vector<8x512xf32> -> vector<8x512xf32>
    %c0_90 = arith.constant 0 : index
    %c0_91 = arith.constant 0 : index
    %c0_92 = arith.constant 0 : index
    %c0_93 = arith.constant 0 : index
    %253 = vector.load %arg6[%c0_90, %c0_91, %c0_92, %c0_93] : memref<1x1x1x512xf32, #tpu.memory_space<vmem>>, vector<1x1x1x512xf32>
    %254 = vector.shape_cast %253 : vector<1x1x1x512xf32> to vector<1x512xf32>
    %255 = vector.broadcast %254 : vector<1x512xf32> to vector<8x512xf32>
    %256 = arith.addf %252, %255 : vector<8x512xf32>
    %257 = vector.extract_strided_slice %256 {offsets = [0, 0], sizes = [8, 384], strides = [1, 1]} : vector<8x512xf32> to vector<8x384xf32>
    %258 = arith.negf %257 : vector<8x384xf32>
    %259 = math.exp %258 : vector<8x384xf32>
    %cst_94 = arith.constant 1.000000e+00 : f32
    %260 = vector.broadcast %cst_94 : f32 to vector<8x384xf32>
    %261 = arith.addf %260, %259 : vector<8x384xf32>
    %262 = arith.divf %260, %261 : vector<8x384xf32>
    %263 = vector.extract_strided_slice %262 {offsets = [0, 0], sizes = [8, 128], strides = [1, 1]} : vector<8x384xf32> to vector<8x128xf32>
    %264 = vector.extract_strided_slice %262 {offsets = [0, 128], sizes = [8, 128], strides = [1, 1]} : vector<8x384xf32> to vector<8x128xf32>
    %265 = vector.extract_strided_slice %262 {offsets = [0, 256], sizes = [8, 128], strides = [1, 1]} : vector<8x384xf32> to vector<8x128xf32>
    %266 = vector.extract_strided_slice %256 {offsets = [0, 384], sizes = [8, 128], strides = [1, 1]} : vector<8x512xf32> to vector<8x128xf32>
    %267 = math.tanh %266 : vector<8x128xf32>
    %268 = arith.mulf %264, %217 : vector<8x128xf32>
    %269 = arith.mulf %263, %267 : vector<8x128xf32>
    %270 = arith.addf %268, %269 : vector<8x128xf32>
    %271 = math.tanh %270 : vector<8x128xf32>
    %272 = arith.mulf %265, %271 : vector<8x128xf32>
    %273 = vector.broadcast %224 : f32 to vector<8x128xf32>
    %274 = arith.mulf %273, %272 : vector<8x128xf32>
    %275 = arith.addf %222, %274 : vector<8x128xf32>
    %c5_i32 = arith.constant 5 : i32
    %276 = arith.index_cast %c5_i32 : i32 to index
    %277 = memref.load %arg7[%276] : memref<8xf32, #tpu.memory_space<smem>>
    %c8_i32_95 = arith.constant 8 : i32
    %278 = arith.muli %c5_i32, %c8_i32_95 : i32
    %279 = tpu.assume_multiple %278, 8 : i32
    %280 = arith.index_cast %279 : i32 to index
    %c0_96 = arith.constant 0 : index
    %281 = vector.load %arg10[%280, %c0_96] : memref<64x512xf32, #tpu.memory_space<vmem>>, vector<8x512xf32>
    %c0_97 = arith.constant 0 : index
    %c0_98 = arith.constant 0 : index
    %c0_99 = arith.constant 0 : index
    %282 = vector.load %arg4[%c0_97, %c0_98, %c0_99] : memref<1x128x512xf32, #tpu.memory_space<vmem>>, vector<1x128x512xf32>
    %283 = vector.shape_cast %282 : vector<1x128x512xf32> to vector<128x512xf32>
    %cst_100 = arith.constant dense<0.000000e+00> : vector<8x512xf32>
    %284 = tpu.matmul %248, %283, %cst_100 {dimension_numbers = #tpu.dot_dimension_numbers<[1], [0], [0], [1], [0, 0, 1, 1], [], []>} : vector<8x128xf32>, vector<128x512xf32>, vector<8x512xf32> -> vector<8x512xf32>
    %285 = arith.addf %281, %284 : vector<8x512xf32>
    %286 = vector.extract_strided_slice %285 {offsets = [0, 0], sizes = [8, 384], strides = [1, 1]} : vector<8x512xf32> to vector<8x384xf32>
    %287 = arith.negf %286 : vector<8x384xf32>
    %288 = math.exp %287 : vector<8x384xf32>
    %cst_101 = arith.constant 1.000000e+00 : f32
    %289 = vector.broadcast %cst_101 : f32 to vector<8x384xf32>
    %290 = arith.addf %289, %288 : vector<8x384xf32>
    %291 = arith.divf %289, %290 : vector<8x384xf32>
    %292 = vector.extract_strided_slice %291 {offsets = [0, 0], sizes = [8, 128], strides = [1, 1]} : vector<8x384xf32> to vector<8x128xf32>
    %293 = vector.extract_strided_slice %291 {offsets = [0, 128], sizes = [8, 128], strides = [1, 1]} : vector<8x384xf32> to vector<8x128xf32>
    %294 = vector.extract_strided_slice %291 {offsets = [0, 256], sizes = [8, 128], strides = [1, 1]} : vector<8x384xf32> to vector<8x128xf32>
    %295 = vector.extract_strided_slice %285 {offsets = [0, 384], sizes = [8, 128], strides = [1, 1]} : vector<8x512xf32> to vector<8x128xf32>
    %296 = math.tanh %295 : vector<8x128xf32>
    %297 = arith.mulf %293, %246 : vector<8x128xf32>
    %298 = arith.mulf %292, %296 : vector<8x128xf32>
    %299 = arith.addf %297, %298 : vector<8x128xf32>
    %300 = math.tanh %299 : vector<8x128xf32>
    %301 = arith.mulf %294, %300 : vector<8x128xf32>
    %302 = tpu.concatenate %301, %272 in 1 : vector<8x128xf32>, vector<8x128xf32> -> vector<8x256xf32>
    %c0_102 = arith.constant 0 : index
    %c0_103 = arith.constant 0 : index
    %c0_104 = arith.constant 0 : index
    %c0_105 = arith.constant 0 : index
    %303 = vector.load %arg5[%c0_102, %c0_103, %c0_104, %c0_105] : memref<1x1x256x512xf32, #tpu.memory_space<vmem>>, vector<1x1x256x512xf32>
    %304 = vector.shape_cast %303 : vector<1x1x256x512xf32> to vector<256x512xf32>
    %cst_106 = arith.constant dense<0.000000e+00> : vector<8x512xf32>
    %305 = tpu.matmul %302, %304, %cst_106 {dimension_numbers = #tpu.dot_dimension_numbers<[1], [0], [0], [1], [0, 0, 1, 1], [], []>} : vector<8x256xf32>, vector<256x512xf32>, vector<8x512xf32> -> vector<8x512xf32>
    %c0_107 = arith.constant 0 : index
    %c0_108 = arith.constant 0 : index
    %c0_109 = arith.constant 0 : index
    %c0_110 = arith.constant 0 : index
    %306 = vector.load %arg6[%c0_107, %c0_108, %c0_109, %c0_110] : memref<1x1x1x512xf32, #tpu.memory_space<vmem>>, vector<1x1x1x512xf32>
    %307 = vector.shape_cast %306 : vector<1x1x1x512xf32> to vector<1x512xf32>
    %308 = vector.broadcast %307 : vector<1x512xf32> to vector<8x512xf32>
    %309 = arith.addf %305, %308 : vector<8x512xf32>
    %310 = vector.extract_strided_slice %309 {offsets = [0, 0], sizes = [8, 384], strides = [1, 1]} : vector<8x512xf32> to vector<8x384xf32>
    %311 = arith.negf %310 : vector<8x384xf32>
    %312 = math.exp %311 : vector<8x384xf32>
    %cst_111 = arith.constant 1.000000e+00 : f32
    %313 = vector.broadcast %cst_111 : f32 to vector<8x384xf32>
    %314 = arith.addf %313, %312 : vector<8x384xf32>
    %315 = arith.divf %313, %314 : vector<8x384xf32>
    %316 = vector.extract_strided_slice %315 {offsets = [0, 0], sizes = [8, 128], strides = [1, 1]} : vector<8x384xf32> to vector<8x128xf32>
    %317 = vector.extract_strided_slice %315 {offsets = [0, 128], sizes = [8, 128], strides = [1, 1]} : vector<8x384xf32> to vector<8x128xf32>
    %318 = vector.extract_strided_slice %315 {offsets = [0, 256], sizes = [8, 128], strides = [1, 1]} : vector<8x384xf32> to vector<8x128xf32>
    %319 = vector.extract_strided_slice %309 {offsets = [0, 384], sizes = [8, 128], strides = [1, 1]} : vector<8x512xf32> to vector<8x128xf32>
    %320 = math.tanh %319 : vector<8x128xf32>
    %321 = arith.mulf %317, %270 : vector<8x128xf32>
    %322 = arith.mulf %316, %320 : vector<8x128xf32>
    %323 = arith.addf %321, %322 : vector<8x128xf32>
    %324 = math.tanh %323 : vector<8x128xf32>
    %325 = arith.mulf %318, %324 : vector<8x128xf32>
    %326 = vector.broadcast %277 : f32 to vector<8x128xf32>
    %327 = arith.mulf %326, %325 : vector<8x128xf32>
    %328 = arith.addf %275, %327 : vector<8x128xf32>
    %c6_i32 = arith.constant 6 : i32
    %329 = arith.index_cast %c6_i32 : i32 to index
    %330 = memref.load %arg7[%329] : memref<8xf32, #tpu.memory_space<smem>>
    %c8_i32_112 = arith.constant 8 : i32
    %331 = arith.muli %c6_i32, %c8_i32_112 : i32
    %332 = tpu.assume_multiple %331, 8 : i32
    %333 = arith.index_cast %332 : i32 to index
    %c0_113 = arith.constant 0 : index
    %334 = vector.load %arg10[%333, %c0_113] : memref<64x512xf32, #tpu.memory_space<vmem>>, vector<8x512xf32>
    %c0_114 = arith.constant 0 : index
    %c0_115 = arith.constant 0 : index
    %c0_116 = arith.constant 0 : index
    %335 = vector.load %arg4[%c0_114, %c0_115, %c0_116] : memref<1x128x512xf32, #tpu.memory_space<vmem>>, vector<1x128x512xf32>
    %336 = vector.shape_cast %335 : vector<1x128x512xf32> to vector<128x512xf32>
    %cst_117 = arith.constant dense<0.000000e+00> : vector<8x512xf32>
    %337 = tpu.matmul %301, %336, %cst_117 {dimension_numbers = #tpu.dot_dimension_numbers<[1], [0], [0], [1], [0, 0, 1, 1], [], []>} : vector<8x128xf32>, vector<128x512xf32>, vector<8x512xf32> -> vector<8x512xf32>
    %338 = arith.addf %334, %337 : vector<8x512xf32>
    %339 = vector.extract_strided_slice %338 {offsets = [0, 0], sizes = [8, 384], strides = [1, 1]} : vector<8x512xf32> to vector<8x384xf32>
    %340 = arith.negf %339 : vector<8x384xf32>
    %341 = math.exp %340 : vector<8x384xf32>
    %cst_118 = arith.constant 1.000000e+00 : f32
    %342 = vector.broadcast %cst_118 : f32 to vector<8x384xf32>
    %343 = arith.addf %342, %341 : vector<8x384xf32>
    %344 = arith.divf %342, %343 : vector<8x384xf32>
    %345 = vector.extract_strided_slice %344 {offsets = [0, 0], sizes = [8, 128], strides = [1, 1]} : vector<8x384xf32> to vector<8x128xf32>
    %346 = vector.extract_strided_slice %344 {offsets = [0, 128], sizes = [8, 128], strides = [1, 1]} : vector<8x384xf32> to vector<8x128xf32>
    %347 = vector.extract_strided_slice %344 {offsets = [0, 256], sizes = [8, 128], strides = [1, 1]} : vector<8x384xf32> to vector<8x128xf32>
    %348 = vector.extract_strided_slice %338 {offsets = [0, 384], sizes = [8, 128], strides = [1, 1]} : vector<8x512xf32> to vector<8x128xf32>
    %349 = math.tanh %348 : vector<8x128xf32>
    %350 = arith.mulf %346, %299 : vector<8x128xf32>
    %351 = arith.mulf %345, %349 : vector<8x128xf32>
    %352 = arith.addf %350, %351 : vector<8x128xf32>
    %353 = math.tanh %352 : vector<8x128xf32>
    %354 = arith.mulf %347, %353 : vector<8x128xf32>
    %355 = tpu.concatenate %354, %325 in 1 : vector<8x128xf32>, vector<8x128xf32> -> vector<8x256xf32>
    %c0_119 = arith.constant 0 : index
    %c0_120 = arith.constant 0 : index
    %c0_121 = arith.constant 0 : index
    %c0_122 = arith.constant 0 : index
    %356 = vector.load %arg5[%c0_119, %c0_120, %c0_121, %c0_122] : memref<1x1x256x512xf32, #tpu.memory_space<vmem>>, vector<1x1x256x512xf32>
    %357 = vector.shape_cast %356 : vector<1x1x256x512xf32> to vector<256x512xf32>
    %cst_123 = arith.constant dense<0.000000e+00> : vector<8x512xf32>
    %358 = tpu.matmul %355, %357, %cst_123 {dimension_numbers = #tpu.dot_dimension_numbers<[1], [0], [0], [1], [0, 0, 1, 1], [], []>} : vector<8x256xf32>, vector<256x512xf32>, vector<8x512xf32> -> vector<8x512xf32>
    %c0_124 = arith.constant 0 : index
    %c0_125 = arith.constant 0 : index
    %c0_126 = arith.constant 0 : index
    %c0_127 = arith.constant 0 : index
    %359 = vector.load %arg6[%c0_124, %c0_125, %c0_126, %c0_127] : memref<1x1x1x512xf32, #tpu.memory_space<vmem>>, vector<1x1x1x512xf32>
    %360 = vector.shape_cast %359 : vector<1x1x1x512xf32> to vector<1x512xf32>
    %361 = vector.broadcast %360 : vector<1x512xf32> to vector<8x512xf32>
    %362 = arith.addf %358, %361 : vector<8x512xf32>
    %363 = vector.extract_strided_slice %362 {offsets = [0, 0], sizes = [8, 384], strides = [1, 1]} : vector<8x512xf32> to vector<8x384xf32>
    %364 = arith.negf %363 : vector<8x384xf32>
    %365 = math.exp %364 : vector<8x384xf32>
    %cst_128 = arith.constant 1.000000e+00 : f32
    %366 = vector.broadcast %cst_128 : f32 to vector<8x384xf32>
    %367 = arith.addf %366, %365 : vector<8x384xf32>
    %368 = arith.divf %366, %367 : vector<8x384xf32>
    %369 = vector.extract_strided_slice %368 {offsets = [0, 0], sizes = [8, 128], strides = [1, 1]} : vector<8x384xf32> to vector<8x128xf32>
    %370 = vector.extract_strided_slice %368 {offsets = [0, 128], sizes = [8, 128], strides = [1, 1]} : vector<8x384xf32> to vector<8x128xf32>
    %371 = vector.extract_strided_slice %368 {offsets = [0, 256], sizes = [8, 128], strides = [1, 1]} : vector<8x384xf32> to vector<8x128xf32>
    %372 = vector.extract_strided_slice %362 {offsets = [0, 384], sizes = [8, 128], strides = [1, 1]} : vector<8x512xf32> to vector<8x128xf32>
    %373 = math.tanh %372 : vector<8x128xf32>
    %374 = arith.mulf %370, %323 : vector<8x128xf32>
    %375 = arith.mulf %369, %373 : vector<8x128xf32>
    %376 = arith.addf %374, %375 : vector<8x128xf32>
    %377 = math.tanh %376 : vector<8x128xf32>
    %378 = arith.mulf %371, %377 : vector<8x128xf32>
    %379 = vector.broadcast %330 : f32 to vector<8x128xf32>
    %380 = arith.mulf %379, %378 : vector<8x128xf32>
    %381 = arith.addf %328, %380 : vector<8x128xf32>
    %c7_i32 = arith.constant 7 : i32
    %382 = arith.index_cast %c7_i32 : i32 to index
    %383 = memref.load %arg7[%382] : memref<8xf32, #tpu.memory_space<smem>>
    %c8_i32_129 = arith.constant 8 : i32
    %384 = arith.muli %c7_i32, %c8_i32_129 : i32
    %385 = tpu.assume_multiple %384, 8 : i32
    %386 = arith.index_cast %385 : i32 to index
    %c0_130 = arith.constant 0 : index
    %387 = vector.load %arg10[%386, %c0_130] : memref<64x512xf32, #tpu.memory_space<vmem>>, vector<8x512xf32>
    %c0_131 = arith.constant 0 : index
    %c0_132 = arith.constant 0 : index
    %c0_133 = arith.constant 0 : index
    %388 = vector.load %arg4[%c0_131, %c0_132, %c0_133] : memref<1x128x512xf32, #tpu.memory_space<vmem>>, vector<1x128x512xf32>
    %389 = vector.shape_cast %388 : vector<1x128x512xf32> to vector<128x512xf32>
    %cst_134 = arith.constant dense<0.000000e+00> : vector<8x512xf32>
    %390 = tpu.matmul %354, %389, %cst_134 {dimension_numbers = #tpu.dot_dimension_numbers<[1], [0], [0], [1], [0, 0, 1, 1], [], []>} : vector<8x128xf32>, vector<128x512xf32>, vector<8x512xf32> -> vector<8x512xf32>
    %391 = arith.addf %387, %390 : vector<8x512xf32>
    %392 = vector.extract_strided_slice %391 {offsets = [0, 0], sizes = [8, 384], strides = [1, 1]} : vector<8x512xf32> to vector<8x384xf32>
    %393 = arith.negf %392 : vector<8x384xf32>
    %394 = math.exp %393 : vector<8x384xf32>
    %cst_135 = arith.constant 1.000000e+00 : f32
    %395 = vector.broadcast %cst_135 : f32 to vector<8x384xf32>
    %396 = arith.addf %395, %394 : vector<8x384xf32>
    %397 = arith.divf %395, %396 : vector<8x384xf32>
    %398 = vector.extract_strided_slice %397 {offsets = [0, 0], sizes = [8, 128], strides = [1, 1]} : vector<8x384xf32> to vector<8x128xf32>
    %399 = vector.extract_strided_slice %397 {offsets = [0, 128], sizes = [8, 128], strides = [1, 1]} : vector<8x384xf32> to vector<8x128xf32>
    %400 = vector.extract_strided_slice %397 {offsets = [0, 256], sizes = [8, 128], strides = [1, 1]} : vector<8x384xf32> to vector<8x128xf32>
    %401 = vector.extract_strided_slice %391 {offsets = [0, 384], sizes = [8, 128], strides = [1, 1]} : vector<8x512xf32> to vector<8x128xf32>
    %402 = math.tanh %401 : vector<8x128xf32>
    %403 = arith.mulf %399, %352 : vector<8x128xf32>
    %404 = arith.mulf %398, %402 : vector<8x128xf32>
    %405 = arith.addf %403, %404 : vector<8x128xf32>
    %406 = math.tanh %405 : vector<8x128xf32>
    %407 = arith.mulf %400, %406 : vector<8x128xf32>
    %408 = tpu.concatenate %407, %378 in 1 : vector<8x128xf32>, vector<8x128xf32> -> vector<8x256xf32>
    %c0_136 = arith.constant 0 : index
    %c0_137 = arith.constant 0 : index
    %c0_138 = arith.constant 0 : index
    %c0_139 = arith.constant 0 : index
    %409 = vector.load %arg5[%c0_136, %c0_137, %c0_138, %c0_139] : memref<1x1x256x512xf32, #tpu.memory_space<vmem>>, vector<1x1x256x512xf32>
    %410 = vector.shape_cast %409 : vector<1x1x256x512xf32> to vector<256x512xf32>
    %cst_140 = arith.constant dense<0.000000e+00> : vector<8x512xf32>
    %411 = tpu.matmul %408, %410, %cst_140 {dimension_numbers = #tpu.dot_dimension_numbers<[1], [0], [0], [1], [0, 0, 1, 1], [], []>} : vector<8x256xf32>, vector<256x512xf32>, vector<8x512xf32> -> vector<8x512xf32>
    %c0_141 = arith.constant 0 : index
    %c0_142 = arith.constant 0 : index
    %c0_143 = arith.constant 0 : index
    %c0_144 = arith.constant 0 : index
    %412 = vector.load %arg6[%c0_141, %c0_142, %c0_143, %c0_144] : memref<1x1x1x512xf32, #tpu.memory_space<vmem>>, vector<1x1x1x512xf32>
    %413 = vector.shape_cast %412 : vector<1x1x1x512xf32> to vector<1x512xf32>
    %414 = vector.broadcast %413 : vector<1x512xf32> to vector<8x512xf32>
    %415 = arith.addf %411, %414 : vector<8x512xf32>
    %416 = vector.extract_strided_slice %415 {offsets = [0, 0], sizes = [8, 384], strides = [1, 1]} : vector<8x512xf32> to vector<8x384xf32>
    %417 = arith.negf %416 : vector<8x384xf32>
    %418 = math.exp %417 : vector<8x384xf32>
    %cst_145 = arith.constant 1.000000e+00 : f32
    %419 = vector.broadcast %cst_145 : f32 to vector<8x384xf32>
    %420 = arith.addf %419, %418 : vector<8x384xf32>
    %421 = arith.divf %419, %420 : vector<8x384xf32>
    %422 = vector.extract_strided_slice %421 {offsets = [0, 0], sizes = [8, 128], strides = [1, 1]} : vector<8x384xf32> to vector<8x128xf32>
    %423 = vector.extract_strided_slice %421 {offsets = [0, 128], sizes = [8, 128], strides = [1, 1]} : vector<8x384xf32> to vector<8x128xf32>
    %424 = vector.extract_strided_slice %421 {offsets = [0, 256], sizes = [8, 128], strides = [1, 1]} : vector<8x384xf32> to vector<8x128xf32>
    %425 = vector.extract_strided_slice %415 {offsets = [0, 384], sizes = [8, 128], strides = [1, 1]} : vector<8x512xf32> to vector<8x128xf32>
    %426 = math.tanh %425 : vector<8x128xf32>
    %427 = arith.mulf %423, %376 : vector<8x128xf32>
    %428 = arith.mulf %422, %426 : vector<8x128xf32>
    %429 = arith.addf %427, %428 : vector<8x128xf32>
    %430 = math.tanh %429 : vector<8x128xf32>
    %431 = arith.mulf %424, %430 : vector<8x128xf32>
    %432 = vector.broadcast %383 : f32 to vector<8x128xf32>
    %433 = arith.mulf %432, %431 : vector<8x128xf32>
    %434 = arith.addf %381, %433 : vector<8x128xf32>
    %c8_i32_146 = arith.constant 8 : i32
    %c0_147 = arith.constant 0 : index
    %c0_148 = arith.constant 0 : index
    %c0_149 = arith.constant 0 : index
    %435 = vector.load %arg8[%c0_147, %c0_148, %c0_149] : memref<1x128x3xf32, #tpu.memory_space<vmem>>, vector<1x128x3xf32>
    %436 = vector.shape_cast %435 : vector<1x128x3xf32> to vector<128x3xf32>
    %cst_150 = arith.constant dense<0.000000e+00> : vector<8x3xf32>
    %437 = tpu.matmul %434, %436, %cst_150 {dimension_numbers = #tpu.dot_dimension_numbers<[1], [0], [0], [1], [0, 0, 1, 1], [], []>} : vector<8x128xf32>, vector<128x3xf32>, vector<8x3xf32> -> vector<8x3xf32>
    %c0_151 = arith.constant 0 : index
    %c0_152 = arith.constant 0 : index
    %c0_153 = arith.constant 0 : index
    %438 = vector.load %arg9[%c0_151, %c0_152, %c0_153] : memref<1x8x3xf32, #tpu.memory_space<vmem>>, vector<1x8x3xf32>
    %439 = vector.shape_cast %438 : vector<1x8x3xf32> to vector<8x3xf32>
    %440 = vector.shape_cast %437 : vector<8x3xf32> to vector<1x8x3xf32>
    tpu.vector_store %arg9[%c0_151, %c0_152, %c0_153], %440 {strides = array<i32>} : memref<1x8x3xf32, #tpu.memory_space<vmem>>, vector<1x8x3xf32>,
    return
  }
  func.func @transform_0(%arg0: i32) -> (i32, i32, i32) {
    %c0_i32 = arith.constant 0 : i32
    %c0_i32_0 = arith.constant 0 : i32
    %c0_i32_1 = arith.constant 0 : i32
    return %arg0, %c0_i32, %c0_i32_0 : i32, i32, i32
  }
  func.func @transform_1(%arg0: i32) -> (i32, i32, i32) {
    %c0_i32 = arith.constant 0 : i32
    %c0_i32_0 = arith.constant 0 : i32
    %c0_i32_1 = arith.constant 0 : i32
    return %arg0, %c0_i32, %c0_i32_0 : i32, i32, i32
  }
  func.func @transform_2(%arg0: i32) -> (i32, i32, i32) {
    %c0_i32 = arith.constant 0 : i32
    %c0_i32_0 = arith.constant 0 : i32
    %c0_i32_1 = arith.constant 0 : i32
    return %arg0, %c0_i32, %c0_i32_0 : i32, i32, i32
  }
  func.func @transform_3(%arg0: i32) -> (i32, i32, i32) {
    %c0_i32 = arith.constant 0 : i32
    %c0_i32_0 = arith.constant 0 : i32
    %c0_i32_1 = arith.constant 0 : i32
    return %arg0, %c0_i32, %c0_i32_0 : i32, i32, i32
  }
  func.func @transform_4(%arg0: i32) -> (i32, i32, i32, i32) {
    %c0_i32 = arith.constant 0 : i32
    %c0_i32_0 = arith.constant 0 : i32
    %c0_i32_1 = arith.constant 0 : i32
    %c0_i32_2 = arith.constant 0 : i32
    return %arg0, %c0_i32, %c0_i32_0, %c0_i32_1 : i32, i32, i32, i32
  }
  func.func @transform_5(%arg0: i32) -> (i32, i32, i32, i32) {
    %c0_i32 = arith.constant 0 : i32
    %c0_i32_0 = arith.constant 0 : i32
    %c0_i32_1 = arith.constant 0 : i32
    %c0_i32_2 = arith.constant 0 : i32
    return %arg0, %c0_i32, %c0_i32_0, %c0_i32_1 : i32, i32, i32, i32
  }
  func.func @transform_6(%arg0: i32) -> i32 {
    %c0_i32 = arith.constant 0 : i32
    %c0_i32_0 = arith.constant 0 : i32
    return %c0_i32 : i32
  }
  func.func @transform_7(%arg0: i32) -> (i32, i32, i32) {
    %c0_i32 = arith.constant 0 : i32
    %c0_i32_0 = arith.constant 0 : i32
    %c0_i32_1 = arith.constant 0 : i32
    return %arg0, %c0_i32, %c0_i32_0 : i32, i32, i32
  }
  func.func @transform_8(%arg0: i32) -> (i32, i32, i32) {
    %c0_i32 = arith.constant 0 : i32
    %c0_i32_0 = arith.constant 0 : i32
    %c0_i32_1 = arith.constant 0 : i32
    return %arg0, %c0_i32, %c0_i32_0 : i32, i32, i32
  }
}

</mosaic_0001>

<llo_original>
// kernel: tpu_custom_call.1
$region0: #{tpu_custom_call.1}
  #allocation0 [shape = 'u32[]', space=smem, size = 0x4, offset = 0x4, fixed_abs, tag = 'smem constant byte address 0x4 - core index']
  #allocation1 [shape = 'u32[144,128]{1,0:T(1,128)}', space=vmem, size = 0x12000, scoped, tag = 'internal scratch']
  #allocation2 [shape = 'f32[64,512]{1,0:T(8,128)}', space=vmem, size = 0x20000, scoped, tag = 'scratch operand']
  %s0 = inlined_call_operand.vmem [shape: f32[1,64,8], index: 0, kind: input, shape index: {}]
  %s1 = inlined_call_operand.vmem [shape: f32[1,8,512], index: 1, kind: input, shape index: {}]
  %s2 = inlined_call_operand.vmem [shape: f32[1,1,512], index: 2, kind: input, shape index: {}]
  %s3 = inlined_call_operand.hbm [shape: f32[1,128,512], index: 3, kind: input, shape index: {}]
  %s4 = inlined_call_operand.hbm [shape: f32[1,1,256,512], index: 4, kind: input, shape index: {}]
  %s5 = inlined_call_operand.vmem [shape: f32[1,1,1,512], index: 5, kind: input, shape index: {}]
  %s6 = inlined_call_operand.vmem [shape: f32[8], index: 6, kind: input, shape index: {}]
  %s7 = inlined_call_operand.vmem [shape: f32[1,128,3], index: 7, kind: input, shape index: {}]
  %s8 = inlined_call_operand.vmem [shape: f32[1,8,3], index: 8, kind: output, shape index: {}]
  %s9 = sld [smem:[#allocation0]]
  $region54: #{tpu_custom_call.1} parent=0
    _
  %s11 = ssub.s32 1, %s9
  %s12 = scalar_select 0, %s11, %s9
  $region1: #{tpu_custom_call.1} parent=0
    #allocation3 [shape = 'u8[262144]{0}', space=vmem, size = 0x40000, scoped, tag = 'input window, operand 3, single buffered']
    #allocation4 [shape = 's32[1]{0}', space=sflag, size = 0x4, scoped, tag = 'scoped memory for tpu_custom_call.1']
    #allocation5 [shape = 's32[1]{0}', space=sflag, size = 0x4, scoped, tag = 'scoped memory for tpu_custom_call.1']
    #allocation6 [shape = 'u8[524288]{0}', space=vmem, size = 0x80000, scoped, tag = 'input window, operand 4, single buffered']
    #allocation7 [shape = 's32[1]{0}', space=sflag, size = 0x4, scoped, tag = 'scoped memory for tpu_custom_call.1']
    #allocation8 [shape = 'u8[512]{0}', space=smem, size = 0x200, scoped, tag = 'input window, operand 6, single buffered']
    %13 = vsyncpa [#allocation4], 0
    %14 = vsyncpa [#allocation7], 0
    %15 = vsyncpa [#allocation5], 0
    // Predicated region
    $region2: #{tpu_custom_call.1} parent=1 // pred_check
      _
    $region3: #{tpu_custom_call.1} parent=1 // pred_check_branch
      %17 = sbr.rel (0) target = $region5
    $region4: #{tpu_custom_call.1} parent=1 // pred_region
      _
    $region5: #{tpu_custom_call.1} parent=1 // pred_fallthru
      _
    // Predicated region
    $region6: #{tpu_custom_call.1} parent=1 // pred_check
      _
    $region7: #{tpu_custom_call.1} parent=1 // pred_check_branch
      %19 = sbr.rel (0) target = $region9
    $region8: #{tpu_custom_call.1} parent=1 // pred_region
      _
    $region9: #{tpu_custom_call.1} parent=1 // pred_fallthru
      _
    // Predicated region
    $region10: #{tpu_custom_call.1} parent=1 // pred_check
      _
    $region11: #{tpu_custom_call.1} parent=1 // pred_check_branch
      %21 = sbr.rel (0) target = $region13
    $region12: #{tpu_custom_call.1} parent=1 // pred_region
      _
    $region13: #{tpu_custom_call.1} parent=1 // pred_fallthru
      _
    // Predicated region
    $region14: #{tpu_custom_call.1} parent=1 // pred_check
      _
    $region15: #{tpu_custom_call.1} parent=1 // pred_check_branch
      %23 = sbr.rel (0) target = $region17
    $region16: #{tpu_custom_call.1} parent=1 // pred_region
      %s25 = ssub.s32 8192, 8192
      %26 = vsyncadd [#allocation4], %s25
      %s27 = sshll.u32 [#allocation3], 4
      %s28 = int_to_ptr.vmem [resolvable:$true] %s27
      %33 = dma.hbm_to_vmem [thread:$0]  %s3, 8192, %s28, [#allocation4], 512, 512, 32
    $region17: #{tpu_custom_call.1} parent=1 // pred_fallthru
      _
    // Predicated region
    $region18: #{tpu_custom_call.1} parent=1 // pred_check
      _
    $region19: #{tpu_custom_call.1} parent=1 // pred_check_branch
      %35 = sbr.rel (0) target = $region21
    $region20: #{tpu_custom_call.1} parent=1 // pred_region
      %s37 = ssub.s32 16384, 16384
      %38 = vsyncadd [#allocation7], %s37
      %s39 = sshll.u32 [#allocation6], 4
      %s40 = int_to_ptr.vmem [resolvable:$true] %s39
      %45 = dma.hbm_to_vmem [thread:$0]  %s4, 16384, %s40, [#allocation7], 512, 512, 32
    $region21: #{tpu_custom_call.1} parent=1 // pred_fallthru
      _
    // Predicated region
    $region22: #{tpu_custom_call.1} parent=1 // pred_check
      _
    $region23: #{tpu_custom_call.1} parent=1 // pred_check_branch
      %47 = sbr.rel (0) target = $region25
    $region24: #{tpu_custom_call.1} parent=1 // pred_region
      _
    $region25: #{tpu_custom_call.1} parent=1 // pred_fallthru
      _
    // Predicated region
    $region26: #{tpu_custom_call.1} parent=1 // pred_check
      _
    $region27: #{tpu_custom_call.1} parent=1 // pred_check_branch
      %49 = sbr.rel (0) target = $region29
    $region28: #{tpu_custom_call.1} parent=1 // pred_region
      %s51 = ssub.s32 16, 16
      %52 = vsyncadd [#allocation5], %s51
      %s54 = sshll.u32 %s6, 4
      %s55 = int_to_ptr.vmem [resolvable:$true] %s54
      %57 = dma.vmem_to_smem %s55, 16, [#allocation8], [#allocation5]
    $region29: #{tpu_custom_call.1} parent=1 // pred_fallthru
      _
    // Predicated region
    $region30: #{tpu_custom_call.1} parent=1 // pred_check
      _
    $region31: #{tpu_custom_call.1} parent=1 // pred_check_branch
      %59 = sbr.rel (0) target = $region33
    $region32: #{tpu_custom_call.1} parent=1 // pred_region
      _
    $region33: #{tpu_custom_call.1} parent=1 // pred_fallthru
      _
    // Predicated region
    $region34: #{tpu_custom_call.1} parent=1 // pred_check
      _
    $region35: #{tpu_custom_call.1} parent=1 // pred_check_branch
      %61 = sbr.rel (0) target = $region37
    $region36: #{tpu_custom_call.1} parent=1 // pred_region
      %62 = dma.done [#allocation4], 8192
    $region37: #{tpu_custom_call.1} parent=1 // pred_fallthru
      _
    // Predicated region
    $region38: #{tpu_custom_call.1} parent=1 // pred_check
      _
    $region39: #{tpu_custom_call.1} parent=1 // pred_check_branch
      %64 = sbr.rel (0) target = $region41
    $region40: #{tpu_custom_call.1} parent=1 // pred_region
      %65 = dma.done [#allocation7], 16384
    $region41: #{tpu_custom_call.1} parent=1 // pred_fallthru
      _
    // Predicated region
    $region42: #{tpu_custom_call.1} parent=1 // pred_check
      _
    $region43: #{tpu_custom_call.1} parent=1 // pred_check_branch
      %67 = sbr.rel (0) target = $region45
    $region44: #{tpu_custom_call.1} parent=1 // pred_region
      %68 = dma.done [#allocation5], 16
    $region45: #{tpu_custom_call.1} parent=1 // pred_fallthru
      _
    %69 = sfence
    %v70 = vld [vmem:[%s0] sm:$0xff]
    %v71 = vld [vmem:[%s0 + $0x8] sm:$0xff]
    %v72 = vld [vmem:[%s0 + $0x10] sm:$0xff]
    %v73 = vld [vmem:[%s0 + $0x18] sm:$0xff]
    %v74 = vld [vmem:[%s0 + $0x20] sm:$0xff]
    %v75 = vld [vmem:[%s0 + $0x28] sm:$0xff]
    %v76 = vld [vmem:[%s0 + $0x30] sm:$0xff]
    %v77 = vld [vmem:[%s0 + $0x38] sm:$0xff]
    %v78 = vld [vmem:[%s1] sm:$0xff]
    %v79 = vld [vmem:[%s1 + $0x8] sm:$0xff]
    %v80 = vld [vmem:[%s1 + $0x10] sm:$0xff]
    %v81 = vld [vmem:[%s1 + $0x18] sm:$0xff]
    %v82 = vld [vmem:[%s2] sm:$0xf]
    %v84 = vlaneseq
    %v85 = vshrl.u32 %v84, 7
    %v86 = vsub.s32 0, %v85
    %v87 = vrot.slane %v82, %v86
    %v88 = vlaneseq
    %v89 = vshrl.u32 %v88, 7
    %v90 = vsub.s32 1, %v89
    %v91 = vrot.slane %v82, %v90
    %v92 = vlaneseq
    %v93 = vshrl.u32 %v92, 7
    %v94 = vsub.s32 2, %v93
    %v95 = vrot.slane %v82, %v94
    %v96 = vlaneseq
    %v97 = vshrl.u32 %v96, 7
    %v98 = vsub.s32 3, %v97
    %v99 = vrot.slane %v82, %v98
    %vm104 = vcmask 64512
    %v106 = vsel %vm104, %v70, 0
    %v109 = vsel %vm104, %v71, 0
    %v112 = vsel %vm104, %v72, 0
    %v115 = vsel %vm104, %v73, 0
    %v118 = vsel %vm104, %v74, 0
    %v121 = vsel %vm104, %v75, 0
    %v124 = vsel %vm104, %v76, 0
    %v127 = vsel %vm104, %v77, 0
    %129 = vmatprep.subr.mxu0 %v79
    %130 = vmatpush1.msra.mxu0 %v78
    %131 = vmatprep.subr.mxu0 0.0
    %132 = vmatpush1.msra.mxu0 0.0
    %133 = vmatprep.subr.mxu0 0.0
    %134 = vmatpush1.msra.mxu0 0.0
    %135 = vmatprep.subr.mxu0 0.0
    %136 = vmatpush1.msra.mxu0 0.0
    %137 = vmatprep.subr.mxu0 0.0
    %138 = vmatpush1.msra.mxu0 0.0
    %139 = vmatprep.subr.mxu0 0.0
    %140 = vmatpush1.msra.mxu0 0.0
    %141 = vmatprep.subr.mxu0 0.0
    %142 = vmatpush1.msra.mxu0 0.0
    %143 = vmatprep.subr.mxu0 0.0
    %144 = vmatpush1.msra.mxu0 0.0
    %145 = vmatprep.subr.mxu0 0.0
    %146 = vmatpush1.msra.mxu0 0.0
    %147 = vmatprep.subr.mxu0 0.0
    %148 = vmatpush1.msra.mxu0 0.0
    %149 = vmatprep.subr.mxu0 0.0
    %150 = vmatpush1.msra.mxu0 0.0
    %151 = vmatprep.subr.mxu0 0.0
    %152 = vmatpush1.msra.mxu0 0.0
    %153 = vmatprep.subr.mxu0 0.0
    %154 = vmatpush1.msra.mxu0 0.0
    %155 = vmatprep.subr.mxu0 0.0
    %156 = vmatpush1.msra.mxu0 0.0
    %157 = vmatprep.subr.mxu0 0.0
    %158 = vmatpush1.msra.mxu0 0.0
    %159 = vmatprep.subr.mxu0 0.0
    %160 = vmatpush1.msra.mxu0 0.0
    %161 = vmatprep.subr.mxu0 0.0
    %162 = vmatpush1.msra.mxu0 0.0
    %163 = vmatprep.subr.mxu0 0.0
    %164 = vmatpush1.msra.mxu0 0.0
    %165 = vmatprep.subr.mxu0 0.0
    %166 = vmatpush1.msra.mxu0 0.0
    %167 = vmatprep.subr.mxu0 0.0
    %168 = vmatpush1.msra.mxu0 0.0
    %169 = vmatprep.subr.mxu0 0.0
    %170 = vmatpush1.msra.mxu0 0.0
    %171 = vmatprep.subr.mxu0 0.0
    %172 = vmatpush1.msra.mxu0 0.0
    %173 = vmatprep.subr.mxu0 0.0
    %174 = vmatpush1.msra.mxu0 0.0
    %175 = vmatprep.subr.mxu0 0.0
    %176 = vmatpush1.msra.mxu0 0.0
    %177 = vmatprep.subr.mxu0 0.0
    %178 = vmatpush1.msra.mxu0 0.0
    %179 = vmatprep.subr.mxu0 0.0
    %180 = vmatpush1.msra.mxu0 0.0
    %181 = vmatprep.subr.mxu0 0.0
    %182 = vmatpush1.msra.mxu0 0.0
    %183 = vmatprep.subr.mxu0 0.0
    %184 = vmatpush1.msra.mxu0 0.0
    %185 = vmatprep.subr.mxu0 0.0
    %186 = vmatpush1.msra.mxu0 0.0
    %187 = vmatprep.subr.mxu0 0.0
    %188 = vmatpush1.msra.mxu0 0.0
    %189 = vmatprep.subr.mxu0 0.0
    %190 = vmatpush1.msra.mxu0 0.0
    %191 = vmatprep.subr.mxu0 0.0
    %192 = vmatpush1.msra.mxu0 0.0
    %193 = vmatprep.mubr.f32.mxu0 0.0
    %194 = vmatmul.mubr.f32.gmra.mrb[0].mxu0 %v106
    %v195 = vpop.f32.mrb[0].mxu0
    %v196 = vadd.f32 %v87, %v195
    %v197 = vpop.f32.mrb[0].mxu0
    %v198 = vadd.f32 %v91, %v197
    %199 = vmatprep.mubr.f32.mxu0 0.0
    %200 = vmatmul.mubr.f32.gmra.mrb[0].mxu0 %v109
    %v201 = vpop.f32.mrb[0].mxu0
    %v202 = vadd.f32 %v87, %v201
    %v203 = vpop.f32.mrb[0].mxu0
    %v204 = vadd.f32 %v91, %v203
    %205 = vmatprep.mubr.f32.mxu0 0.0
    %206 = vmatmul.mubr.f32.gmra.mrb[0].mxu0 %v112
    %v207 = vpop.f32.mrb[0].mxu0
    %v208 = vadd.f32 %v87, %v207
    %v209 = vpop.f32.mrb[0].mxu0
    %v210 = vadd.f32 %v91, %v209
    %211 = vmatprep.mubr.f32.mxu0 0.0
    %212 = vmatmul.mubr.f32.gmra.mrb[0].mxu0 %v115
    %v213 = vpop.f32.mrb[0].mxu0
    %v214 = vadd.f32 %v87, %v213
    %v215 = vpop.f32.mrb[0].mxu0
    %v216 = vadd.f32 %v91, %v215
    %217 = vmatprep.mubr.f32.mxu0 0.0
    %218 = vmatmul.mubr.f32.gmra.mrb[0].mxu0 %v118
    %v219 = vpop.f32.mrb[0].mxu0
    %v220 = vadd.f32 %v87, %v219
    %v221 = vpop.f32.mrb[0].mxu0
    %v222 = vadd.f32 %v91, %v221
    %223 = vmatprep.mubr.f32.mxu0 0.0
    %224 = vmatmul.mubr.f32.gmra.mrb[0].mxu0 %v121
    %v225 = vpop.f32.mrb[0].mxu0
    %v226 = vadd.f32 %v87, %v225
    %v227 = vpop.f32.mrb[0].mxu0
    %v228 = vadd.f32 %v91, %v227
    %229 = vmatprep.mubr.f32.mxu0 0.0
    %230 = vmatmul.mubr.f32.gmra.mrb[0].mxu0 %v124
    %v231 = vpop.f32.mrb[0].mxu0
    %v232 = vadd.f32 %v87, %v231
    %v233 = vpop.f32.mrb[0].mxu0
    %v234 = vadd.f32 %v91, %v233
    %235 = vmatprep.mubr.f32.mxu0 0.0
    %236 = vmatmul.mubr.f32.gmra.mrb[0].mxu0 %v127
    %v237 = vpop.f32.mrb[0].mxu0
    %v238 = vadd.f32 %v87, %v237
    %v239 = vpop.f32.mrb[0].mxu0
    %v240 = vadd.f32 %v91, %v239
    %241 = vdwg.mxu0
    %242 = vmatprep.subr.mxu0 %v81
    %243 = vmatpush1.msra.mxu0 %v80
    %244 = vmatprep.subr.mxu0 0.0
    %245 = vmatpush1.msra.mxu0 0.0
    %246 = vmatprep.subr.mxu0 0.0
    %247 = vmatpush1.msra.mxu0 0.0
    %248 = vmatprep.subr.mxu0 0.0
    %249 = vmatpush1.msra.mxu0 0.0
    %250 = vmatprep.subr.mxu0 0.0
    %251 = vmatpush1.msra.mxu0 0.0
    %252 = vmatprep.subr.mxu0 0.0
    %253 = vmatpush1.msra.mxu0 0.0
    %254 = vmatprep.subr.mxu0 0.0
    %255 = vmatpush1.msra.mxu0 0.0
    %256 = vmatprep.subr.mxu0 0.0
    %257 = vmatpush1.msra.mxu0 0.0
    %258 = vmatprep.subr.mxu0 0.0
    %259 = vmatpush1.msra.mxu0 0.0
    %260 = vmatprep.subr.mxu0 0.0
    %261 = vmatpush1.msra.mxu0 0.0
    %262 = vmatprep.subr.mxu0 0.0
    %263 = vmatpush1.msra.mxu0 0.0
    %264 = vmatprep.subr.mxu0 0.0
    %265 = vmatpush1.msra.mxu0 0.0
    %266 = vmatprep.subr.mxu0 0.0
    %267 = vmatpush1.msra.mxu0 0.0
    %268 = vmatprep.subr.mxu0 0.0
    %269 = vmatpush1.msra.mxu0 0.0
    %270 = vmatprep.subr.mxu0 0.0
    %271 = vmatpush1.msra.mxu0 0.0
    %272 = vmatprep.subr.mxu0 0.0
    %273 = vmatpush1.msra.mxu0 0.0
    %274 = vmatprep.subr.mxu0 0.0
    %275 = vmatpush1.msra.mxu0 0.0
    %276 = vmatprep.subr.mxu0 0.0
    %277 = vmatpush1.msra.mxu0 0.0
    %278 = vmatprep.subr.mxu0 0.0
    %279 = vmatpush1.msra.mxu0 0.0
    %280 = vmatprep.subr.mxu0 0.0
    %281 = vmatpush1.msra.mxu0 0.0
    %282 = vmatprep.subr.mxu0 0.0
    %283 = vmatpush1.msra.mxu0 0.0
    %284 = vmatprep.subr.mxu0 0.0
    %285 = vmatpush1.msra.mxu0 0.0
    %286 = vmatprep.subr.mxu0 0.0
    %287 = vmatpush1.msra.mxu0 0.0
    %288 = vmatprep.subr.mxu0 0.0
    %289 = vmatpush1.msra.mxu0 0.0
    %290 = vmatprep.subr.mxu0 0.0
    %291 = vmatpush1.msra.mxu0 0.0
    %292 = vmatprep.subr.mxu0 0.0
    %293 = vmatpush1.msra.mxu0 0.0
    %294 = vmatprep.subr.mxu0 0.0
    %295 = vmatpush1.msra.mxu0 0.0
    %296 = vmatprep.subr.mxu0 0.0
    %297 = vmatpush1.msra.mxu0 0.0
    %298 = vmatprep.subr.mxu0 0.0
    %299 = vmatpush1.msra.mxu0 0.0
    %300 = vmatprep.subr.mxu0 0.0
    %301 = vmatpush1.msra.mxu0 0.0
    %302 = vmatprep.subr.mxu0 0.0
    %303 = vmatpush1.msra.mxu0 0.0
    %304 = vmatprep.subr.mxu0 0.0
    %305 = vmatpush1.msra.mxu0 0.0
    %306 = vmatprep.mubr.f32.mxu0 0.0
    %307 = vmatmul.mubr.f32.gmra.mrb[0].mxu0 %v106
    %v308 = vpop.f32.mrb[0].mxu0
    %v309 = vadd.f32 %v95, %v308
    %v310 = vpop.f32.mrb[0].mxu0
    %v311 = vadd.f32 %v99, %v310
    %312 = vmatprep.mubr.f32.mxu0 0.0
    %313 = vmatmul.mubr.f32.gmra.mrb[0].mxu0 %v109
    %v314 = vpop.f32.mrb[0].mxu0
    %v315 = vadd.f32 %v95, %v314
    %v316 = vpop.f32.mrb[0].mxu0
    %v317 = vadd.f32 %v99, %v316
    %318 = vmatprep.mubr.f32.mxu0 0.0
    %319 = vmatmul.mubr.f32.gmra.mrb[0].mxu0 %v112
    %v320 = vpop.f32.mrb[0].mxu0
    %v321 = vadd.f32 %v95, %v320
    %v322 = vpop.f32.mrb[0].mxu0
    %v323 = vadd.f32 %v99, %v322
    %324 = vmatprep.mubr.f32.mxu0 0.0
    %325 = vmatmul.mubr.f32.gmra.mrb[0].mxu0 %v115
    %v326 = vpop.f32.mrb[0].mxu0
    %v327 = vadd.f32 %v95, %v326
    %v328 = vpop.f32.mrb[0].mxu0
    %v329 = vadd.f32 %v99, %v328
    %330 = vmatprep.mubr.f32.mxu0 0.0
    %331 = vmatmul.mubr.f32.gmra.mrb[0].mxu0 %v118
    %v332 = vpop.f32.mrb[0].mxu0
    %v333 = vadd.f32 %v95, %v332
    %v334 = vpop.f32.mrb[0].mxu0
    %v335 = vadd.f32 %v99, %v334
    %336 = vmatprep.mubr.f32.mxu0 0.0
    %337 = vmatmul.mubr.f32.gmra.mrb[0].mxu0 %v121
    %v338 = vpop.f32.mrb[0].mxu0
    %v339 = vadd.f32 %v95, %v338
    %v340 = vpop.f32.mrb[0].mxu0
    %v341 = vadd.f32 %v99, %v340
    %342 = vmatprep.mubr.f32.mxu0 0.0
    %343 = vmatmul.mubr.f32.gmra.mrb[0].mxu0 %v124
    %v344 = vpop.f32.mrb[0].mxu0
    %v345 = vadd.f32 %v95, %v344
    %v346 = vpop.f32.mrb[0].mxu0
    %v347 = vadd.f32 %v99, %v346
    %348 = vmatprep.mubr.f32.mxu0 0.0
    %349 = vmatmul.mubr.f32.gmra.mrb[0].mxu0 %v127
    %v350 = vpop.f32.mrb[0].mxu0
    %v351 = vadd.f32 %v95, %v350
    %v352 = vpop.f32.mrb[0].mxu0
    %v353 = vadd.f32 %v99, %v352
    %354 = vdwg.mxu0
    %355 = vst [vmem:[#allocation2] sm:$0xff] %v196
    %356 = vst [vmem:[#allocation2 + $0x8] sm:$0xff] %v198
    %357 = vst [vmem:[#allocation2 + $0x10] sm:$0xff] %v309
    %358 = vst [vmem:[#allocation2 + $0x18] sm:$0xff] %v311
    %359 = vst [vmem:[#allocation2 + $0x20] sm:$0xff] %v202
    %360 = vst [vmem:[#allocation2 + $0x28] sm:$0xff] %v204
    %361 = vst [vmem:[#allocation2 + $0x30] sm:$0xff] %v315
    %362 = vst [vmem:[#allocation2 + $0x38] sm:$0xff] %v317
    %363 = vst [vmem:[#allocation2 + $0x40] sm:$0xff] %v208
    %364 = vst [vmem:[#allocation2 + $0x48] sm:$0xff] %v210
    %365 = vst [vmem:[#allocation2 + $0x50] sm:$0xff] %v321
    %366 = vst [vmem:[#allocation2 + $0x58] sm:$0xff] %v323
    %367 = vst [vmem:[#allocation2 + $0x60] sm:$0xff] %v214
    %368 = vst [vmem:[#allocation2 + $0x68] sm:$0xff] %v216
    %369 = vst [vmem:[#allocation2 + $0x70] sm:$0xff] %v327
    %370 = vst [vmem:[#allocation2 + $0x78] sm:$0xff] %v329
    %371 = vst [vmem:[#allocation2 + $0x80] sm:$0xff] %v220
    %372 = vst [vmem:[#allocation2 + $0x88] sm:$0xff] %v222
    %373 = vst [vmem:[#allocation2 + $0x90] sm:$0xff] %v333
    %374 = vst [vmem:[#allocation2 + $0x98] sm:$0xff] %v335
    %375 = vst [vmem:[#allocation2 + $0xa0] sm:$0xff] %v226
    %376 = vst [vmem:[#allocation2 + $0xa8] sm:$0xff] %v228
    %377 = vst [vmem:[#allocation2 + $0xb0] sm:$0xff] %v339
    %378 = vst [vmem:[#allocation2 + $0xb8] sm:$0xff] %v341
    %379 = vst [vmem:[#allocation2 + $0xc0] sm:$0xff] %v232
    %380 = vst [vmem:[#allocation2 + $0xc8] sm:$0xff] %v234
    %381 = vst [vmem:[#allocation2 + $0xd0] sm:$0xff] %v345
    %382 = vst [vmem:[#allocation2 + $0xd8] sm:$0xff] %v347
    %383 = vst [vmem:[#allocation2 + $0xe0] sm:$0xff] %v238
    %384 = vst [vmem:[#allocation2 + $0xe8] sm:$0xff] %v240
    %385 = vst [vmem:[#allocation2 + $0xf0] sm:$0xff] %v351
    %386 = vst [vmem:[#allocation2 + $0xf8] sm:$0xff] %v353
    %s387 = sld [smem:[#allocation8]]
    %s388 = smul.u32 0, 4
    %s389 = smul.addr %s388, 8
    %s390 = scalar_lea.vmem [#allocation2], %s389
    %v391 = vld [vmem:[%s390] sm:$0xff]
    %v392 = vld [vmem:[%s390 + $0x8] sm:$0xff]
    %v393 = vld [vmem:[%s390 + $0x10] sm:$0xff]
    %v394 = vld [vmem:[%s390 + $0x18] sm:$0xff]
    %v395 = vld [vmem:[#allocation3] sm:$0xff]
    %v396 = vld [vmem:[#allocation3 + $0x8] sm:$0xff]
    %v397 = vld [vmem:[#allocation3 + $0x10] sm:$0xff]
    %v398 = vld [vmem:[#allocation3 + $0x18] sm:$0xff]
    %v399 = vld [vmem:[#allocation3 + $0x20] sm:$0xff]
    %v400 = vld [vmem:[#allocation3 + $0x28] sm:$0xff]
    %v401 = vld [vmem:[#allocation3 + $0x30] sm:$0xff]
    %v402 = vld [vmem:[#allocation3 + $0x38] sm:$0xff]
    %v403 = vld [vmem:[#allocation3 + $0x40] sm:$0xff]
    %v404 = vld [vmem:[#allocation3 + $0x48] sm:$0xff]
    %v405 = vld [vmem:[#allocation3 + $0x50] sm:$0xff]
    %v406 = vld [vmem:[#allocation3 + $0x58] sm:$0xff]
    %v407 = vld [vmem:[#allocation3 + $0x60] sm:$0xff]
    %v408 = vld [vmem:[#allocation3 + $0x68] sm:$0xff]
    %v409 = vld [vmem:[#allocation3 + $0x70] sm:$0xff]
    %v410 = vld [vmem:[#allocation3 + $0x78] sm:$0xff]
    %v411 = vld [vmem:[#allocation3 + $0x80] sm:$0xff]
    %v412 = vld [vmem:[#allocation3 + $0x88] sm:$0xff]
    %v413 = vld [vmem:[#allocation3 + $0x90] sm:$0xff]
    %v414 = vld [vmem:[#allocation3 + $0x98] sm:$0xff]
    %v415 = vld [vmem:[#allocation3 + $0xa0] sm:$0xff]
    %v416 = vld [vmem:[#allocation3 + $0xa8] sm:$0xff]
    %v417 = vld [vmem:[#allocation3 + $0xb0] sm:$0xff]
    %v418 = vld [vmem:[#allocation3 + $0xb8] sm:$0xff]
    %v419 = vld [vmem:[#allocation3 + $0xc0] sm:$0xff]
    %v420 = vld [vmem:[#allocation3 + $0xc8] sm:$0xff]
    %v421 = vld [vmem:[#allocation3 + $0xd0] sm:$0xff]
    %v422 = vld [vmem:[#allocation3 + $0xd8] sm:$0xff]
    %v423 = vld [vmem:[#allocation3 + $0xe0] sm:$0xff]
    %v424 = vld [vmem:[#allocation3 + $0xe8] sm:$0xff]
    %v425 = vld [vmem:[#allocation3 + $0xf0] sm:$0xff]
    %v426 = vld [vmem:[#allocation3 + $0xf8] sm:$0xff]
    %v427 = vld [vmem:[#allocation3 + $0x100] sm:$0xff]
    %v428 = vld [vmem:[#allocation3 + $0x108] sm:$0xff]
    %v429 = vld [vmem:[#allocation3 + $0x110] sm:$0xff]
    %v430 = vld [vmem:[#allocation3 + $0x118] sm:$0xff]
    %v431 = vld [vmem:[#allocation3 + $0x120] sm:$0xff]
    %v432 = vld [vmem:[#allocation3 + $0x128] sm:$0xff]
    %v433 = vld [vmem:[#allocation3 + $0x130] sm:$0xff]
    %v434 = vld [vmem:[#allocation3 + $0x138] sm:$0xff]
    %v435 = vld [vmem:[#allocation3 + $0x140] sm:$0xff]
    %v436 = vld [vmem:[#allocation3 + $0x148] sm:$0xff]
    %v437 = vld [vmem:[#allocation3 + $0x150] sm:$0xff]
    %v438 = vld [vmem:[#allocation3 + $0x158] sm:$0xff]
    %v439 = vld [vmem:[#allocation3 + $0x160] sm:$0xff]
    %v440 = vld [vmem:[#allocation3 + $0x168] sm:$0xff]
    %v441 = vld [vmem:[#allocation3 + $0x170] sm:$0xff]
    %v442 = vld [vmem:[#allocation3 + $0x178] sm:$0xff]
    %v443 = vld [vmem:[#allocation3 + $0x180] sm:$0xff]
    %v444 = vld [vmem:[#allocation3 + $0x188] sm:$0xff]
    %v445 = vld [vmem:[#allocation3 + $0x190] sm:$0xff]
    %v446 = vld [vmem:[#allocation3 + $0x198] sm:$0xff]
    %v447 = vld [vmem:[#allocation3 + $0x1a0] sm:$0xff]
    %v448 = vld [vmem:[#allocation3 + $0x1a8] sm:$0xff]
    %v449 = vld [vmem:[#allocation3 + $0x1b0] sm:$0xff]
    %v450 = vld [vmem:[#allocation3 + $0x1b8] sm:$0xff]
    %v451 = vld [vmem:[#allocation3 + $0x1c0] sm:$0xff]
    %v452 = vld [vmem:[#allocation3 + $0x1c8] sm:$0xff]
    %v453 = vld [vmem:[#allocation3 + $0x1d0] sm:$0xff]
    %v454 = vld [vmem:[#allocation3 + $0x1d8] sm:$0xff]
    %v455 = vld [vmem:[#allocation3 + $0x1e0] sm:$0xff]
    %v456 = vld [vmem:[#allocation3 + $0x1e8] sm:$0xff]
    %v457 = vld [vmem:[#allocation3 + $0x1f0] sm:$0xff]
    %v458 = vld [vmem:[#allocation3 + $0x1f8] sm:$0xff]
    %459 = vmatprep.subr.mxu0 %v396
    %460 = vmatpush1.msra.mxu0 %v395
    %461 = vmatprep.subr.mxu0 %v400
    %462 = vmatpush1.msra.mxu0 %v399
    %463 = vmatprep.subr.mxu0 %v404
    %464 = vmatpush1.msra.mxu0 %v403
    %465 = vmatprep.subr.mxu0 %v408
    %466 = vmatpush1.msra.mxu0 %v407
    %467 = vmatprep.subr.mxu0 %v412
    %468 = vmatpush1.msra.mxu0 %v411
    %469 = vmatprep.subr.mxu0 %v416
    %470 = vmatpush1.msra.mxu0 %v415
    %471 = vmatprep.subr.mxu0 %v420
    %472 = vmatpush1.msra.mxu0 %v419
    %473 = vmatprep.subr.mxu0 %v424
    %474 = vmatpush1.msra.mxu0 %v423
    %475 = vmatprep.subr.mxu0 %v428
    %476 = vmatpush1.msra.mxu0 %v427
    %477 = vmatprep.subr.mxu0 %v432
    %478 = vmatpush1.msra.mxu0 %v431
    %479 = vmatprep.subr.mxu0 %v436
    %480 = vmatpush1.msra.mxu0 %v435
    %481 = vmatprep.subr.mxu0 %v440
    %482 = vmatpush1.msra.mxu0 %v439
    %483 = vmatprep.subr.mxu0 %v444
    %484 = vmatpush1.msra.mxu0 %v443
    %485 = vmatprep.subr.mxu0 %v448
    %486 = vmatpush1.msra.mxu0 %v447
    %487 = vmatprep.subr.mxu0 %v452
    %488 = vmatpush1.msra.mxu0 %v451
    %489 = vmatprep.subr.mxu0 %v456
    %490 = vmatpush1.msra.mxu0 %v455
    %491 = vmatprep.subr.mxu0 0.0
    %492 = vmatpush1.msra.mxu0 0.0
    %493 = vmatprep.subr.mxu0 0.0
    %494 = vmatpush1.msra.mxu0 0.0
    %495 = vmatprep.subr.mxu0 0.0
    %496 = vmatpush1.msra.mxu0 0.0
    %497 = vmatprep.subr.mxu0 0.0
    %498 = vmatpush1.msra.mxu0 0.0
    %499 = vmatprep.subr.mxu0 0.0
    %500 = vmatpush1.msra.mxu0 0.0
    %501 = vmatprep.subr.mxu0 0.0
    %502 = vmatpush1.msra.mxu0 0.0
    %503 = vmatprep.subr.mxu0 0.0
    %504 = vmatpush1.msra.mxu0 0.0
    %505 = vmatprep.subr.mxu0 0.0
    %506 = vmatpush1.msra.mxu0 0.0
    %507 = vmatprep.subr.mxu0 0.0
    %508 = vmatpush1.msra.mxu0 0.0
    %509 = vmatprep.subr.mxu0 0.0
    %510 = vmatpush1.msra.mxu0 0.0
    %511 = vmatprep.subr.mxu0 0.0
    %512 = vmatpush1.msra.mxu0 0.0
    %513 = vmatprep.subr.mxu0 0.0
    %514 = vmatpush1.msra.mxu0 0.0
    %515 = vmatprep.subr.mxu0 0.0
    %516 = vmatpush1.msra.mxu0 0.0
    %517 = vmatprep.subr.mxu0 0.0
    %518 = vmatpush1.msra.mxu0 0.0
    %519 = vmatprep.subr.mxu0 0.0
    %520 = vmatpush1.msra.mxu0 0.0
    %521 = vmatprep.subr.mxu0 0.0
    %522 = vmatpush1.msra.mxu0 0.0
    %523 = vmatprep.mubr.f32.mxu0 0.0
    %524 = vmatmul.mubr.f32.gmra.mrb[0].mxu0 0.0
    %v525 = vpop.f32.mrb[0].mxu0
    %v526 = vadd.f32 0.0, %v525
    %v527 = vpop.f32.mrb[0].mxu0
    %v528 = vadd.f32 0.0, %v527
    %529 = vdwg.mxu0
    %530 = vmatprep.subr.mxu0 %v398
    %531 = vmatpush1.msra.mxu0 %v397
    %532 = vmatprep.subr.mxu0 %v402
    %533 = vmatpush1.msra.mxu0 %v401
    %534 = vmatprep.subr.mxu0 %v406
    %535 = vmatpush1.msra.mxu0 %v405
    %536 = vmatprep.subr.mxu0 %v410
    %537 = vmatpush1.msra.mxu0 %v409
    %538 = vmatprep.subr.mxu0 %v414
    %539 = vmatpush1.msra.mxu0 %v413
    %540 = vmatprep.subr.mxu0 %v418
    %541 = vmatpush1.msra.mxu0 %v417
    %542 = vmatprep.subr.mxu0 %v422
    %543 = vmatpush1.msra.mxu0 %v421
    %544 = vmatprep.subr.mxu0 %v426
    %545 = vmatpush1.msra.mxu0 %v425
    %546 = vmatprep.subr.mxu0 %v430
    %547 = vmatpush1.msra.mxu0 %v429
    %548 = vmatprep.subr.mxu0 %v434
    %549 = vmatpush1.msra.mxu0 %v433
    %550 = vmatprep.subr.mxu0 %v438
    %551 = vmatpush1.msra.mxu0 %v437
    %552 = vmatprep.subr.mxu0 %v442
    %553 = vmatpush1.msra.mxu0 %v441
    %554 = vmatprep.subr.mxu0 %v446
    %555 = vmatpush1.msra.mxu0 %v445
    %556 = vmatprep.subr.mxu0 %v450
    %557 = vmatpush1.msra.mxu0 %v449
    %558 = vmatprep.subr.mxu0 %v454
    %559 = vmatpush1.msra.mxu0 %v453
    %560 = vmatprep.subr.mxu0 %v458
    %561 = vmatpush1.msra.mxu0 %v457
    %562 = vmatprep.subr.mxu0 0.0
    %563 = vmatpush1.msra.mxu0 0.0
    %564 = vmatprep.subr.mxu0 0.0
    %565 = vmatpush1.msra.mxu0 0.0
    %566 = vmatprep.subr.mxu0 0.0
    %567 = vmatpush1.msra.mxu0 0.0
    %568 = vmatprep.subr.mxu0 0.0
    %569 = vmatpush1.msra.mxu0 0.0
    %570 = vmatprep.subr.mxu0 0.0
    %571 = vmatpush1.msra.mxu0 0.0
    %572 = vmatprep.subr.mxu0 0.0
    %573 = vmatpush1.msra.mxu0 0.0
    %574 = vmatprep.subr.mxu0 0.0
    %575 = vmatpush1.msra.mxu0 0.0
    %576 = vmatprep.subr.mxu0 0.0
    %577 = vmatpush1.msra.mxu0 0.0
    %578 = vmatprep.subr.mxu0 0.0
    %579 = vmatpush1.msra.mxu0 0.0
    %580 = vmatprep.subr.mxu0 0.0
    %581 = vmatpush1.msra.mxu0 0.0
    %582 = vmatprep.subr.mxu0 0.0
    %583 = vmatpush1.msra.mxu0 0.0
    %584 = vmatprep.subr.mxu0 0.0
    %585 = vmatpush1.msra.mxu0 0.0
    %586 = vmatprep.subr.mxu0 0.0
    %587 = vmatpush1.msra.mxu0 0.0
    %588 = vmatprep.subr.mxu0 0.0
    %589 = vmatpush1.msra.mxu0 0.0
    %590 = vmatprep.subr.mxu0 0.0
    %591 = vmatpush1.msra.mxu0 0.0
    %592 = vmatprep.subr.mxu0 0.0
    %593 = vmatpush1.msra.mxu0 0.0
    %594 = vmatprep.mubr.f32.mxu0 0.0
    %595 = vmatmul.mubr.f32.gmra.mrb[0].mxu0 0.0
    %v596 = vpop.f32.mrb[0].mxu0
    %v597 = vadd.f32 0.0, %v596
    %v598 = vpop.f32.mrb[0].mxu0
    %v599 = vadd.f32 0.0, %v598
    %600 = vdwg.mxu0
    %v601 = vadd.f32 %v391, %v526
    %v602 = vadd.f32 %v392, %v528
    %v603 = vadd.f32 %v393, %v597
    %v604 = vadd.f32 %v394, %v599
    %v605 = vxor.u32 %v601, 2147483648
    %v606 = vxor.u32 %v602, 2147483648
    %v607 = vxor.u32 %v603, 2147483648
    %v608 = vmul.f32 %v605, 1.442695
    %v609 = vpow.pop %v608
    %v610 = vmul.f32 %v606, 1.442695
    %v611 = vpow.pop %v610
    %v612 = vmul.f32 %v607, 1.442695
    %v613 = vpow.pop %v612
    %v614 = vadd.f32 %v609, 1.0
    %v615 = vadd.f32 %v611, 1.0
    %v616 = vadd.f32 %v613, 1.0
    %v617 = vrcp.pop %v614
    %v618 = vmul.f32 1.0, %v617
    %v619 = vrcp.pop %v615
    %v620 = vmul.f32 1.0, %v619
    %v621 = vrcp.pop %v616
    %v622 = vmul.f32 1.0, %v621
    %v623 = vtanh.pop %v604
    %v624 = vmul.f32 %v620, 0.0
    %v625 = vmul.f32 %v618, %v623
    %v626 = vadd.f32 %v624, %v625
    %v627 = vtanh.pop %v626
    %v628 = vmul.f32 %v622, %v627
    %v629 = vld [vmem:[#allocation6] sm:$0xff]
    %v630 = vld [vmem:[#allocation6 + $0x8] sm:$0xff]
    %v631 = vld [vmem:[#allocation6 + $0x10] sm:$0xff]
    %v632 = vld [vmem:[#allocation6 + $0x18] sm:$0xff]
    %v633 = vld [vmem:[#allocation6 + $0x20] sm:$0xff]
    %v634 = vld [vmem:[#allocation6 + $0x28] sm:$0xff]
    %v635 = vld [vmem:[#allocation6 + $0x30] sm:$0xff]
    %v636 = vld [vmem:[#allocation6 + $0x38] sm:$0xff]
    %v637 = vld [vmem:[#allocation6 + $0x40] sm:$0xff]
    %v638 = vld [vmem:[#allocation6 + $0x48] sm:$0xff]
    %v639 = vld [vmem:[#allocation6 + $0x50] sm:$0xff]
    %v640 = vld [vmem:[#allocation6 + $0x58] sm:$0xff]
    %v641 = vld [vmem:[#allocation6 + $0x60] sm:$0xff]
    %v642 = vld [vmem:[#allocation6 + $0x68] sm:$0xff]
    %v643 = vld [vmem:[#allocation6 + $0x70] sm:$0xff]
    %v644 = vld [vmem:[#allocation6 + $0x78] sm:$0xff]
    %v645 = vld [vmem:[#allocation6 + $0x80] sm:$0xff]
    %v646 = vld [vmem:[#allocation6 + $0x88] sm:$0xff]
    %v647 = vld [vmem:[#allocation6 + $0x90] sm:$0xff]
    %v648 = vld [vmem:[#allocation6 + $0x98] sm:$0xff]
    %v649 = vld [vmem:[#allocation6 + $0xa0] sm:$0xff]
    %v650 = vld [vmem:[#allocation6 + $0xa8] sm:$0xff]
    %v651 = vld [vmem:[#allocation6 + $0xb0] sm:$0xff]
    %v652 = vld [vmem:[#allocation6 + $0xb8] sm:$0xff]
    %v653 = vld [vmem:[#allocation6 + $0xc0] sm:$0xff]
    %v654 = vld [vmem:[#allocation6 + $0xc8] sm:$0xff]
    %v655 = vld [vmem:[#allocation6 + $0xd0] sm:$0xff]
    %v656 = vld [vmem:[#allocation6 + $0xd8] sm:$0xff]
    %v657 = vld [vmem:[#allocation6 + $0xe0] sm:$0xff]
    %v658 = vld [vmem:[#allocation6 + $0xe8] sm:$0xff]
    %v659 = vld [vmem:[#allocation6 + $0xf0] sm:$0xff]
    %v660 = vld [vmem:[#allocation6 + $0xf8] sm:$0xff]
    %v661 = vld [vmem:[#allocation6 + $0x100] sm:$0xff]
    %v662 = vld [vmem:[#allocation6 + $0x108] sm:$0xff]
    %v663 = vld [vmem:[#allocation6 + $0x110] sm:$0xff]
    %v664 = vld [vmem:[#allocation6 + $0x118] sm:$0xff]
    %v665 = vld [vmem:[#allocation6 + $0x120] sm:$0xff]
    %v666 = vld [vmem:[#allocation6 + $0x128] sm:$0xff]
    %v667 = vld [vmem:[#allocation6 + $0x130] sm:$0xff]
    %v668 = vld [vmem:[#allocation6 + $0x138] sm:$0xff]
    %v669 = vld [vmem:[#allocation6 + $0x140] sm:$0xff]
    %v670 = vld [vmem:[#allocation6 + $0x148] sm:$0xff]
    %v671 = vld [vmem:[#allocation6 + $0x150] sm:$0xff]
    %v672 = vld [vmem:[#allocation6 + $0x158] sm:$0xff]
    %v673 = vld [vmem:[#allocation6 + $0x160] sm:$0xff]
    %v674 = vld [vmem:[#allocation6 + $0x168] sm:$0xff]
    %v675 = vld [vmem:[#allocation6 + $0x170] sm:$0xff]
    %v676 = vld [vmem:[#allocation6 + $0x178] sm:$0xff]
    %v677 = vld [vmem:[#allocation6 + $0x180] sm:$0xff]
    %v678 = vld [vmem:[#allocation6 + $0x188] sm:$0xff]
    %v679 = vld [vmem:[#allocation6 + $0x190] sm:$0xff]
    %v680 = vld [vmem:[#allocation6 + $0x198] sm:$0xff]
    %v681 = vld [vmem:[#allocation6 + $0x1a0] sm:$0xff]
    %v682 = vld [vmem:[#allocation6 + $0x1a8] sm:$0xff]
    %v683 = vld [vmem:[#allocation6 + $0x1b0] sm:$0xff]
    %v684 = vld [vmem:[#allocation6 + $0x1b8] sm:$0xff]
    %v685 = vld [vmem:[#allocation6 + $0x1c0] sm:$0xff]
    %v686 = vld [vmem:[#allocation6 + $0x1c8] sm:$0xff]
    %v687 = vld [vmem:[#allocation6 + $0x1d0] sm:$0xff]
    %v688 = vld [vmem:[#allocation6 + $0x1d8] sm:$0xff]
    %v689 = vld [vmem:[#allocation6 + $0x1e0] sm:$0xff]
    %v690 = vld [vmem:[#allocation6 + $0x1e8] sm:$0xff]
    %v691 = vld [vmem:[#allocation6 + $0x1f0] sm:$0xff]
    %v692 = vld [vmem:[#allocation6 + $0x1f8] sm:$0xff]
    %v693 = vld [vmem:[#allocation6 + $0x200] sm:$0xff]
    %v694 = vld [vmem:[#allocation6 + $0x208] sm:$0xff]
    %v695 = vld [vmem:[#allocation6 + $0x210] sm:$0xff]
    %v696 = vld [vmem:[#allocation6 + $0x218] sm:$0xff]
    %v697 = vld [vmem:[#allocation6 + $0x220] sm:$0xff]
    %v698 = vld [vmem:[#allocation6 + $0x228] sm:$0xff]
    %v699 = vld [vmem:[#allocation6 + $0x230] sm:$0xff]
    %v700 = vld [vmem:[#allocation6 + $0x238] sm:$0xff]
    %v701 = vld [vmem:[#allocation6 + $0x240] sm:$0xff]
    %v702 = vld [vmem:[#allocation6 + $0x248] sm:$0xff]
    %v703 = vld [vmem:[#allocation6 + $0x250] sm:$0xff]
    %v704 = vld [vmem:[#allocation6 + $0x258] sm:$0xff]
    %v705 = vld [vmem:[#allocation6 + $0x260] sm:$0xff]
    %v706 = vld [vmem:[#allocation6 + $0x268] sm:$0xff]
    %v707 = vld [vmem:[#allocation6 + $0x270] sm:$0xff]
    %v708 = vld [vmem:[#allocation6 + $0x278] sm:$0xff]
    %v709 = vld [vmem:[#allocation6 + $0x280] sm:$0xff]
    %v710 = vld [vmem:[#allocation6 + $0x288] sm:$0xff]
    %v711 = vld [vmem:[#allocation6 + $0x290] sm:$0xff]
    %v712 = vld [vmem:[#allocation6 + $0x298] sm:$0xff]
    %v713 = vld [vmem:[#allocation6 + $0x2a0] sm:$0xff]
    %v714 = vld [vmem:[#allocation6 + $0x2a8] sm:$0xff]
    %v715 = vld [vmem:[#allocation6 + $0x2b0] sm:$0xff]
    %v716 = vld [vmem:[#allocation6 + $0x2b8] sm:$0xff]
    %v717 = vld [vmem:[#allocation6 + $0x2c0] sm:$0xff]
    %v718 = vld [vmem:[#allocation6 + $0x2c8] sm:$0xff]
    %v719 = vld [vmem:[#allocation6 + $0x2d0] sm:$0xff]
    %v720 = vld [vmem:[#allocation6 + $0x2d8] sm:$0xff]
    %v721 = vld [vmem:[#allocation6 + $0x2e0] sm:$0xff]
    %v722 = vld [vmem:[#allocation6 + $0x2e8] sm:$0xff]
    %v723 = vld [vmem:[#allocation6 + $0x2f0] sm:$0xff]
    %v724 = vld [vmem:[#allocation6 + $0x2f8] sm:$0xff]
    %v725 = vld [vmem:[#allocation6 + $0x300] sm:$0xff]
    %v726 = vld [vmem:[#allocation6 + $0x308] sm:$0xff]
    %v727 = vld [vmem:[#allocation6 + $0x310] sm:$0xff]
    %v728 = vld [vmem:[#allocation6 + $0x318] sm:$0xff]
    %v729 = vld [vmem:[#allocation6 + $0x320] sm:$0xff]
    %v730 = vld [vmem:[#allocation6 + $0x328] sm:$0xff]
    %v731 = vld [vmem:[#allocation6 + $0x330] sm:$0xff]
    %v732 = vld [vmem:[#allocation6 + $0x338] sm:$0xff]
    %v733 = vld [vmem:[#allocation6 + $0x340] sm:$0xff]
    %v734 = vld [vmem:[#allocation6 + $0x348] sm:$0xff]
    %v735 = vld [vmem:[#allocation6 + $0x350] sm:$0xff]
    %v736 = vld [vmem:[#allocation6 + $0x358] sm:$0xff]
    %v737 = vld [vmem:[#allocation6 + $0x360] sm:$0xff]
    %v738 = vld [vmem:[#allocation6 + $0x368] sm:$0xff]
    %v739 = vld [vmem:[#allocation6 + $0x370] sm:$0xff]
    %v740 = vld [vmem:[#allocation6 + $0x378] sm:$0xff]
    %v741 = vld [vmem:[#allocation6 + $0x380] sm:$0xff]
    %v742 = vld [vmem:[#allocation6 + $0x388] sm:$0xff]
    %v743 = vld [vmem:[#allocation6 + $0x390] sm:$0xff]
    %v744 = vld [vmem:[#allocation6 + $0x398] sm:$0xff]
    %v745 = vld [vmem:[#allocation6 + $0x3a0] sm:$0xff]
    %v746 = vld [vmem:[#allocation6 + $0x3a8] sm:$0xff]
    %v747 = vld [vmem:[#allocation6 + $0x3b0] sm:$0xff]
    %v748 = vld [vmem:[#allocation6 + $0x3b8] sm:$0xff]
    %v749 = vld [vmem:[#allocation6 + $0x3c0] sm:$0xff]
    %v750 = vld [vmem:[#allocation6 + $0x3c8] sm:$0xff]
    %v751 = vld [vmem:[#allocation6 + $0x3d0] sm:$0xff]
    %v752 = vld [vmem:[#allocation6 + $0x3d8] sm:$0xff]
    %v753 = vld [vmem:[#allocation6 + $0x3e0] sm:$0xff]
    %v754 = vld [vmem:[#allocation6 + $0x3e8] sm:$0xff]
    %v755 = vld [vmem:[#allocation6 + $0x3f0] sm:$0xff]
    %v756 = vld [vmem:[#allocation6 + $0x3f8] sm:$0xff]
    %v757 = vld [vmem:[%s5] sm:$0xf]
    %v759 = vlaneseq
    %v760 = vshrl.u32 %v759, 7
    %v761 = vsub.s32 0, %v760
    %v762 = vrot.slane %v757, %v761
    %v763 = vlaneseq
    %v764 = vshrl.u32 %v763, 7
    %v765 = vsub.s32 1, %v764
    %v766 = vrot.slane %v757, %v765
    %v767 = vlaneseq
    %v768 = vshrl.u32 %v767, 7
    %v769 = vsub.s32 2, %v768
    %v770 = vrot.slane %v757, %v769
    %v771 = vlaneseq
    %v772 = vshrl.u32 %v771, 7
    %v773 = vsub.s32 3, %v772
    %v774 = vrot.slane %v757, %v773
    %779 = vmatprep.subr.mxu0 %v630
    %780 = vmatpush1.msra.mxu0 %v629
    %781 = vmatprep.subr.mxu0 %v634
    %782 = vmatpush1.msra.mxu0 %v633
    %783 = vmatprep.subr.mxu0 %v638
    %784 = vmatpush1.msra.mxu0 %v637
    %785 = vmatprep.subr.mxu0 %v642
    %786 = vmatpush1.msra.mxu0 %v641
    %787 = vmatprep.subr.mxu0 %v646
    %788 = vmatpush1.msra.mxu0 %v645
    %789 = vmatprep.subr.mxu0 %v650
    %790 = vmatpush1.msra.mxu0 %v649
    %791 = vmatprep.subr.mxu0 %v654
    %792 = vmatpush1.msra.mxu0 %v653
    %793 = vmatprep.subr.mxu0 %v658
    %794 = vmatpush1.msra.mxu0 %v657
    %795 = vmatprep.subr.mxu0 %v662
    %796 = vmatpush1.msra.mxu0 %v661
    %797 = vmatprep.subr.mxu0 %v666
    %798 = vmatpush1.msra.mxu0 %v665
    %799 = vmatprep.subr.mxu0 %v670
    %800 = vmatpush1.msra.mxu0 %v669
    %801 = vmatprep.subr.mxu0 %v674
    %802 = vmatpush1.msra.mxu0 %v673
    %803 = vmatprep.subr.mxu0 %v678
    %804 = vmatpush1.msra.mxu0 %v677
    %805 = vmatprep.subr.mxu0 %v682
    %806 = vmatpush1.msra.mxu0 %v681
    %807 = vmatprep.subr.mxu0 %v686
    %808 = vmatpush1.msra.mxu0 %v685
    %809 = vmatprep.subr.mxu0 %v690
    %810 = vmatpush1.msra.mxu0 %v689
    %811 = vmatprep.subr.mxu0 %v694
    %812 = vmatpush1.msra.mxu0 %v693
    %813 = vmatprep.subr.mxu0 %v698
    %814 = vmatpush1.msra.mxu0 %v697
    %815 = vmatprep.subr.mxu0 %v702
    %816 = vmatpush1.msra.mxu0 %v701
    %817 = vmatprep.subr.mxu0 %v706
    %818 = vmatpush1.msra.mxu0 %v705
    %819 = vmatprep.subr.mxu0 %v710
    %820 = vmatpush1.msra.mxu0 %v709
    %821 = vmatprep.subr.mxu0 %v714
    %822 = vmatpush1.msra.mxu0 %v713
    %823 = vmatprep.subr.mxu0 %v718
    %824 = vmatpush1.msra.mxu0 %v717
    %825 = vmatprep.subr.mxu0 %v722
    %826 = vmatpush1.msra.mxu0 %v721
    %827 = vmatprep.subr.mxu0 %v726
    %828 = vmatpush1.msra.mxu0 %v725
    %829 = vmatprep.subr.mxu0 %v730
    %830 = vmatpush1.msra.mxu0 %v729
    %831 = vmatprep.subr.mxu0 %v734
    %832 = vmatpush1.msra.mxu0 %v733
    %833 = vmatprep.subr.mxu0 %v738
    %834 = vmatpush1.msra.mxu0 %v737
    %835 = vmatprep.subr.mxu0 %v742
    %836 = vmatpush1.msra.mxu0 %v741
    %837 = vmatprep.subr.mxu0 %v746
    %838 = vmatpush1.msra.mxu0 %v745
    %839 = vmatprep.subr.mxu0 %v750
    %840 = vmatpush1.msra.mxu0 %v749
    %841 = vmatprep.subr.mxu0 %v754
    %842 = vmatpush1.msra.mxu0 %v753
    %843 = vmatprep.mubr.f32.mxu0 0.0
    %844 = vmatmul.mubr.f32.gmra.mrb[0].mxu0 %v628
    %v845 = vpop.f32.mrb[0].mxu0
    %v846 = vadd.f32 %v762, %v845
    %v847 = vpop.f32.mrb[0].mxu0
    %v848 = vadd.f32 %v766, %v847
    %849 = vdwg.mxu0
    %850 = vmatprep.subr.mxu0 %v632
    %851 = vmatpush1.msra.mxu0 %v631
    %852 = vmatprep.subr.mxu0 %v636
    %853 = vmatpush1.msra.mxu0 %v635
    %854 = vmatprep.subr.mxu0 %v640
    %855 = vmatpush1.msra.mxu0 %v639
    %856 = vmatprep.subr.mxu0 %v644
    %857 = vmatpush1.msra.mxu0 %v643
    %858 = vmatprep.subr.mxu0 %v648
    %859 = vmatpush1.msra.mxu0 %v647
    %860 = vmatprep.subr.mxu0 %v652
    %861 = vmatpush1.msra.mxu0 %v651
    %862 = vmatprep.subr.mxu0 %v656
    %863 = vmatpush1.msra.mxu0 %v655
    %864 = vmatprep.subr.mxu0 %v660
    %865 = vmatpush1.msra.mxu0 %v659
    %866 = vmatprep.subr.mxu0 %v664
    %867 = vmatpush1.msra.mxu0 %v663
    %868 = vmatprep.subr.mxu0 %v668
    %869 = vmatpush1.msra.mxu0 %v667
    %870 = vmatprep.subr.mxu0 %v672
    %871 = vmatpush1.msra.mxu0 %v671
    %872 = vmatprep.subr.mxu0 %v676
    %873 = vmatpush1.msra.mxu0 %v675
    %874 = vmatprep.subr.mxu0 %v680
    %875 = vmatpush1.msra.mxu0 %v679
    %876 = vmatprep.subr.mxu0 %v684
    %877 = vmatpush1.msra.mxu0 %v683
    %878 = vmatprep.subr.mxu0 %v688
    %879 = vmatpush1.msra.mxu0 %v687
    %880 = vmatprep.subr.mxu0 %v692
    %881 = vmatpush1.msra.mxu0 %v691
    %882 = vmatprep.subr.mxu0 %v696
    %883 = vmatpush1.msra.mxu0 %v695
    %884 = vmatprep.subr.mxu0 %v700
    %885 = vmatpush1.msra.mxu0 %v699
    %886 = vmatprep.subr.mxu0 %v704
    %887 = vmatpush1.msra.mxu0 %v703
    %888 = vmatprep.subr.mxu0 %v708
    %889 = vmatpush1.msra.mxu0 %v707
    %890 = vmatprep.subr.mxu0 %v712
    %891 = vmatpush1.msra.mxu0 %v711
    %892 = vmatprep.subr.mxu0 %v716
    %893 = vmatpush1.msra.mxu0 %v715
    %894 = vmatprep.subr.mxu0 %v720
    %895 = vmatpush1.msra.mxu0 %v719
    %896 = vmatprep.subr.mxu0 %v724
    %897 = vmatpush1.msra.mxu0 %v723
    %898 = vmatprep.subr.mxu0 %v728
    %899 = vmatpush1.msra.mxu0 %v727
    %900 = vmatprep.subr.mxu0 %v732
    %901 = vmatpush1.msra.mxu0 %v731
    %902 = vmatprep.subr.mxu0 %v736
    %903 = vmatpush1.msra.mxu0 %v735
    %904 = vmatprep.subr.mxu0 %v740
    %905 = vmatpush1.msra.mxu0 %v739
    %906 = vmatprep.subr.mxu0 %v744
    %907 = vmatpush1.msra.mxu0 %v743
    %908 = vmatprep.subr.mxu0 %v748
    %909 = vmatpush1.msra.mxu0 %v747
    %910 = vmatprep.subr.mxu0 %v752
    %911 = vmatpush1.msra.mxu0 %v751
    %912 = vmatprep.subr.mxu0 %v756
    %913 = vmatpush1.msra.mxu0 %v755
    %914 = vmatprep.mubr.f32.mxu0 0.0
    %915 = vmatmul.mubr.f32.gmra.mrb[0].mxu0 %v628
    %v916 = vpop.f32.mrb[0].mxu0
    %v917 = vadd.f32 %v770, %v916
    %v918 = vpop.f32.mrb[0].mxu0
    %v919 = vadd.f32 %v774, %v918
    %920 = vdwg.mxu0
    %v921 = vxor.u32 %v846, 2147483648
    %v922 = vxor.u32 %v848, 2147483648
    %v923 = vxor.u32 %v917, 2147483648
    %v924 = vmul.f32 %v921, 1.442695
    %v925 = vpow.pop %v924
    %v926 = vmul.f32 %v922, 1.442695
    %v927 = vpow.pop %v926
    %v928 = vmul.f32 %v923, 1.442695
    %v929 = vpow.pop %v928
    %v930 = vadd.f32 %v925, 1.0
    %v931 = vadd.f32 %v927, 1.0
    %v932 = vadd.f32 %v929, 1.0
    %v933 = vrcp.pop %v930
    %v934 = vmul.f32 1.0, %v933
    %v935 = vrcp.pop %v931
    %v936 = vmul.f32 1.0, %v935
    %v937 = vrcp.pop %v932
    %v938 = vmul.f32 1.0, %v937
    %v939 = vtanh.pop %v919
    %v940 = vmul.f32 %v936, 0.0
    %v941 = vmul.f32 %v934, %v939
    %v942 = vadd.f32 %v940, %v941
    %v943 = vtanh.pop %v942
    %v944 = vmul.f32 %v938, %v943
    %v945 = vstv %s387
    %v946 = vmul.f32 %v945, %v944
    %v947 = vadd.f32 %v946, 0.0
    %s948 = sld [smem:[#allocation8 + $0x1]]
    %s949 = smul.u32 1, 4
    %s950 = smul.addr %s949, 8
    %s951 = scalar_lea.vmem [#allocation2], %s950
    %v952 = vld [vmem:[%s951] sm:$0xff]
    %v953 = vld [vmem:[%s951 + $0x8] sm:$0xff]
    %v954 = vld [vmem:[%s951 + $0x10] sm:$0xff]
    %v955 = vld [vmem:[%s951 + $0x18] sm:$0xff]
    %956 = vmatprep.subr.mxu0 %v396
    %957 = vmatpush1.msra.mxu0 %v395
    %958 = vmatprep.subr.mxu0 %v400
    %959 = vmatpush1.msra.mxu0 %v399
    %960 = vmatprep.subr.mxu0 %v404
    %961 = vmatpush1.msra.mxu0 %v403
    %962 = vmatprep.subr.mxu0 %v408
    %963 = vmatpush1.msra.mxu0 %v407
    %964 = vmatprep.subr.mxu0 %v412
    %965 = vmatpush1.msra.mxu0 %v411
    %966 = vmatprep.subr.mxu0 %v416
    %967 = vmatpush1.msra.mxu0 %v415
    %968 = vmatprep.subr.mxu0 %v420
    %969 = vmatpush1.msra.mxu0 %v419
    %970 = vmatprep.subr.mxu0 %v424
    %971 = vmatpush1.msra.mxu0 %v423
    %972 = vmatprep.subr.mxu0 %v428
    %973 = vmatpush1.msra.mxu0 %v427
    %974 = vmatprep.subr.mxu0 %v432
    %975 = vmatpush1.msra.mxu0 %v431
    %976 = vmatprep.subr.mxu0 %v436
    %977 = vmatpush1.msra.mxu0 %v435
    %978 = vmatprep.subr.mxu0 %v440
    %979 = vmatpush1.msra.mxu0 %v439
    %980 = vmatprep.subr.mxu0 %v444
    %981 = vmatpush1.msra.mxu0 %v443
    %982 = vmatprep.subr.mxu0 %v448
    %983 = vmatpush1.msra.mxu0 %v447
    %984 = vmatprep.subr.mxu0 %v452
    %985 = vmatpush1.msra.mxu0 %v451
    %986 = vmatprep.subr.mxu0 %v456
    %987 = vmatpush1.msra.mxu0 %v455
    %988 = vmatprep.subr.mxu0 0.0
    %989 = vmatpush1.msra.mxu0 0.0
    %990 = vmatprep.subr.mxu0 0.0
    %991 = vmatpush1.msra.mxu0 0.0
    %992 = vmatprep.subr.mxu0 0.0
    %993 = vmatpush1.msra.mxu0 0.0
    %994 = vmatprep.subr.mxu0 0.0
    %995 = vmatpush1.msra.mxu0 0.0
    %996 = vmatprep.subr.mxu0 0.0
    %997 = vmatpush1.msra.mxu0 0.0
    %998 = vmatprep.subr.mxu0 0.0
    %999 = vmatpush1.msra.mxu0 0.0
    %1000 = vmatprep.subr.mxu0 0.0
    %1001 = vmatpush1.msra.mxu0 0.0
    %1002 = vmatprep.subr.mxu0 0.0
    %1003 = vmatpush1.msra.mxu0 0.0
    %1004 = vmatprep.subr.mxu0 0.0
    %1005 = vmatpush1.msra.mxu0 0.0
    %1006 = vmatprep.subr.mxu0 0.0
    %1007 = vmatpush1.msra.mxu0 0.0
    %1008 = vmatprep.subr.mxu0 0.0
    %1009 = vmatpush1.msra.mxu0 0.0
    %1010 = vmatprep.subr.mxu0 0.0
    %1011 = vmatpush1.msra.mxu0 0.0
    %1012 = vmatprep.subr.mxu0 0.0
    %1013 = vmatpush1.msra.mxu0 0.0
    %1014 = vmatprep.subr.mxu0 0.0
    %1015 = vmatpush1.msra.mxu0 0.0
    %1016 = vmatprep.subr.mxu0 0.0
    %1017 = vmatpush1.msra.mxu0 0.0
    %1018 = vmatprep.subr.mxu0 0.0
    %1019 = vmatpush1.msra.mxu0 0.0
    %1020 = vmatprep.mubr.f32.mxu0 0.0
    %1021 = vmatmul.mubr.f32.gmra.mrb[0].mxu0 %v628
    %v1022 = vpop.f32.mrb[0].mxu0
    %v1023 = vadd.f32 0.0, %v1022
    %v1024 = vpop.f32.mrb[0].mxu0
    %v1025 = vadd.f32 0.0, %v1024
    %1026 = vdwg.mxu0
    %1027 = vmatprep.subr.mxu0 %v398
    %1028 = vmatpush1.msra.mxu0 %v397
    %1029 = vmatprep.subr.mxu0 %v402
    %1030 = vmatpush1.msra.mxu0 %v401
    %1031 = vmatprep.subr.mxu0 %v406
    %1032 = vmatpush1.msra.mxu0 %v405
    %1033 = vmatprep.subr.mxu0 %v410
    %1034 = vmatpush1.msra.mxu0 %v409
    %1035 = vmatprep.subr.mxu0 %v414
    %1036 = vmatpush1.msra.mxu0 %v413
    %1037 = vmatprep.subr.mxu0 %v418
    %1038 = vmatpush1.msra.mxu0 %v417
    %1039 = vmatprep.subr.mxu0 %v422
    %1040 = vmatpush1.msra.mxu0 %v421
    %1041 = vmatprep.subr.mxu0 %v426
    %1042 = vmatpush1.msra.mxu0 %v425
    %1043 = vmatprep.subr.mxu0 %v430
    %1044 = vmatpush1.msra.mxu0 %v429
    %1045 = vmatprep.subr.mxu0 %v434
    %1046 = vmatpush1.msra.mxu0 %v433
    %1047 = vmatprep.subr.mxu0 %v438
    %1048 = vmatpush1.msra.mxu0 %v437
    %1049 = vmatprep.subr.mxu0 %v442
    %1050 = vmatpush1.msra.mxu0 %v441
    %1051 = vmatprep.subr.mxu0 %v446
    %1052 = vmatpush1.msra.mxu0 %v445
    %1053 = vmatprep.subr.mxu0 %v450
    %1054 = vmatpush1.msra.mxu0 %v449
    %1055 = vmatprep.subr.mxu0 %v454
    %1056 = vmatpush1.msra.mxu0 %v453
    %1057 = vmatprep.subr.mxu0 %v458
    %1058 = vmatpush1.msra.mxu0 %v457
    %1059 = vmatprep.subr.mxu0 0.0
    %1060 = vmatpush1.msra.mxu0 0.0
    %1061 = vmatprep.subr.mxu0 0.0
    %1062 = vmatpush1.msra.mxu0 0.0
    %1063 = vmatprep.subr.mxu0 0.0
    %1064 = vmatpush1.msra.mxu0 0.0
    %1065 = vmatprep.subr.mxu0 0.0
    %1066 = vmatpush1.msra.mxu0 0.0
    %1067 = vmatprep.subr.mxu0 0.0
    %1068 = vmatpush1.msra.mxu0 0.0
    %1069 = vmatprep.subr.mxu0 0.0
    %1070 = vmatpush1.msra.mxu0 0.0
    %1071 = vmatprep.subr.mxu0 0.0
    %1072 = vmatpush1.msra.mxu0 0.0
    %1073 = vmatprep.subr.mxu0 0.0
    %1074 = vmatpush1.msra.mxu0 0.0
    %1075 = vmatprep.subr.mxu0 0.0
    %1076 = vmatpush1.msra.mxu0 0.0
    %1077 = vmatprep.subr.mxu0 0.0
    %1078 = vmatpush1.msra.mxu0 0.0
    %1079 = vmatprep.subr.mxu0 0.0
    %1080 = vmatpush1.msra.mxu0 0.0
    %1081 = vmatprep.subr.mxu0 0.0
    %1082 = vmatpush1.msra.mxu0 0.0
    %1083 = vmatprep.subr.mxu0 0.0
    %1084 = vmatpush1.msra.mxu0 0.0
    %1085 = vmatprep.subr.mxu0 0.0
    %1086 = vmatpush1.msra.mxu0 0.0
    %1087 = vmatprep.subr.mxu0 0.0
    %1088 = vmatpush1.msra.mxu0 0.0
    %1089 = vmatprep.subr.mxu0 0.0
    %1090 = vmatpush1.msra.mxu0 0.0
    %1091 = vmatprep.mubr.f32.mxu0 0.0
    %1092 = vmatmul.mubr.f32.gmra.mrb[0].mxu0 %v628
    %v1093 = vpop.f32.mrb[0].mxu0
    %v1094 = vadd.f32 0.0, %v1093
    %v1095 = vpop.f32.mrb[0].mxu0
    %v1096 = vadd.f32 0.0, %v1095
    %1097 = vdwg.mxu0
    %v1098 = vadd.f32 %v952, %v1023
    %v1099 = vadd.f32 %v953, %v1025
    %v1100 = vadd.f32 %v954, %v1094
    %v1101 = vadd.f32 %v955, %v1096
    %v1102 = vxor.u32 %v1098, 2147483648
    %v1103 = vxor.u32 %v1099, 2147483648
    %v1104 = vxor.u32 %v1100, 2147483648
    %v1105 = vmul.f32 %v1102, 1.442695
    %v1106 = vpow.pop %v1105
    %v1107 = vmul.f32 %v1103, 1.442695
    %v1108 = vpow.pop %v1107
    %v1109 = vmul.f32 %v1104, 1.442695
    %v1110 = vpow.pop %v1109
    %v1111 = vadd.f32 %v1106, 1.0
    %v1112 = vadd.f32 %v1108, 1.0
    %v1113 = vadd.f32 %v1110, 1.0
    %v1114 = vrcp.pop %v1111
    %v1115 = vmul.f32 1.0, %v1114
    %v1116 = vrcp.pop %v1112
    %v1117 = vmul.f32 1.0, %v1116
    %v1118 = vrcp.pop %v1113
    %v1119 = vmul.f32 1.0, %v1118
    %v1120 = vtanh.pop %v1101
    %v1121 = vmul.f32 %v1117, %v626
    %v1122 = vmul.f32 %v1115, %v1120
    %v1123 = vadd.f32 %v1121, %v1122
    %v1124 = vtanh.pop %v1123
    %v1125 = vmul.f32 %v1119, %v1124
    %1126 = vmatprep.subr.mxu0 %v630
    %1127 = vmatpush1.msra.mxu0 %v629
    %1128 = vmatprep.subr.mxu0 %v634
    %1129 = vmatpush1.msra.mxu0 %v633
    %1130 = vmatprep.subr.mxu0 %v638
    %1131 = vmatpush1.msra.mxu0 %v637
    %1132 = vmatprep.subr.mxu0 %v642
    %1133 = vmatpush1.msra.mxu0 %v641
    %1134 = vmatprep.subr.mxu0 %v646
    %1135 = vmatpush1.msra.mxu0 %v645
    %1136 = vmatprep.subr.mxu0 %v650
    %1137 = vmatpush1.msra.mxu0 %v649
    %1138 = vmatprep.subr.mxu0 %v654
    %1139 = vmatpush1.msra.mxu0 %v653
    %1140 = vmatprep.subr.mxu0 %v658
    %1141 = vmatpush1.msra.mxu0 %v657
    %1142 = vmatprep.subr.mxu0 %v662
    %1143 = vmatpush1.msra.mxu0 %v661
    %1144 = vmatprep.subr.mxu0 %v666
    %1145 = vmatpush1.msra.mxu0 %v665
    %1146 = vmatprep.subr.mxu0 %v670
    %1147 = vmatpush1.msra.mxu0 %v669
    %1148 = vmatprep.subr.mxu0 %v674
    %1149 = vmatpush1.msra.mxu0 %v673
    %1150 = vmatprep.subr.mxu0 %v678
    %1151 = vmatpush1.msra.mxu0 %v677
    %1152 = vmatprep.subr.mxu0 %v682
    %1153 = vmatpush1.msra.mxu0 %v681
    %1154 = vmatprep.subr.mxu0 %v686
    %1155 = vmatpush1.msra.mxu0 %v685
    %1156 = vmatprep.subr.mxu0 %v690
    %1157 = vmatpush1.msra.mxu0 %v689
    %1158 = vmatprep.subr.mxu0 %v694
    %1159 = vmatpush1.msra.mxu0 %v693
    %1160 = vmatprep.subr.mxu0 %v698
    %1161 = vmatpush1.msra.mxu0 %v697
    %1162 = vmatprep.subr.mxu0 %v702
    %1163 = vmatpush1.msra.mxu0 %v701
    %1164 = vmatprep.subr.mxu0 %v706
    %1165 = vmatpush1.msra.mxu0 %v705
    %1166 = vmatprep.subr.mxu0 %v710
    %1167 = vmatpush1.msra.mxu0 %v709
    %1168 = vmatprep.subr.mxu0 %v714
    %1169 = vmatpush1.msra.mxu0 %v713
    %1170 = vmatprep.subr.mxu0 %v718
    %1171 = vmatpush1.msra.mxu0 %v717
    %1172 = vmatprep.subr.mxu0 %v722
    %1173 = vmatpush1.msra.mxu0 %v721
    %1174 = vmatprep.subr.mxu0 %v726
    %1175 = vmatpush1.msra.mxu0 %v725
    %1176 = vmatprep.subr.mxu0 %v730
    %1177 = vmatpush1.msra.mxu0 %v729
    %1178 = vmatprep.subr.mxu0 %v734
    %1179 = vmatpush1.msra.mxu0 %v733
    %1180 = vmatprep.subr.mxu0 %v738
    %1181 = vmatpush1.msra.mxu0 %v737
    %1182 = vmatprep.subr.mxu0 %v742
    %1183 = vmatpush1.msra.mxu0 %v741
    %1184 = vmatprep.subr.mxu0 %v746
    %1185 = vmatpush1.msra.mxu0 %v745
    %1186 = vmatprep.subr.mxu0 %v750
    %1187 = vmatpush1.msra.mxu0 %v749
    %1188 = vmatprep.subr.mxu0 %v754
    %1189 = vmatpush1.msra.mxu0 %v753
    %1190 = vmatprep.mubr.f32.mxu0 %v944
    %1191 = vmatmul.mubr.f32.gmra.mrb[0].mxu0 %v1125
    %v1192 = vpop.f32.mrb[0].mxu0
    %v1193 = vadd.f32 %v762, %v1192
    %v1194 = vpop.f32.mrb[0].mxu0
    %v1195 = vadd.f32 %v766, %v1194
    %1196 = vdwg.mxu0
    %1197 = vmatprep.subr.mxu0 %v632
    %1198 = vmatpush1.msra.mxu0 %v631
    %1199 = vmatprep.subr.mxu0 %v636
    %1200 = vmatpush1.msra.mxu0 %v635
    %1201 = vmatprep.subr.mxu0 %v640
    %1202 = vmatpush1.msra.mxu0 %v639
    %1203 = vmatprep.subr.mxu0 %v644
    %1204 = vmatpush1.msra.mxu0 %v643
    %1205 = vmatprep.subr.mxu0 %v648
    %1206 = vmatpush1.msra.mxu0 %v647
    %1207 = vmatprep.subr.mxu0 %v652
    %1208 = vmatpush1.msra.mxu0 %v651
    %1209 = vmatprep.subr.mxu0 %v656
    %1210 = vmatpush1.msra.mxu0 %v655
    %1211 = vmatprep.subr.mxu0 %v660
    %1212 = vmatpush1.msra.mxu0 %v659
    %1213 = vmatprep.subr.mxu0 %v664
    %1214 = vmatpush1.msra.mxu0 %v663
    %1215 = vmatprep.subr.mxu0 %v668
    %1216 = vmatpush1.msra.mxu0 %v667
    %1217 = vmatprep.subr.mxu0 %v672
    %1218 = vmatpush1.msra.mxu0 %v671
    %1219 = vmatprep.subr.mxu0 %v676
    %1220 = vmatpush1.msra.mxu0 %v675
    %1221 = vmatprep.subr.mxu0 %v680
    %1222 = vmatpush1.msra.mxu0 %v679
    %1223 = vmatprep.subr.mxu0 %v684
    %1224 = vmatpush1.msra.mxu0 %v683
    %1225 = vmatprep.subr.mxu0 %v688
    %1226 = vmatpush1.msra.mxu0 %v687
    %1227 = vmatprep.subr.mxu0 %v692
    %1228 = vmatpush1.msra.mxu0 %v691
    %1229 = vmatprep.subr.mxu0 %v696
    %1230 = vmatpush1.msra.mxu0 %v695
    %1231 = vmatprep.subr.mxu0 %v700
    %1232 = vmatpush1.msra.mxu0 %v699
    %1233 = vmatprep.subr.mxu0 %v704
    %1234 = vmatpush1.msra.mxu0 %v703
    %1235 = vmatprep.subr.mxu0 %v708
    %1236 = vmatpush1.msra.mxu0 %v707
    %1237 = vmatprep.subr.mxu0 %v712
    %1238 = vmatpush1.msra.mxu0 %v711
    %1239 = vmatprep.subr.mxu0 %v716
    %1240 = vmatpush1.msra.mxu0 %v715
    %1241 = vmatprep.subr.mxu0 %v720
    %1242 = vmatpush1.msra.mxu0 %v719
    %1243 = vmatprep.subr.mxu0 %v724
    %1244 = vmatpush1.msra.mxu0 %v723
    %1245 = vmatprep.subr.mxu0 %v728
    %1246 = vmatpush1.msra.mxu0 %v727
    %1247 = vmatprep.subr.mxu0 %v732
    %1248 = vmatpush1.msra.mxu0 %v731
    %1249 = vmatprep.subr.mxu0 %v736
    %1250 = vmatpush1.msra.mxu0 %v735
    %1251 = vmatprep.subr.mxu0 %v740
    %1252 = vmatpush1.msra.mxu0 %v739
    %1253 = vmatprep.subr.mxu0 %v744
    %1254 = vmatpush1.msra.mxu0 %v743
    %1255 = vmatprep.subr.mxu0 %v748
    %1256 = vmatpush1.msra.mxu0 %v747
    %1257 = vmatprep.subr.mxu0 %v752
    %1258 = vmatpush1.msra.mxu0 %v751
    %1259 = vmatprep.subr.mxu0 %v756
    %1260 = vmatpush1.msra.mxu0 %v755
    %1261 = vmatprep.mubr.f32.mxu0 %v944
    %1262 = vmatmul.mubr.f32.gmra.mrb[0].mxu0 %v1125
    %v1263 = vpop.f32.mrb[0].mxu0
    %v1264 = vadd.f32 %v770, %v1263
    %v1265 = vpop.f32.mrb[0].mxu0
    %v1266 = vadd.f32 %v774, %v1265
    %1267 = vdwg.mxu0
    %v1268 = vxor.u32 %v1193, 2147483648
    %v1269 = vxor.u32 %v1195, 2147483648
    %v1270 = vxor.u32 %v1264, 2147483648
    %v1271 = vmul.f32 %v1268, 1.442695
    %v1272 = vpow.pop %v1271
    %v1273 = vmul.f32 %v1269, 1.442695
    %v1274 = vpow.pop %v1273
    %v1275 = vmul.f32 %v1270, 1.442695
    %v1276 = vpow.pop %v1275
    %v1277 = vadd.f32 %v1272, 1.0
    %v1278 = vadd.f32 %v1274, 1.0
    %v1279 = vadd.f32 %v1276, 1.0
    %v1280 = vrcp.pop %v1277
    %v1281 = vmul.f32 1.0, %v1280
    %v1282 = vrcp.pop %v1278
    %v1283 = vmul.f32 1.0, %v1282
    %v1284 = vrcp.pop %v1279
    %v1285 = vmul.f32 1.0, %v1284
    %v1286 = vtanh.pop %v1266
    %v1287 = vmul.f32 %v1283, %v942
    %v1288 = vmul.f32 %v1281, %v1286
    %v1289 = vadd.f32 %v1287, %v1288
    %v1290 = vtanh.pop %v1289
    %v1291 = vmul.f32 %v1285, %v1290
    %v1292 = vstv %s948
    %v1293 = vmul.f32 %v1292, %v1291
    %v1294 = vadd.f32 %v947, %v1293
    %s1295 = sld [smem:[#allocation8 + $0x2]]
    %s1296 = smul.u32 2, 4
    %s1297 = smul.addr %s1296, 8
    %s1298 = scalar_lea.vmem [#allocation2], %s1297
    %v1299 = vld [vmem:[%s1298] sm:$0xff]
    %v1300 = vld [vmem:[%s1298 + $0x8] sm:$0xff]
    %v1301 = vld [vmem:[%s1298 + $0x10] sm:$0xff]
    %v1302 = vld [vmem:[%s1298 + $0x18] sm:$0xff]
    %1303 = vmatprep.subr.mxu0 %v396
    %1304 = vmatpush1.msra.mxu0 %v395
    %1305 = vmatprep.subr.mxu0 %v400
    %1306 = vmatpush1.msra.mxu0 %v399
    %1307 = vmatprep.subr.mxu0 %v404
    %1308 = vmatpush1.msra.mxu0 %v403
    %1309 = vmatprep.subr.mxu0 %v408
    %1310 = vmatpush1.msra.mxu0 %v407
    %1311 = vmatprep.subr.mxu0 %v412
    %1312 = vmatpush1.msra.mxu0 %v411
    %1313 = vmatprep.subr.mxu0 %v416
    %1314 = vmatpush1.msra.mxu0 %v415
    %1315 = vmatprep.subr.mxu0 %v420
    %1316 = vmatpush1.msra.mxu0 %v419
    %1317 = vmatprep.subr.mxu0 %v424
    %1318 = vmatpush1.msra.mxu0 %v423
    %1319 = vmatprep.subr.mxu0 %v428
    %1320 = vmatpush1.msra.mxu0 %v427
    %1321 = vmatprep.subr.mxu0 %v432
    %1322 = vmatpush1.msra.mxu0 %v431
    %1323 = vmatprep.subr.mxu0 %v436
    %1324 = vmatpush1.msra.mxu0 %v435
    %1325 = vmatprep.subr.mxu0 %v440
    %1326 = vmatpush1.msra.mxu0 %v439
    %1327 = vmatprep.subr.mxu0 %v444
    %1328 = vmatpush1.msra.mxu0 %v443
    %1329 = vmatprep.subr.mxu0 %v448
    %1330 = vmatpush1.msra.mxu0 %v447
    %1331 = vmatprep.subr.mxu0 %v452
    %1332 = vmatpush1.msra.mxu0 %v451
    %1333 = vmatprep.subr.mxu0 %v456
    %1334 = vmatpush1.msra.mxu0 %v455
    %1335 = vmatprep.subr.mxu0 0.0
    %1336 = vmatpush1.msra.mxu0 0.0
    %1337 = vmatprep.subr.mxu0 0.0
    %1338 = vmatpush1.msra.mxu0 0.0
    %1339 = vmatprep.subr.mxu0 0.0
    %1340 = vmatpush1.msra.mxu0 0.0
    %1341 = vmatprep.subr.mxu0 0.0
    %1342 = vmatpush1.msra.mxu0 0.0
    %1343 = vmatprep.subr.mxu0 0.0
    %1344 = vmatpush1.msra.mxu0 0.0
    %1345 = vmatprep.subr.mxu0 0.0
    %1346 = vmatpush1.msra.mxu0 0.0
    %1347 = vmatprep.subr.mxu0 0.0
    %1348 = vmatpush1.msra.mxu0 0.0
    %1349 = vmatprep.subr.mxu0 0.0
    %1350 = vmatpush1.msra.mxu0 0.0
    %1351 = vmatprep.subr.mxu0 0.0
    %1352 = vmatpush1.msra.mxu0 0.0
    %1353 = vmatprep.subr.mxu0 0.0
    %1354 = vmatpush1.msra.mxu0 0.0
    %1355 = vmatprep.subr.mxu0 0.0
    %1356 = vmatpush1.msra.mxu0 0.0
    %1357 = vmatprep.subr.mxu0 0.0
    %1358 = vmatpush1.msra.mxu0 0.0
    %1359 = vmatprep.subr.mxu0 0.0
    %1360 = vmatpush1.msra.mxu0 0.0
    %1361 = vmatprep.subr.mxu0 0.0
    %1362 = vmatpush1.msra.mxu0 0.0
    %1363 = vmatprep.subr.mxu0 0.0
    %1364 = vmatpush1.msra.mxu0 0.0
    %1365 = vmatprep.subr.mxu0 0.0
    %1366 = vmatpush1.msra.mxu0 0.0
    %1367 = vmatprep.mubr.f32.mxu0 0.0
    %1368 = vmatmul.mubr.f32.gmra.mrb[0].mxu0 %v1125
    %v1369 = vpop.f32.mrb[0].mxu0
    %v1370 = vadd.f32 0.0, %v1369
    %v1371 = vpop.f32.mrb[0].mxu0
    %v1372 = vadd.f32 0.0, %v1371
    %1373 = vdwg.mxu0
    %1374 = vmatprep.subr.mxu0 %v398
    %1375 = vmatpush1.msra.mxu0 %v397
    %1376 = vmatprep.subr.mxu0 %v402
    %1377 = vmatpush1.msra.mxu0 %v401
    %1378 = vmatprep.subr.mxu0 %v406
    %1379 = vmatpush1.msra.mxu0 %v405
    %1380 = vmatprep.subr.mxu0 %v410
    %1381 = vmatpush1.msra.mxu0 %v409
    %1382 = vmatprep.subr.mxu0 %v414
    %1383 = vmatpush1.msra.mxu0 %v413
    %1384 = vmatprep.subr.mxu0 %v418
    %1385 = vmatpush1.msra.mxu0 %v417
    %1386 = vmatprep.subr.mxu0 %v422
    %1387 = vmatpush1.msra.mxu0 %v421
    %1388 = vmatprep.subr.mxu0 %v426
    %1389 = vmatpush1.msra.mxu0 %v425
    %1390 = vmatprep.subr.mxu0 %v430
    %1391 = vmatpush1.msra.mxu0 %v429
    %1392 = vmatprep.subr.mxu0 %v434
    %1393 = vmatpush1.msra.mxu0 %v433
    %1394 = vmatprep.subr.mxu0 %v438
    %1395 = vmatpush1.msra.mxu0 %v437
    %1396 = vmatprep.subr.mxu0 %v442
    %1397 = vmatpush1.msra.mxu0 %v441
    %1398 = vmatprep.subr.mxu0 %v446
    %1399 = vmatpush1.msra.mxu0 %v445
    %1400 = vmatprep.subr.mxu0 %v450
    %1401 = vmatpush1.msra.mxu0 %v449
    %1402 = vmatprep.subr.mxu0 %v454
    %1403 = vmatpush1.msra.mxu0 %v453
    %1404 = vmatprep.subr.mxu0 %v458
    %1405 = vmatpush1.msra.mxu0 %v457
    %1406 = vmatprep.subr.mxu0 0.0
    %1407 = vmatpush1.msra.mxu0 0.0
    %1408 = vmatprep.subr.mxu0 0.0
    %1409 = vmatpush1.msra.mxu0 0.0
    %1410 = vmatprep.subr.mxu0 0.0
    %1411 = vmatpush1.msra.mxu0 0.0
    %1412 = vmatprep.subr.mxu0 0.0
    %1413 = vmatpush1.msra.mxu0 0.0
    %1414 = vmatprep.subr.mxu0 0.0
    %1415 = vmatpush1.msra.mxu0 0.0
    %1416 = vmatprep.subr.mxu0 0.0
    %1417 = vmatpush1.msra.mxu0 0.0
    %1418 = vmatprep.subr.mxu0 0.0
    %1419 = vmatpush1.msra.mxu0 0.0
    %1420 = vmatprep.subr.mxu0 0.0
    %1421 = vmatpush1.msra.mxu0 0.0
    %1422 = vmatprep.subr.mxu0 0.0
    %1423 = vmatpush1.msra.mxu0 0.0
    %1424 = vmatprep.subr.mxu0 0.0
    %1425 = vmatpush1.msra.mxu0 0.0
    %1426 = vmatprep.subr.mxu0 0.0
    %1427 = vmatpush1.msra.mxu0 0.0
    %1428 = vmatprep.subr.mxu0 0.0
    %1429 = vmatpush1.msra.mxu0 0.0
    %1430 = vmatprep.subr.mxu0 0.0
    %1431 = vmatpush1.msra.mxu0 0.0
    %1432 = vmatprep.subr.mxu0 0.0
    %1433 = vmatpush1.msra.mxu0 0.0
    %1434 = vmatprep.subr.mxu0 0.0
    %1435 = vmatpush1.msra.mxu0 0.0
    %1436 = vmatprep.subr.mxu0 0.0
    %1437 = vmatpush1.msra.mxu0 0.0
    %1438 = vmatprep.mubr.f32.mxu0 0.0
    %1439 = vmatmul.mubr.f32.gmra.mrb[0].mxu0 %v1125
    %v1440 = vpop.f32.mrb[0].mxu0
    %v1441 = vadd.f32 0.0, %v1440
    %v1442 = vpop.f32.mrb[0].mxu0
    %v1443 = vadd.f32 0.0, %v1442
    %1444 = vdwg.mxu0
    %v1445 = vadd.f32 %v1299, %v1370
    %v1446 = vadd.f32 %v1300, %v1372
    %v1447 = vadd.f32 %v1301, %v1441
    %v1448 = vadd.f32 %v1302, %v1443
    %v1449 = vxor.u32 %v1445, 2147483648
    %v1450 = vxor.u32 %v1446, 2147483648
    %v1451 = vxor.u32 %v1447, 2147483648
    %v1452 = vmul.f32 %v1449, 1.442695
    %v1453 = vpow.pop %v1452
    %v1454 = vmul.f32 %v1450, 1.442695
    %v1455 = vpow.pop %v1454
    %v1456 = vmul.f32 %v1451, 1.442695
    %v1457 = vpow.pop %v1456
    %v1458 = vadd.f32 %v1453, 1.0
    %v1459 = vadd.f32 %v1455, 1.0
    %v1460 = vadd.f32 %v1457, 1.0
    %v1461 = vrcp.pop %v1458
    %v1462 = vmul.f32 1.0, %v1461
    %v1463 = vrcp.pop %v1459
    %v1464 = vmul.f32 1.0, %v1463
    %v1465 = vrcp.pop %v1460
    %v1466 = vmul.f32 1.0, %v1465
    %v1467 = vtanh.pop %v1448
    %v1468 = vmul.f32 %v1464, %v1123
    %v1469 = vmul.f32 %v1462, %v1467
    %v1470 = vadd.f32 %v1468, %v1469
    %v1471 = vtanh.pop %v1470
    %v1472 = vmul.f32 %v1466, %v1471
    %1473 = vmatprep.subr.mxu0 %v630
    %1474 = vmatpush1.msra.mxu0 %v629
    %1475 = vmatprep.subr.mxu0 %v634
    %1476 = vmatpush1.msra.mxu0 %v633
    %1477 = vmatprep.subr.mxu0 %v638
    %1478 = vmatpush1.msra.mxu0 %v637
    %1479 = vmatprep.subr.mxu0 %v642
    %1480 = vmatpush1.msra.mxu0 %v641
    %1481 = vmatprep.subr.mxu0 %v646
    %1482 = vmatpush1.msra.mxu0 %v645
    %1483 = vmatprep.subr.mxu0 %v650
    %1484 = vmatpush1.msra.mxu0 %v649
    %1485 = vmatprep.subr.mxu0 %v654
    %1486 = vmatpush1.msra.mxu0 %v653
    %1487 = vmatprep.subr.mxu0 %v658
    %1488 = vmatpush1.msra.mxu0 %v657
    %1489 = vmatprep.subr.mxu0 %v662
    %1490 = vmatpush1.msra.mxu0 %v661
    %1491 = vmatprep.subr.mxu0 %v666
    %1492 = vmatpush1.msra.mxu0 %v665
    %1493 = vmatprep.subr.mxu0 %v670
    %1494 = vmatpush1.msra.mxu0 %v669
    %1495 = vmatprep.subr.mxu0 %v674
    %1496 = vmatpush1.msra.mxu0 %v673
    %1497 = vmatprep.subr.mxu0 %v678
    %1498 = vmatpush1.msra.mxu0 %v677
    %1499 = vmatprep.subr.mxu0 %v682
    %1500 = vmatpush1.msra.mxu0 %v681
    %1501 = vmatprep.subr.mxu0 %v686
    %1502 = vmatpush1.msra.mxu0 %v685
    %1503 = vmatprep.subr.mxu0 %v690
    %1504 = vmatpush1.msra.mxu0 %v689
    %1505 = vmatprep.subr.mxu0 %v694
    %1506 = vmatpush1.msra.mxu0 %v693
    %1507 = vmatprep.subr.mxu0 %v698
    %1508 = vmatpush1.msra.mxu0 %v697
    %1509 = vmatprep.subr.mxu0 %v702
    %1510 = vmatpush1.msra.mxu0 %v701
    %1511 = vmatprep.subr.mxu0 %v706
    %1512 = vmatpush1.msra.mxu0 %v705
    %1513 = vmatprep.subr.mxu0 %v710
    %1514 = vmatpush1.msra.mxu0 %v709
    %1515 = vmatprep.subr.mxu0 %v714
    %1516 = vmatpush1.msra.mxu0 %v713
    %1517 = vmatprep.subr.mxu0 %v718
    %1518 = vmatpush1.msra.mxu0 %v717
    %1519 = vmatprep.subr.mxu0 %v722
    %1520 = vmatpush1.msra.mxu0 %v721
    %1521 = vmatprep.subr.mxu0 %v726
    %1522 = vmatpush1.msra.mxu0 %v725
    %1523 = vmatprep.subr.mxu0 %v730
    %1524 = vmatpush1.msra.mxu0 %v729
    %1525 = vmatprep.subr.mxu0 %v734
    %1526 = vmatpush1.msra.mxu0 %v733
    %1527 = vmatprep.subr.mxu0 %v738
    %1528 = vmatpush1.msra.mxu0 %v737
    %1529 = vmatprep.subr.mxu0 %v742
    %1530 = vmatpush1.msra.mxu0 %v741
    %1531 = vmatprep.subr.mxu0 %v746
    %1532 = vmatpush1.msra.mxu0 %v745
    %1533 = vmatprep.subr.mxu0 %v750
    %1534 = vmatpush1.msra.mxu0 %v749
    %1535 = vmatprep.subr.mxu0 %v754
    %1536 = vmatpush1.msra.mxu0 %v753
    %1537 = vmatprep.mubr.f32.mxu0 %v1291
    %1538 = vmatmul.mubr.f32.gmra.mrb[0].mxu0 %v1472
    %v1539 = vpop.f32.mrb[0].mxu0
    %v1540 = vadd.f32 %v762, %v1539
    %v1541 = vpop.f32.mrb[0].mxu0
    %v1542 = vadd.f32 %v766, %v1541
    %1543 = vdwg.mxu0
    %1544 = vmatprep.subr.mxu0 %v632
    %1545 = vmatpush1.msra.mxu0 %v631
    %1546 = vmatprep.subr.mxu0 %v636
    %1547 = vmatpush1.msra.mxu0 %v635
    %1548 = vmatprep.subr.mxu0 %v640
    %1549 = vmatpush1.msra.mxu0 %v639
    %1550 = vmatprep.subr.mxu0 %v644
    %1551 = vmatpush1.msra.mxu0 %v643
    %1552 = vmatprep.subr.mxu0 %v648
    %1553 = vmatpush1.msra.mxu0 %v647
    %1554 = vmatprep.subr.mxu0 %v652
    %1555 = vmatpush1.msra.mxu0 %v651
    %1556 = vmatprep.subr.mxu0 %v656
    %1557 = vmatpush1.msra.mxu0 %v655
    %1558 = vmatprep.subr.mxu0 %v660
    %1559 = vmatpush1.msra.mxu0 %v659
    %1560 = vmatprep.subr.mxu0 %v664
    %1561 = vmatpush1.msra.mxu0 %v663
    %1562 = vmatprep.subr.mxu0 %v668
    %1563 = vmatpush1.msra.mxu0 %v667
    %1564 = vmatprep.subr.mxu0 %v672
    %1565 = vmatpush1.msra.mxu0 %v671
    %1566 = vmatprep.subr.mxu0 %v676
    %1567 = vmatpush1.msra.mxu0 %v675
    %1568 = vmatprep.subr.mxu0 %v680
    %1569 = vmatpush1.msra.mxu0 %v679
    %1570 = vmatprep.subr.mxu0 %v684
    %1571 = vmatpush1.msra.mxu0 %v683
    %1572 = vmatprep.subr.mxu0 %v688
    %1573 = vmatpush1.msra.mxu0 %v687
    %1574 = vmatprep.subr.mxu0 %v692
    %1575 = vmatpush1.msra.mxu0 %v691
    %1576 = vmatprep.subr.mxu0 %v696
    %1577 = vmatpush1.msra.mxu0 %v695
    %1578 = vmatprep.subr.mxu0 %v700
    %1579 = vmatpush1.msra.mxu0 %v699
    %1580 = vmatprep.subr.mxu0 %v704
    %1581 = vmatpush1.msra.mxu0 %v703
    %1582 = vmatprep.subr.mxu0 %v708
    %1583 = vmatpush1.msra.mxu0 %v707
    %1584 = vmatprep.subr.mxu0 %v712
    %1585 = vmatpush1.msra.mxu0 %v711
    %1586 = vmatprep.subr.mxu0 %v716
    %1587 = vmatpush1.msra.mxu0 %v715
    %1588 = vmatprep.subr.mxu0 %v720
    %1589 = vmatpush1.msra.mxu0 %v719
    %1590 = vmatprep.subr.mxu0 %v724
    %1591 = vmatpush1.msra.mxu0 %v723
    %1592 = vmatprep.subr.mxu0 %v728
    %1593 = vmatpush1.msra.mxu0 %v727
    %1594 = vmatprep.subr.mxu0 %v732
    %1595 = vmatpush1.msra.mxu0 %v731
    %1596 = vmatprep.subr.mxu0 %v736
    %1597 = vmatpush1.msra.mxu0 %v735
    %1598 = vmatprep.subr.mxu0 %v740
    %1599 = vmatpush1.msra.mxu0 %v739
    %1600 = vmatprep.subr.mxu0 %v744
    %1601 = vmatpush1.msra.mxu0 %v743
    %1602 = vmatprep.subr.mxu0 %v748
    %1603 = vmatpush1.msra.mxu0 %v747
    %1604 = vmatprep.subr.mxu0 %v752
    %1605 = vmatpush1.msra.mxu0 %v751
    %1606 = vmatprep.subr.mxu0 %v756
    %1607 = vmatpush1.msra.mxu0 %v755
    %1608 = vmatprep.mubr.f32.mxu0 %v1291
    %1609 = vmatmul.mubr.f32.gmra.mrb[0].mxu0 %v1472
    %v1610 = vpop.f32.mrb[0].mxu0
    %v1611 = vadd.f32 %v770, %v1610
    %v1612 = vpop.f32.mrb[0].mxu0
    %v1613 = vadd.f32 %v774, %v1612
    %1614 = vdwg.mxu0
    %v1615 = vxor.u32 %v1540, 2147483648
    %v1616 = vxor.u32 %v1542, 2147483648
    %v1617 = vxor.u32 %v1611, 2147483648
    %v1618 = vmul.f32 %v1615, 1.442695
    %v1619 = vpow.pop %v1618
    %v1620 = vmul.f32 %v1616, 1.442695
    %v1621 = vpow.pop %v1620
    %v1622 = vmul.f32 %v1617, 1.442695
    %v1623 = vpow.pop %v1622
    %v1624 = vadd.f32 %v1619, 1.0
    %v1625 = vadd.f32 %v1621, 1.0
    %v1626 = vadd.f32 %v1623, 1.0
    %v1627 = vrcp.pop %v1624
    %v1628 = vmul.f32 1.0, %v1627
    %v1629 = vrcp.pop %v1625
    %v1630 = vmul.f32 1.0, %v1629
    %v1631 = vrcp.pop %v1626
    %v1632 = vmul.f32 1.0, %v1631
    %v1633 = vtanh.pop %v1613
    %v1634 = vmul.f32 %v1630, %v1289
    %v1635 = vmul.f32 %v1628, %v1633
    %v1636 = vadd.f32 %v1634, %v1635
    %v1637 = vtanh.pop %v1636
    %v1638 = vmul.f32 %v1632, %v1637
    %v1639 = vstv %s1295
    %v1640 = vmul.f32 %v1639, %v1638
    %v1641 = vadd.f32 %v1294, %v1640
    %s1642 = sld [smem:[#allocation8 + $0x3]]
    %s1643 = smul.u32 3, 4
    %s1644 = smul.addr %s1643, 8
    %s1645 = scalar_lea.vmem [#allocation2], %s1644
    %v1646 = vld [vmem:[%s1645] sm:$0xff]
    %v1647 = vld [vmem:[%s1645 + $0x8] sm:$0xff]
    %v1648 = vld [vmem:[%s1645 + $0x10] sm:$0xff]
    %v1649 = vld [vmem:[%s1645 + $0x18] sm:$0xff]
    %1650 = vmatprep.subr.mxu0 %v396
    %1651 = vmatpush1.msra.mxu0 %v395
    %1652 = vmatprep.subr.mxu0 %v400
    %1653 = vmatpush1.msra.mxu0 %v399
    %1654 = vmatprep.subr.mxu0 %v404
    %1655 = vmatpush1.msra.mxu0 %v403
    %1656 = vmatprep.subr.mxu0 %v408
    %1657 = vmatpush1.msra.mxu0 %v407
    %1658 = vmatprep.subr.mxu0 %v412
    %1659 = vmatpush1.msra.mxu0 %v411
    %1660 = vmatprep.subr.mxu0 %v416
    %1661 = vmatpush1.msra.mxu0 %v415
    %1662 = vmatprep.subr.mxu0 %v420
    %1663 = vmatpush1.msra.mxu0 %v419
    %1664 = vmatprep.subr.mxu0 %v424
    %1665 = vmatpush1.msra.mxu0 %v423
    %1666 = vmatprep.subr.mxu0 %v428
    %1667 = vmatpush1.msra.mxu0 %v427
    %1668 = vmatprep.subr.mxu0 %v432
    %1669 = vmatpush1.msra.mxu0 %v431
    %1670 = vmatprep.subr.mxu0 %v436
    %1671 = vmatpush1.msra.mxu0 %v435
    %1672 = vmatprep.subr.mxu0 %v440
    %1673 = vmatpush1.msra.mxu0 %v439
    %1674 = vmatprep.subr.mxu0 %v444
    %1675 = vmatpush1.msra.mxu0 %v443
    %1676 = vmatprep.subr.mxu0 %v448
    %1677 = vmatpush1.msra.mxu0 %v447
    %1678 = vmatprep.subr.mxu0 %v452
    %1679 = vmatpush1.msra.mxu0 %v451
    %1680 = vmatprep.subr.mxu0 %v456
    %1681 = vmatpush1.msra.mxu0 %v455
    %1682 = vmatprep.subr.mxu0 0.0
    %1683 = vmatpush1.msra.mxu0 0.0
    %1684 = vmatprep.subr.mxu0 0.0
    %1685 = vmatpush1.msra.mxu0 0.0
    %1686 = vmatprep.subr.mxu0 0.0
    %1687 = vmatpush1.msra.mxu0 0.0
    %1688 = vmatprep.subr.mxu0 0.0
    %1689 = vmatpush1.msra.mxu0 0.0
    %1690 = vmatprep.subr.mxu0 0.0
    %1691 = vmatpush1.msra.mxu0 0.0
    %1692 = vmatprep.subr.mxu0 0.0
    %1693 = vmatpush1.msra.mxu0 0.0
    %1694 = vmatprep.subr.mxu0 0.0
    %1695 = vmatpush1.msra.mxu0 0.0
    %1696 = vmatprep.subr.mxu0 0.0
    %1697 = vmatpush1.msra.mxu0 0.0
    %1698 = vmatprep.subr.mxu0 0.0
    %1699 = vmatpush1.msra.mxu0 0.0
    %1700 = vmatprep.subr.mxu0 0.0
    %1701 = vmatpush1.msra.mxu0 0.0
    %1702 = vmatprep.subr.mxu0 0.0
    %1703 = vmatpush1.msra.mxu0 0.0
    %1704 = vmatprep.subr.mxu0 0.0
    %1705 = vmatpush1.msra.mxu0 0.0
    %1706 = vmatprep.subr.mxu0 0.0
    %1707 = vmatpush1.msra.mxu0 0.0
    %1708 = vmatprep.subr.mxu0 0.0
    %1709 = vmatpush1.msra.mxu0 0.0
    %1710 = vmatprep.subr.mxu0 0.0
    %1711 = vmatpush1.msra.mxu0 0.0
    %1712 = vmatprep.subr.mxu0 0.0
    %1713 = vmatpush1.msra.mxu0 0.0
    %1714 = vmatprep.mubr.f32.mxu0 0.0
    %1715 = vmatmul.mubr.f32.gmra.mrb[0].mxu0 %v1472
    %v1716 = vpop.f32.mrb[0].mxu0
    %v1717 = vadd.f32 0.0, %v1716
    %v1718 = vpop.f32.mrb[0].mxu0
    %v1719 = vadd.f32 0.0, %v1718
    %1720 = vdwg.mxu0
    %1721 = vmatprep.subr.mxu0 %v398
    %1722 = vmatpush1.msra.mxu0 %v397
    %1723 = vmatprep.subr.mxu0 %v402
    %1724 = vmatpush1.msra.mxu0 %v401
    %1725 = vmatprep.subr.mxu0 %v406
    %1726 = vmatpush1.msra.mxu0 %v405
    %1727 = vmatprep.subr.mxu0 %v410
    %1728 = vmatpush1.msra.mxu0 %v409
    %1729 = vmatprep.subr.mxu0 %v414
    %1730 = vmatpush1.msra.mxu0 %v413
    %1731 = vmatprep.subr.mxu0 %v418
    %1732 = vmatpush1.msra.mxu0 %v417
    %1733 = vmatprep.subr.mxu0 %v422
    %1734 = vmatpush1.msra.mxu0 %v421
    %1735 = vmatprep.subr.mxu0 %v426
    %1736 = vmatpush1.msra.mxu0 %v425
    %1737 = vmatprep.subr.mxu0 %v430
    %1738 = vmatpush1.msra.mxu0 %v429
    %1739 = vmatprep.subr.mxu0 %v434
    %1740 = vmatpush1.msra.mxu0 %v433
    %1741 = vmatprep.subr.mxu0 %v438
    %1742 = vmatpush1.msra.mxu0 %v437
    %1743 = vmatprep.subr.mxu0 %v442
    %1744 = vmatpush1.msra.mxu0 %v441
    %1745 = vmatprep.subr.mxu0 %v446
    %1746 = vmatpush1.msra.mxu0 %v445
    %1747 = vmatprep.subr.mxu0 %v450
    %1748 = vmatpush1.msra.mxu0 %v449
    %1749 = vmatprep.subr.mxu0 %v454
    %1750 = vmatpush1.msra.mxu0 %v453
    %1751 = vmatprep.subr.mxu0 %v458
    %1752 = vmatpush1.msra.mxu0 %v457
    %1753 = vmatprep.subr.mxu0 0.0
    %1754 = vmatpush1.msra.mxu0 0.0
    %1755 = vmatprep.subr.mxu0 0.0
    %1756 = vmatpush1.msra.mxu0 0.0
    %1757 = vmatprep.subr.mxu0 0.0
    %1758 = vmatpush1.msra.mxu0 0.0
    %1759 = vmatprep.subr.mxu0 0.0
    %1760 = vmatpush1.msra.mxu0 0.0
    %1761 = vmatprep.subr.mxu0 0.0
    %1762 = vmatpush1.msra.mxu0 0.0
    %1763 = vmatprep.subr.mxu0 0.0
    %1764 = vmatpush1.msra.mxu0 0.0
    %1765 = vmatprep.subr.mxu0 0.0
    %1766 = vmatpush1.msra.mxu0 0.0
    %1767 = vmatprep.subr.mxu0 0.0
    %1768 = vmatpush1.msra.mxu0 0.0
    %1769 = vmatprep.subr.mxu0 0.0
    %1770 = vmatpush1.msra.mxu0 0.0
    %1771 = vmatprep.subr.mxu0 0.0
    %1772 = vmatpush1.msra.mxu0 0.0
    %1773 = vmatprep.subr.mxu0 0.0
    %1774 = vmatpush1.msra.mxu0 0.0
    %1775 = vmatprep.subr.mxu0 0.0
    %1776 = vmatpush1.msra.mxu0 0.0
    %1777 = vmatprep.subr.mxu0 0.0
    %1778 = vmatpush1.msra.mxu0 0.0
    %1779 = vmatprep.subr.mxu0 0.0
    %1780 = vmatpush1.msra.mxu0 0.0
    %1781 = vmatprep.subr.mxu0 0.0
    %1782 = vmatpush1.msra.mxu0 0.0
    %1783 = vmatprep.subr.mxu0 0.0
    %1784 = vmatpush1.msra.mxu0 0.0
    %1785 = vmatprep.mubr.f32.mxu0 0.0
    %1786 = vmatmul.mubr.f32.gmra.mrb[0].mxu0 %v1472
    %v1787 = vpop.f32.mrb[0].mxu0
    %v1788 = vadd.f32 0.0, %v1787
    %v1789 = vpop.f32.mrb[0].mxu0
    %v1790 = vadd.f32 0.0, %v1789
    %1791 = vdwg.mxu0
    %v1792 = vadd.f32 %v1646, %v1717
    %v1793 = vadd.f32 %v1647, %v1719
    %v1794 = vadd.f32 %v1648, %v1788
    %v1795 = vadd.f32 %v1649, %v1790
    %v1796 = vxor.u32 %v1792, 2147483648
    %v1797 = vxor.u32 %v1793, 2147483648
    %v1798 = vxor.u32 %v1794, 2147483648
    %v1799 = vmul.f32 %v1796, 1.442695
    %v1800 = vpow.pop %v1799
    %v1801 = vmul.f32 %v1797, 1.442695
    %v1802 = vpow.pop %v1801
    %v1803 = vmul.f32 %v1798, 1.442695
    %v1804 = vpow.pop %v1803
    %v1805 = vadd.f32 %v1800, 1.0
    %v1806 = vadd.f32 %v1802, 1.0
    %v1807 = vadd.f32 %v1804, 1.0
    %v1808 = vrcp.pop %v1805
    %v1809 = vmul.f32 1.0, %v1808
    %v1810 = vrcp.pop %v1806
    %v1811 = vmul.f32 1.0, %v1810
    %v1812 = vrcp.pop %v1807
    %v1813 = vmul.f32 1.0, %v1812
    %v1814 = vtanh.pop %v1795
    %v1815 = vmul.f32 %v1811, %v1470
    %v1816 = vmul.f32 %v1809, %v1814
    %v1817 = vadd.f32 %v1815, %v1816
    %v1818 = vtanh.pop %v1817
    %v1819 = vmul.f32 %v1813, %v1818
    %1820 = vmatprep.subr.mxu0 %v630
    %1821 = vmatpush1.msra.mxu0 %v629
    %1822 = vmatprep.subr.mxu0 %v634
    %1823 = vmatpush1.msra.mxu0 %v633
    %1824 = vmatprep.subr.mxu0 %v638
    %1825 = vmatpush1.msra.mxu0 %v637
    %1826 = vmatprep.subr.mxu0 %v642
    %1827 = vmatpush1.msra.mxu0 %v641
    %1828 = vmatprep.subr.mxu0 %v646
    %1829 = vmatpush1.msra.mxu0 %v645
    %1830 = vmatprep.subr.mxu0 %v650
    %1831 = vmatpush1.msra.mxu0 %v649
    %1832 = vmatprep.subr.mxu0 %v654
    %1833 = vmatpush1.msra.mxu0 %v653
    %1834 = vmatprep.subr.mxu0 %v658
    %1835 = vmatpush1.msra.mxu0 %v657
    %1836 = vmatprep.subr.mxu0 %v662
    %1837 = vmatpush1.msra.mxu0 %v661
    %1838 = vmatprep.subr.mxu0 %v666
    %1839 = vmatpush1.msra.mxu0 %v665
    %1840 = vmatprep.subr.mxu0 %v670
    %1841 = vmatpush1.msra.mxu0 %v669
    %1842 = vmatprep.subr.mxu0 %v674
    %1843 = vmatpush1.msra.mxu0 %v673
    %1844 = vmatprep.subr.mxu0 %v678
    %1845 = vmatpush1.msra.mxu0 %v677
    %1846 = vmatprep.subr.mxu0 %v682
    %1847 = vmatpush1.msra.mxu0 %v681
    %1848 = vmatprep.subr.mxu0 %v686
    %1849 = vmatpush1.msra.mxu0 %v685
    %1850 = vmatprep.subr.mxu0 %v690
    %1851 = vmatpush1.msra.mxu0 %v689
    %1852 = vmatprep.subr.mxu0 %v694
    %1853 = vmatpush1.msra.mxu0 %v693
    %1854 = vmatprep.subr.mxu0 %v698
    %1855 = vmatpush1.msra.mxu0 %v697
    %1856 = vmatprep.subr.mxu0 %v702
    %1857 = vmatpush1.msra.mxu0 %v701
    %1858 = vmatprep.subr.mxu0 %v706
    %1859 = vmatpush1.msra.mxu0 %v705
    %1860 = vmatprep.subr.mxu0 %v710
    %1861 = vmatpush1.msra.mxu0 %v709
    %1862 = vmatprep.subr.mxu0 %v714
    %1863 = vmatpush1.msra.mxu0 %v713
    %1864 = vmatprep.subr.mxu0 %v718
    %1865 = vmatpush1.msra.mxu0 %v717
    %1866 = vmatprep.subr.mxu0 %v722
    %1867 = vmatpush1.msra.mxu0 %v721
    %1868 = vmatprep.subr.mxu0 %v726
    %1869 = vmatpush1.msra.mxu0 %v725
    %1870 = vmatprep.subr.mxu0 %v730
    %1871 = vmatpush1.msra.mxu0 %v729
    %1872 = vmatprep.subr.mxu0 %v734
    %1873 = vmatpush1.msra.mxu0 %v733
    %1874 = vmatprep.subr.mxu0 %v738
    %1875 = vmatpush1.msra.mxu0 %v737
    %1876 = vmatprep.subr.mxu0 %v742
    %1877 = vmatpush1.msra.mxu0 %v741
    %1878 = vmatprep.subr.mxu0 %v746
    %1879 = vmatpush1.msra.mxu0 %v745
    %1880 = vmatprep.subr.mxu0 %v750
    %1881 = vmatpush1.msra.mxu0 %v749
    %1882 = vmatprep.subr.mxu0 %v754
    %1883 = vmatpush1.msra.mxu0 %v753
    %1884 = vmatprep.mubr.f32.mxu0 %v1638
    %1885 = vmatmul.mubr.f32.gmra.mrb[0].mxu0 %v1819
    %v1886 = vpop.f32.mrb[0].mxu0
    %v1887 = vadd.f32 %v762, %v1886
    %v1888 = vpop.f32.mrb[0].mxu0
    %v1889 = vadd.f32 %v766, %v1888
    %1890 = vdwg.mxu0
    %1891 = vmatprep.subr.mxu0 %v632
    %1892 = vmatpush1.msra.mxu0 %v631
    %1893 = vmatprep.subr.mxu0 %v636
    %1894 = vmatpush1.msra.mxu0 %v635
    %1895 = vmatprep.subr.mxu0 %v640
    %1896 = vmatpush1.msra.mxu0 %v639
    %1897 = vmatprep.subr.mxu0 %v644
    %1898 = vmatpush1.msra.mxu0 %v643
    %1899 = vmatprep.subr.mxu0 %v648
    %1900 = vmatpush1.msra.mxu0 %v647
    %1901 = vmatprep.subr.mxu0 %v652
    %1902 = vmatpush1.msra.mxu0 %v651
    %1903 = vmatprep.subr.mxu0 %v656
    %1904 = vmatpush1.msra.mxu0 %v655
    %1905 = vmatprep.subr.mxu0 %v660
    %1906 = vmatpush1.msra.mxu0 %v659
    %1907 = vmatprep.subr.mxu0 %v664
    %1908 = vmatpush1.msra.mxu0 %v663
    %1909 = vmatprep.subr.mxu0 %v668
    %1910 = vmatpush1.msra.mxu0 %v667
    %1911 = vmatprep.subr.mxu0 %v672
    %1912 = vmatpush1.msra.mxu0 %v671
    %1913 = vmatprep.subr.mxu0 %v676
    %1914 = vmatpush1.msra.mxu0 %v675
    %1915 = vmatprep.subr.mxu0 %v680
    %1916 = vmatpush1.msra.mxu0 %v679
    %1917 = vmatprep.subr.mxu0 %v684
    %1918 = vmatpush1.msra.mxu0 %v683
    %1919 = vmatprep.subr.mxu0 %v688
    %1920 = vmatpush1.msra.mxu0 %v687
    %1921 = vmatprep.subr.mxu0 %v692
    %1922 = vmatpush1.msra.mxu0 %v691
    %1923 = vmatprep.subr.mxu0 %v696
    %1924 = vmatpush1.msra.mxu0 %v695
    %1925 = vmatprep.subr.mxu0 %v700
    %1926 = vmatpush1.msra.mxu0 %v699
    %1927 = vmatprep.subr.mxu0 %v704
    %1928 = vmatpush1.msra.mxu0 %v703
    %1929 = vmatprep.subr.mxu0 %v708
    %1930 = vmatpush1.msra.mxu0 %v707
    %1931 = vmatprep.subr.mxu0 %v712
    %1932 = vmatpush1.msra.mxu0 %v711
    %1933 = vmatprep.subr.mxu0 %v716
    %1934 = vmatpush1.msra.mxu0 %v715
    %1935 = vmatprep.subr.mxu0 %v720
    %1936 = vmatpush1.msra.mxu0 %v719
    %1937 = vmatprep.subr.mxu0 %v724
    %1938 = vmatpush1.msra.mxu0 %v723
    %1939 = vmatprep.subr.mxu0 %v728
    %1940 = vmatpush1.msra.mxu0 %v727
    %1941 = vmatprep.subr.mxu0 %v732
    %1942 = vmatpush1.msra.mxu0 %v731
    %1943 = vmatprep.subr.mxu0 %v736
    %1944 = vmatpush1.msra.mxu0 %v735
    %1945 = vmatprep.subr.mxu0 %v740
    %1946 = vmatpush1.msra.mxu0 %v739
    %1947 = vmatprep.subr.mxu0 %v744
    %1948 = vmatpush1.msra.mxu0 %v743
    %1949 = vmatprep.subr.mxu0 %v748
    %1950 = vmatpush1.msra.mxu0 %v747
    %1951 = vmatprep.subr.mxu0 %v752
    %1952 = vmatpush1.msra.mxu0 %v751
    %1953 = vmatprep.subr.mxu0 %v756
    %1954 = vmatpush1.msra.mxu0 %v755
    %1955 = vmatprep.mubr.f32.mxu0 %v1638
    %1956 = vmatmul.mubr.f32.gmra.mrb[0].mxu0 %v1819
    %v1957 = vpop.f32.mrb[0].mxu0
    %v1958 = vadd.f32 %v770, %v1957
    %v1959 = vpop.f32.mrb[0].mxu0
    %v1960 = vadd.f32 %v774, %v1959
    %1961 = vdwg.mxu0
    %v1962 = vxor.u32 %v1887, 2147483648
    %v1963 = vxor.u32 %v1889, 2147483648
    %v1964 = vxor.u32 %v1958, 2147483648
    %v1965 = vmul.f32 %v1962, 1.442695
    %v1966 = vpow.pop %v1965
    %v1967 = vmul.f32 %v1963, 1.442695
    %v1968 = vpow.pop %v1967
    %v1969 = vmul.f32 %v1964, 1.442695
    %v1970 = vpow.pop %v1969
    %v1971 = vadd.f32 %v1966, 1.0
    %v1972 = vadd.f32 %v1968, 1.0
    %v1973 = vadd.f32 %v1970, 1.0
    %v1974 = vrcp.pop %v1971
    %v1975 = vmul.f32 1.0, %v1974
    %v1976 = vrcp.pop %v1972
    %v1977 = vmul.f32 1.0, %v1976
    %v1978 = vrcp.pop %v1973
    %v1979 = vmul.f32 1.0, %v1978
    %v1980 = vtanh.pop %v1960
    %v1981 = vmul.f32 %v1977, %v1636
    %v1982 = vmul.f32 %v1975, %v1980
    %v1983 = vadd.f32 %v1981, %v1982
    %v1984 = vtanh.pop %v1983
    %v1985 = vmul.f32 %v1979, %v1984
    %v1986 = vstv %s1642
    %v1987 = vmul.f32 %v1986, %v1985
    %v1988 = vadd.f32 %v1641, %v1987
    %s1989 = sld [smem:[#allocation8 + $0x4]]
    %s1990 = smul.u32 4, 4
    %s1991 = smul.addr %s1990, 8
    %s1992 = scalar_lea.vmem [#allocation2], %s1991
    %v1993 = vld [vmem:[%s1992] sm:$0xff]
    %v1994 = vld [vmem:[%s1992 + $0x8] sm:$0xff]
    %v1995 = vld [vmem:[%s1992 + $0x10] sm:$0xff]
    %v1996 = vld [vmem:[%s1992 + $0x18] sm:$0xff]
    %1997 = vmatprep.subr.mxu0 %v396
    %1998 = vmatpush1.msra.mxu0 %v395
    %1999 = vmatprep.subr.mxu0 %v400
    %2000 = vmatpush1.msra.mxu0 %v399
    %2001 = vmatprep.subr.mxu0 %v404
    %2002 = vmatpush1.msra.mxu0 %v403
    %2003 = vmatprep.subr.mxu0 %v408
    %2004 = vmatpush1.msra.mxu0 %v407
    %2005 = vmatprep.subr.mxu0 %v412
    %2006 = vmatpush1.msra.mxu0 %v411
    %2007 = vmatprep.subr.mxu0 %v416
    %2008 = vmatpush1.msra.mxu0 %v415
    %2009 = vmatprep.subr.mxu0 %v420
    %2010 = vmatpush1.msra.mxu0 %v419
    %2011 = vmatprep.subr.mxu0 %v424
    %2012 = vmatpush1.msra.mxu0 %v423
    %2013 = vmatprep.subr.mxu0 %v428
    %2014 = vmatpush1.msra.mxu0 %v427
    %2015 = vmatprep.subr.mxu0 %v432
    %2016 = vmatpush1.msra.mxu0 %v431
    %2017 = vmatprep.subr.mxu0 %v436
    %2018 = vmatpush1.msra.mxu0 %v435
    %2019 = vmatprep.subr.mxu0 %v440
    %2020 = vmatpush1.msra.mxu0 %v439
    %2021 = vmatprep.subr.mxu0 %v444
    %2022 = vmatpush1.msra.mxu0 %v443
    %2023 = vmatprep.subr.mxu0 %v448
    %2024 = vmatpush1.msra.mxu0 %v447
    %2025 = vmatprep.subr.mxu0 %v452
    %2026 = vmatpush1.msra.mxu0 %v451
    %2027 = vmatprep.subr.mxu0 %v456
    %2028 = vmatpush1.msra.mxu0 %v455
    %2029 = vmatprep.subr.mxu0 0.0
    %2030 = vmatpush1.msra.mxu0 0.0
    %2031 = vmatprep.subr.mxu0 0.0
    %2032 = vmatpush1.msra.mxu0 0.0
    %2033 = vmatprep.subr.mxu0 0.0
    %2034 = vmatpush1.msra.mxu0 0.0
    %2035 = vmatprep.subr.mxu0 0.0
    %2036 = vmatpush1.msra.mxu0 0.0
    %2037 = vmatprep.subr.mxu0 0.0
    %2038 = vmatpush1.msra.mxu0 0.0
    %2039 = vmatprep.subr.mxu0 0.0
    %2040 = vmatpush1.msra.mxu0 0.0
    %2041 = vmatprep.subr.mxu0 0.0
    %2042 = vmatpush1.msra.mxu0 0.0
    %2043 = vmatprep.subr.mxu0 0.0
    %2044 = vmatpush1.msra.mxu0 0.0
    %2045 = vmatprep.subr.mxu0 0.0
    %2046 = vmatpush1.msra.mxu0 0.0
    %2047 = vmatprep.subr.mxu0 0.0
    %2048 = vmatpush1.msra.mxu0 0.0
    %2049 = vmatprep.subr.mxu0 0.0
    %2050 = vmatpush1.msra.mxu0 0.0
    %2051 = vmatprep.subr.mxu0 0.0
    %2052 = vmatpush1.msra.mxu0 0.0
    %2053 = vmatprep.subr.mxu0 0.0
    %2054 = vmatpush1.msra.mxu0 0.0
    %2055 = vmatprep.subr.mxu0 0.0
    %2056 = vmatpush1.msra.mxu0 0.0
    %2057 = vmatprep.subr.mxu0 0.0
    %2058 = vmatpush1.msra.mxu0 0.0
    %2059 = vmatprep.subr.mxu0 0.0
    %2060 = vmatpush1.msra.mxu0 0.0
    %2061 = vmatprep.mubr.f32.mxu0 0.0
    %2062 = vmatmul.mubr.f32.gmra.mrb[0].mxu0 %v1819
    %v2063 = vpop.f32.mrb[0].mxu0
    %v2064 = vadd.f32 0.0, %v2063
    %v2065 = vpop.f32.mrb[0].mxu0
    %v2066 = vadd.f32 0.0, %v2065
    %2067 = vdwg.mxu0
    %2068 = vmatprep.subr.mxu0 %v398
    %2069 = vmatpush1.msra.mxu0 %v397
    %2070 = vmatprep.subr.mxu0 %v402
    %2071 = vmatpush1.msra.mxu0 %v401
    %2072 = vmatprep.subr.mxu0 %v406
    %2073 = vmatpush1.msra.mxu0 %v405
    %2074 = vmatprep.subr.mxu0 %v410
    %2075 = vmatpush1.msra.mxu0 %v409
    %2076 = vmatprep.subr.mxu0 %v414
    %2077 = vmatpush1.msra.mxu0 %v413
    %2078 = vmatprep.subr.mxu0 %v418
    %2079 = vmatpush1.msra.mxu0 %v417
    %2080 = vmatprep.subr.mxu0 %v422
    %2081 = vmatpush1.msra.mxu0 %v421
    %2082 = vmatprep.subr.mxu0 %v426
    %2083 = vmatpush1.msra.mxu0 %v425
    %2084 = vmatprep.subr.mxu0 %v430
    %2085 = vmatpush1.msra.mxu0 %v429
    %2086 = vmatprep.subr.mxu0 %v434
    %2087 = vmatpush1.msra.mxu0 %v433
    %2088 = vmatprep.subr.mxu0 %v438
    %2089 = vmatpush1.msra.mxu0 %v437
    %2090 = vmatprep.subr.mxu0 %v442
    %2091 = vmatpush1.msra.mxu0 %v441
    %2092 = vmatprep.subr.mxu0 %v446
    %2093 = vmatpush1.msra.mxu0 %v445
    %2094 = vmatprep.subr.mxu0 %v450
    %2095 = vmatpush1.msra.mxu0 %v449
    %2096 = vmatprep.subr.mxu0 %v454
    %2097 = vmatpush1.msra.mxu0 %v453
    %2098 = vmatprep.subr.mxu0 %v458
    %2099 = vmatpush1.msra.mxu0 %v457
    %2100 = vmatprep.subr.mxu0 0.0
    %2101 = vmatpush1.msra.mxu0 0.0
    %2102 = vmatprep.subr.mxu0 0.0
    %2103 = vmatpush1.msra.mxu0 0.0
    %2104 = vmatprep.subr.mxu0 0.0
    %2105 = vmatpush1.msra.mxu0 0.0
    %2106 = vmatprep.subr.mxu0 0.0
    %2107 = vmatpush1.msra.mxu0 0.0
    %2108 = vmatprep.subr.mxu0 0.0
    %2109 = vmatpush1.msra.mxu0 0.0
    %2110 = vmatprep.subr.mxu0 0.0
    %2111 = vmatpush1.msra.mxu0 0.0
    %2112 = vmatprep.subr.mxu0 0.0
    %2113 = vmatpush1.msra.mxu0 0.0
    %2114 = vmatprep.subr.mxu0 0.0
    %2115 = vmatpush1.msra.mxu0 0.0
    %2116 = vmatprep.subr.mxu0 0.0
    %2117 = vmatpush1.msra.mxu0 0.0
    %2118 = vmatprep.subr.mxu0 0.0
    %2119 = vmatpush1.msra.mxu0 0.0
    %2120 = vmatprep.subr.mxu0 0.0
    %2121 = vmatpush1.msra.mxu0 0.0
    %2122 = vmatprep.subr.mxu0 0.0
    %2123 = vmatpush1.msra.mxu0 0.0
    %2124 = vmatprep.subr.mxu0 0.0
    %2125 = vmatpush1.msra.mxu0 0.0
    %2126 = vmatprep.subr.mxu0 0.0
    %2127 = vmatpush1.msra.mxu0 0.0
    %2128 = vmatprep.subr.mxu0 0.0
    %2129 = vmatpush1.msra.mxu0 0.0
    %2130 = vmatprep.subr.mxu0 0.0
    %2131 = vmatpush1.msra.mxu0 0.0
    %2132 = vmatprep.mubr.f32.mxu0 0.0
    %2133 = vmatmul.mubr.f32.gmra.mrb[0].mxu0 %v1819
    %v2134 = vpop.f32.mrb[0].mxu0
    %v2135 = vadd.f32 0.0, %v2134
    %v2136 = vpop.f32.mrb[0].mxu0
    %v2137 = vadd.f32 0.0, %v2136
    %2138 = vdwg.mxu0
    %v2139 = vadd.f32 %v1993, %v2064
    %v2140 = vadd.f32 %v1994, %v2066
    %v2141 = vadd.f32 %v1995, %v2135
    %v2142 = vadd.f32 %v1996, %v2137
    %v2143 = vxor.u32 %v2139, 2147483648
    %v2144 = vxor.u32 %v2140, 2147483648
    %v2145 = vxor.u32 %v2141, 2147483648
    %v2146 = vmul.f32 %v2143, 1.442695
    %v2147 = vpow.pop %v2146
    %v2148 = vmul.f32 %v2144, 1.442695
    %v2149 = vpow.pop %v2148
    %v2150 = vmul.f32 %v2145, 1.442695
    %v2151 = vpow.pop %v2150
    %v2152 = vadd.f32 %v2147, 1.0
    %v2153 = vadd.f32 %v2149, 1.0
    %v2154 = vadd.f32 %v2151, 1.0
    %v2155 = vrcp.pop %v2152
    %v2156 = vmul.f32 1.0, %v2155
    %v2157 = vrcp.pop %v2153
    %v2158 = vmul.f32 1.0, %v2157
    %v2159 = vrcp.pop %v2154
    %v2160 = vmul.f32 1.0, %v2159
    %v2161 = vtanh.pop %v2142
    %v2162 = vmul.f32 %v2158, %v1817
    %v2163 = vmul.f32 %v2156, %v2161
    %v2164 = vadd.f32 %v2162, %v2163
    %v2165 = vtanh.pop %v2164
    %v2166 = vmul.f32 %v2160, %v2165
    %2167 = vmatprep.subr.mxu0 %v630
    %2168 = vmatpush1.msra.mxu0 %v629
    %2169 = vmatprep.subr.mxu0 %v634
    %2170 = vmatpush1.msra.mxu0 %v633
    %2171 = vmatprep.subr.mxu0 %v638
    %2172 = vmatpush1.msra.mxu0 %v637
    %2173 = vmatprep.subr.mxu0 %v642
    %2174 = vmatpush1.msra.mxu0 %v641
    %2175 = vmatprep.subr.mxu0 %v646
    %2176 = vmatpush1.msra.mxu0 %v645
    %2177 = vmatprep.subr.mxu0 %v650
    %2178 = vmatpush1.msra.mxu0 %v649
    %2179 = vmatprep.subr.mxu0 %v654
    %2180 = vmatpush1.msra.mxu0 %v653
    %2181 = vmatprep.subr.mxu0 %v658
    %2182 = vmatpush1.msra.mxu0 %v657
    %2183 = vmatprep.subr.mxu0 %v662
    %2184 = vmatpush1.msra.mxu0 %v661
    %2185 = vmatprep.subr.mxu0 %v666
    %2186 = vmatpush1.msra.mxu0 %v665
    %2187 = vmatprep.subr.mxu0 %v670
    %2188 = vmatpush1.msra.mxu0 %v669
    %2189 = vmatprep.subr.mxu0 %v674
    %2190 = vmatpush1.msra.mxu0 %v673
    %2191 = vmatprep.subr.mxu0 %v678
    %2192 = vmatpush1.msra.mxu0 %v677
    %2193 = vmatprep.subr.mxu0 %v682
    %2194 = vmatpush1.msra.mxu0 %v681
    %2195 = vmatprep.subr.mxu0 %v686
    %2196 = vmatpush1.msra.mxu0 %v685
    %2197 = vmatprep.subr.mxu0 %v690
    %2198 = vmatpush1.msra.mxu0 %v689
    %2199 = vmatprep.subr.mxu0 %v694
    %2200 = vmatpush1.msra.mxu0 %v693
    %2201 = vmatprep.subr.mxu0 %v698
    %2202 = vmatpush1.msra.mxu0 %v697
    %2203 = vmatprep.subr.mxu0 %v702
    %2204 = vmatpush1.msra.mxu0 %v701
    %2205 = vmatprep.subr.mxu0 %v706
    %2206 = vmatpush1.msra.mxu0 %v705
    %2207 = vmatprep.subr.mxu0 %v710
    %2208 = vmatpush1.msra.mxu0 %v709
    %2209 = vmatprep.subr.mxu0 %v714
    %2210 = vmatpush1.msra.mxu0 %v713
    %2211 = vmatprep.subr.mxu0 %v718
    %2212 = vmatpush1.msra.mxu0 %v717
    %2213 = vmatprep.subr.mxu0 %v722
    %2214 = vmatpush1.msra.mxu0 %v721
    %2215 = vmatprep.subr.mxu0 %v726
    %2216 = vmatpush1.msra.mxu0 %v725
    %2217 = vmatprep.subr.mxu0 %v730
    %2218 = vmatpush1.msra.mxu0 %v729
    %2219 = vmatprep.subr.mxu0 %v734
    %2220 = vmatpush1.msra.mxu0 %v733
    %2221 = vmatprep.subr.mxu0 %v738
    %2222 = vmatpush1.msra.mxu0 %v737
    %2223 = vmatprep.subr.mxu0 %v742
    %2224 = vmatpush1.msra.mxu0 %v741
    %2225 = vmatprep.subr.mxu0 %v746
    %2226 = vmatpush1.msra.mxu0 %v745
    %2227 = vmatprep.subr.mxu0 %v750
    %2228 = vmatpush1.msra.mxu0 %v749
    %2229 = vmatprep.subr.mxu0 %v754
    %2230 = vmatpush1.msra.mxu0 %v753
    %2231 = vmatprep.mubr.f32.mxu0 %v1985
    %2232 = vmatmul.mubr.f32.gmra.mrb[0].mxu0 %v2166
    %v2233 = vpop.f32.mrb[0].mxu0
    %v2234 = vadd.f32 %v762, %v2233
    %v2235 = vpop.f32.mrb[0].mxu0
    %v2236 = vadd.f32 %v766, %v2235
    %2237 = vdwg.mxu0
    %2238 = vmatprep.subr.mxu0 %v632
    %2239 = vmatpush1.msra.mxu0 %v631
    %2240 = vmatprep.subr.mxu0 %v636
    %2241 = vmatpush1.msra.mxu0 %v635
    %2242 = vmatprep.subr.mxu0 %v640
    %2243 = vmatpush1.msra.mxu0 %v639
    %2244 = vmatprep.subr.mxu0 %v644
    %2245 = vmatpush1.msra.mxu0 %v643
    %2246 = vmatprep.subr.mxu0 %v648
    %2247 = vmatpush1.msra.mxu0 %v647
    %2248 = vmatprep.subr.mxu0 %v652
    %2249 = vmatpush1.msra.mxu0 %v651
    %2250 = vmatprep.subr.mxu0 %v656
    %2251 = vmatpush1.msra.mxu0 %v655
    %2252 = vmatprep.subr.mxu0 %v660
    %2253 = vmatpush1.msra.mxu0 %v659
    %2254 = vmatprep.subr.mxu0 %v664
    %2255 = vmatpush1.msra.mxu0 %v663
    %2256 = vmatprep.subr.mxu0 %v668
    %2257 = vmatpush1.msra.mxu0 %v667
    %2258 = vmatprep.subr.mxu0 %v672
    %2259 = vmatpush1.msra.mxu0 %v671
    %2260 = vmatprep.subr.mxu0 %v676
    %2261 = vmatpush1.msra.mxu0 %v675
    %2262 = vmatprep.subr.mxu0 %v680
    %2263 = vmatpush1.msra.mxu0 %v679
    %2264 = vmatprep.subr.mxu0 %v684
    %2265 = vmatpush1.msra.mxu0 %v683
    %2266 = vmatprep.subr.mxu0 %v688
    %2267 = vmatpush1.msra.mxu0 %v687
    %2268 = vmatprep.subr.mxu0 %v692
    %2269 = vmatpush1.msra.mxu0 %v691
    %2270 = vmatprep.subr.mxu0 %v696
    %2271 = vmatpush1.msra.mxu0 %v695
    %2272 = vmatprep.subr.mxu0 %v700
    %2273 = vmatpush1.msra.mxu0 %v699
    %2274 = vmatprep.subr.mxu0 %v704
    %2275 = vmatpush1.msra.mxu0 %v703
    %2276 = vmatprep.subr.mxu0 %v708
    %2277 = vmatpush1.msra.mxu0 %v707
    %2278 = vmatprep.subr.mxu0 %v712
    %2279 = vmatpush1.msra.mxu0 %v711
    %2280 = vmatprep.subr.mxu0 %v716
    %2281 = vmatpush1.msra.mxu0 %v715
    %2282 = vmatprep.subr.mxu0 %v720
    %2283 = vmatpush1.msra.mxu0 %v719
    %2284 = vmatprep.subr.mxu0 %v724
    %2285 = vmatpush1.msra.mxu0 %v723
    %2286 = vmatprep.subr.mxu0 %v728
    %2287 = vmatpush1.msra.mxu0 %v727
    %2288 = vmatprep.subr.mxu0 %v732
    %2289 = vmatpush1.msra.mxu0 %v731
    %2290 = vmatprep.subr.mxu0 %v736
    %2291 = vmatpush1.msra.mxu0 %v735
    %2292 = vmatprep.subr.mxu0 %v740
    %2293 = vmatpush1.msra.mxu0 %v739
    %2294 = vmatprep.subr.mxu0 %v744
    %2295 = vmatpush1.msra.mxu0 %v743
    %2296 = vmatprep.subr.mxu0 %v748
    %2297 = vmatpush1.msra.mxu0 %v747
    %2298 = vmatprep.subr.mxu0 %v752
    %2299 = vmatpush1.msra.mxu0 %v751
    %2300 = vmatprep.subr.mxu0 %v756
    %2301 = vmatpush1.msra.mxu0 %v755
    %2302 = vmatprep.mubr.f32.mxu0 %v1985
    %2303 = vmatmul.mubr.f32.gmra.mrb[0].mxu0 %v2166
    %v2304 = vpop.f32.mrb[0].mxu0
    %v2305 = vadd.f32 %v770, %v2304
    %v2306 = vpop.f32.mrb[0].mxu0
    %v2307 = vadd.f32 %v774, %v2306
    %2308 = vdwg.mxu0
    %v2309 = vxor.u32 %v2234, 2147483648
    %v2310 = vxor.u32 %v2236, 2147483648
    %v2311 = vxor.u32 %v2305, 2147483648
    %v2312 = vmul.f32 %v2309, 1.442695
    %v2313 = vpow.pop %v2312
    %v2314 = vmul.f32 %v2310, 1.442695
    %v2315 = vpow.pop %v2314
    %v2316 = vmul.f32 %v2311, 1.442695
    %v2317 = vpow.pop %v2316
    %v2318 = vadd.f32 %v2313, 1.0
    %v2319 = vadd.f32 %v2315, 1.0
    %v2320 = vadd.f32 %v2317, 1.0
    %v2321 = vrcp.pop %v2318
    %v2322 = vmul.f32 1.0, %v2321
    %v2323 = vrcp.pop %v2319
    %v2324 = vmul.f32 1.0, %v2323
    %v2325 = vrcp.pop %v2320
    %v2326 = vmul.f32 1.0, %v2325
    %v2327 = vtanh.pop %v2307
    %v2328 = vmul.f32 %v2324, %v1983
    %v2329 = vmul.f32 %v2322, %v2327
    %v2330 = vadd.f32 %v2328, %v2329
    %v2331 = vtanh.pop %v2330
    %v2332 = vmul.f32 %v2326, %v2331
    %v2333 = vstv %s1989
    %v2334 = vmul.f32 %v2333, %v2332
    %v2335 = vadd.f32 %v1988, %v2334
    %s2336 = sld [smem:[#allocation8 + $0x5]]
    %s2337 = smul.u32 5, 4
    %s2338 = smul.addr %s2337, 8
    %s2339 = scalar_lea.vmem [#allocation2], %s2338
    %v2340 = vld [vmem:[%s2339] sm:$0xff]
    %v2341 = vld [vmem:[%s2339 + $0x8] sm:$0xff]
    %v2342 = vld [vmem:[%s2339 + $0x10] sm:$0xff]
    %v2343 = vld [vmem:[%s2339 + $0x18] sm:$0xff]
    %2344 = vmatprep.subr.mxu0 %v396
    %2345 = vmatpush1.msra.mxu0 %v395
    %2346 = vmatprep.subr.mxu0 %v400
    %2347 = vmatpush1.msra.mxu0 %v399
    %2348 = vmatprep.subr.mxu0 %v404
    %2349 = vmatpush1.msra.mxu0 %v403
    %2350 = vmatprep.subr.mxu0 %v408
    %2351 = vmatpush1.msra.mxu0 %v407
    %2352 = vmatprep.subr.mxu0 %v412
    %2353 = vmatpush1.msra.mxu0 %v411
    %2354 = vmatprep.subr.mxu0 %v416
    %2355 = vmatpush1.msra.mxu0 %v415
    %2356 = vmatprep.subr.mxu0 %v420
    %2357 = vmatpush1.msra.mxu0 %v419
    %2358 = vmatprep.subr.mxu0 %v424
    %2359 = vmatpush1.msra.mxu0 %v423
    %2360 = vmatprep.subr.mxu0 %v428
    %2361 = vmatpush1.msra.mxu0 %v427
    %2362 = vmatprep.subr.mxu0 %v432
    %2363 = vmatpush1.msra.mxu0 %v431
    %2364 = vmatprep.subr.mxu0 %v436
    %2365 = vmatpush1.msra.mxu0 %v435
    %2366 = vmatprep.subr.mxu0 %v440
    %2367 = vmatpush1.msra.mxu0 %v439
    %2368 = vmatprep.subr.mxu0 %v444
    %2369 = vmatpush1.msra.mxu0 %v443
    %2370 = vmatprep.subr.mxu0 %v448
    %2371 = vmatpush1.msra.mxu0 %v447
    %2372 = vmatprep.subr.mxu0 %v452
    %2373 = vmatpush1.msra.mxu0 %v451
    %2374 = vmatprep.subr.mxu0 %v456
    %2375 = vmatpush1.msra.mxu0 %v455
    %2376 = vmatprep.subr.mxu0 0.0
    %2377 = vmatpush1.msra.mxu0 0.0
    %2378 = vmatprep.subr.mxu0 0.0
    %2379 = vmatpush1.msra.mxu0 0.0
    %2380 = vmatprep.subr.mxu0 0.0
    %2381 = vmatpush1.msra.mxu0 0.0
    %2382 = vmatprep.subr.mxu0 0.0
    %2383 = vmatpush1.msra.mxu0 0.0
    %2384 = vmatprep.subr.mxu0 0.0
    %2385 = vmatpush1.msra.mxu0 0.0
    %2386 = vmatprep.subr.mxu0 0.0
    %2387 = vmatpush1.msra.mxu0 0.0
    %2388 = vmatprep.subr.mxu0 0.0
    %2389 = vmatpush1.msra.mxu0 0.0
    %2390 = vmatprep.subr.mxu0 0.0
    %2391 = vmatpush1.msra.mxu0 0.0
    %2392 = vmatprep.subr.mxu0 0.0
    %2393 = vmatpush1.msra.mxu0 0.0
    %2394 = vmatprep.subr.mxu0 0.0
    %2395 = vmatpush1.msra.mxu0 0.0
    %2396 = vmatprep.subr.mxu0 0.0
    %2397 = vmatpush1.msra.mxu0 0.0
    %2398 = vmatprep.subr.mxu0 0.0
    %2399 = vmatpush1.msra.mxu0 0.0
    %2400 = vmatprep.subr.mxu0 0.0
    %2401 = vmatpush1.msra.mxu0 0.0
    %2402 = vmatprep.subr.mxu0 0.0
    %2403 = vmatpush1.msra.mxu0 0.0
    %2404 = vmatprep.subr.mxu0 0.0
    %2405 = vmatpush1.msra.mxu0 0.0
    %2406 = vmatprep.subr.mxu0 0.0
    %2407 = vmatpush1.msra.mxu0 0.0
    %2408 = vmatprep.mubr.f32.mxu0 0.0
    %2409 = vmatmul.mubr.f32.gmra.mrb[0].mxu0 %v2166
    %v2410 = vpop.f32.mrb[0].mxu0
    %v2411 = vadd.f32 0.0, %v2410
    %v2412 = vpop.f32.mrb[0].mxu0
    %v2413 = vadd.f32 0.0, %v2412
    %2414 = vdwg.mxu0
    %2415 = vmatprep.subr.mxu0 %v398
    %2416 = vmatpush1.msra.mxu0 %v397
    %2417 = vmatprep.subr.mxu0 %v402
    %2418 = vmatpush1.msra.mxu0 %v401
    %2419 = vmatprep.subr.mxu0 %v406
    %2420 = vmatpush1.msra.mxu0 %v405
    %2421 = vmatprep.subr.mxu0 %v410
    %2422 = vmatpush1.msra.mxu0 %v409
    %2423 = vmatprep.subr.mxu0 %v414
    %2424 = vmatpush1.msra.mxu0 %v413
    %2425 = vmatprep.subr.mxu0 %v418
    %2426 = vmatpush1.msra.mxu0 %v417
    %2427 = vmatprep.subr.mxu0 %v422
    %2428 = vmatpush1.msra.mxu0 %v421
    %2429 = vmatprep.subr.mxu0 %v426
    %2430 = vmatpush1.msra.mxu0 %v425
    %2431 = vmatprep.subr.mxu0 %v430
    %2432 = vmatpush1.msra.mxu0 %v429
    %2433 = vmatprep.subr.mxu0 %v434
    %2434 = vmatpush1.msra.mxu0 %v433
    %2435 = vmatprep.subr.mxu0 %v438
    %2436 = vmatpush1.msra.mxu0 %v437
    %2437 = vmatprep.subr.mxu0 %v442
    %2438 = vmatpush1.msra.mxu0 %v441
    %2439 = vmatprep.subr.mxu0 %v446
    %2440 = vmatpush1.msra.mxu0 %v445
    %2441 = vmatprep.subr.mxu0 %v450
    %2442 = vmatpush1.msra.mxu0 %v449
    %2443 = vmatprep.subr.mxu0 %v454
    %2444 = vmatpush1.msra.mxu0 %v453
    %2445 = vmatprep.subr.mxu0 %v458
    %2446 = vmatpush1.msra.mxu0 %v457
    %2447 = vmatprep.subr.mxu0 0.0
    %2448 = vmatpush1.msra.mxu0 0.0
    %2449 = vmatprep.subr.mxu0 0.0
    %2450 = vmatpush1.msra.mxu0 0.0
    %2451 = vmatprep.subr.mxu0 0.0
    %2452 = vmatpush1.msra.mxu0 0.0
    %2453 = vmatprep.subr.mxu0 0.0
    %2454 = vmatpush1.msra.mxu0 0.0
    %2455 = vmatprep.subr.mxu0 0.0
    %2456 = vmatpush1.msra.mxu0 0.0
    %2457 = vmatprep.subr.mxu0 0.0
    %2458 = vmatpush1.msra.mxu0 0.0
    %2459 = vmatprep.subr.mxu0 0.0
    %2460 = vmatpush1.msra.mxu0 0.0
    %2461 = vmatprep.subr.mxu0 0.0
    %2462 = vmatpush1.msra.mxu0 0.0
    %2463 = vmatprep.subr.mxu0 0.0
    %2464 = vmatpush1.msra.mxu0 0.0
    %2465 = vmatprep.subr.mxu0 0.0
    %2466 = vmatpush1.msra.mxu0 0.0
    %2467 = vmatprep.subr.mxu0 0.0
    %2468 = vmatpush1.msra.mxu0 0.0
    %2469 = vmatprep.subr.mxu0 0.0
    %2470 = vmatpush1.msra.mxu0 0.0
    %2471 = vmatprep.subr.mxu0 0.0
    %2472 = vmatpush1.msra.mxu0 0.0
    %2473 = vmatprep.subr.mxu0 0.0
    %2474 = vmatpush1.msra.mxu0 0.0
    %2475 = vmatprep.subr.mxu0 0.0
    %2476 = vmatpush1.msra.mxu0 0.0
    %2477 = vmatprep.subr.mxu0 0.0
    %2478 = vmatpush1.msra.mxu0 0.0
    %2479 = vmatprep.mubr.f32.mxu0 0.0
    %2480 = vmatmul.mubr.f32.gmra.mrb[0].mxu0 %v2166
    %v2481 = vpop.f32.mrb[0].mxu0
    %v2482 = vadd.f32 0.0, %v2481
    %v2483 = vpop.f32.mrb[0].mxu0
    %v2484 = vadd.f32 0.0, %v2483
    %2485 = vdwg.mxu0
    %v2486 = vadd.f32 %v2340, %v2411
    %v2487 = vadd.f32 %v2341, %v2413
    %v2488 = vadd.f32 %v2342, %v2482
    %v2489 = vadd.f32 %v2343, %v2484
    %v2490 = vxor.u32 %v2486, 2147483648
    %v2491 = vxor.u32 %v2487, 2147483648
    %v2492 = vxor.u32 %v2488, 2147483648
    %v2493 = vmul.f32 %v2490, 1.442695
    %v2494 = vpow.pop %v2493
    %v2495 = vmul.f32 %v2491, 1.442695
    %v2496 = vpow.pop %v2495
    %v2497 = vmul.f32 %v2492, 1.442695
    %v2498 = vpow.pop %v2497
    %v2499 = vadd.f32 %v2494, 1.0
    %v2500 = vadd.f32 %v2496, 1.0
    %v2501 = vadd.f32 %v2498, 1.0
    %v2502 = vrcp.pop %v2499
    %v2503 = vmul.f32 1.0, %v2502
    %v2504 = vrcp.pop %v2500
    %v2505 = vmul.f32 1.0, %v2504
    %v2506 = vrcp.pop %v2501
    %v2507 = vmul.f32 1.0, %v2506
    %v2508 = vtanh.pop %v2489
    %v2509 = vmul.f32 %v2505, %v2164
    %v2510 = vmul.f32 %v2503, %v2508
    %v2511 = vadd.f32 %v2509, %v2510
    %v2512 = vtanh.pop %v2511
    %v2513 = vmul.f32 %v2507, %v2512
    %2514 = vmatprep.subr.mxu0 %v630
    %2515 = vmatpush1.msra.mxu0 %v629
    %2516 = vmatprep.subr.mxu0 %v634
    %2517 = vmatpush1.msra.mxu0 %v633
    %2518 = vmatprep.subr.mxu0 %v638
    %2519 = vmatpush1.msra.mxu0 %v637
    %2520 = vmatprep.subr.mxu0 %v642
    %2521 = vmatpush1.msra.mxu0 %v641
    %2522 = vmatprep.subr.mxu0 %v646
    %2523 = vmatpush1.msra.mxu0 %v645
    %2524 = vmatprep.subr.mxu0 %v650
    %2525 = vmatpush1.msra.mxu0 %v649
    %2526 = vmatprep.subr.mxu0 %v654
    %2527 = vmatpush1.msra.mxu0 %v653
    %2528 = vmatprep.subr.mxu0 %v658
    %2529 = vmatpush1.msra.mxu0 %v657
    %2530 = vmatprep.subr.mxu0 %v662
    %2531 = vmatpush1.msra.mxu0 %v661
    %2532 = vmatprep.subr.mxu0 %v666
    %2533 = vmatpush1.msra.mxu0 %v665
    %2534 = vmatprep.subr.mxu0 %v670
    %2535 = vmatpush1.msra.mxu0 %v669
    %2536 = vmatprep.subr.mxu0 %v674
    %2537 = vmatpush1.msra.mxu0 %v673
    %2538 = vmatprep.subr.mxu0 %v678
    %2539 = vmatpush1.msra.mxu0 %v677
    %2540 = vmatprep.subr.mxu0 %v682
    %2541 = vmatpush1.msra.mxu0 %v681
    %2542 = vmatprep.subr.mxu0 %v686
    %2543 = vmatpush1.msra.mxu0 %v685
    %2544 = vmatprep.subr.mxu0 %v690
    %2545 = vmatpush1.msra.mxu0 %v689
    %2546 = vmatprep.subr.mxu0 %v694
    %2547 = vmatpush1.msra.mxu0 %v693
    %2548 = vmatprep.subr.mxu0 %v698
    %2549 = vmatpush1.msra.mxu0 %v697
    %2550 = vmatprep.subr.mxu0 %v702
    %2551 = vmatpush1.msra.mxu0 %v701
    %2552 = vmatprep.subr.mxu0 %v706
    %2553 = vmatpush1.msra.mxu0 %v705
    %2554 = vmatprep.subr.mxu0 %v710
    %2555 = vmatpush1.msra.mxu0 %v709
    %2556 = vmatprep.subr.mxu0 %v714
    %2557 = vmatpush1.msra.mxu0 %v713
    %2558 = vmatprep.subr.mxu0 %v718
    %2559 = vmatpush1.msra.mxu0 %v717
    %2560 = vmatprep.subr.mxu0 %v722
    %2561 = vmatpush1.msra.mxu0 %v721
    %2562 = vmatprep.subr.mxu0 %v726
    %2563 = vmatpush1.msra.mxu0 %v725
    %2564 = vmatprep.subr.mxu0 %v730
    %2565 = vmatpush1.msra.mxu0 %v729
    %2566 = vmatprep.subr.mxu0 %v734
    %2567 = vmatpush1.msra.mxu0 %v733
    %2568 = vmatprep.subr.mxu0 %v738
    %2569 = vmatpush1.msra.mxu0 %v737
    %2570 = vmatprep.subr.mxu0 %v742
    %2571 = vmatpush1.msra.mxu0 %v741
    %2572 = vmatprep.subr.mxu0 %v746
    %2573 = vmatpush1.msra.mxu0 %v745
    %2574 = vmatprep.subr.mxu0 %v750
    %2575 = vmatpush1.msra.mxu0 %v749
    %2576 = vmatprep.subr.mxu0 %v754
    %2577 = vmatpush1.msra.mxu0 %v753
    %2578 = vmatprep.mubr.f32.mxu0 %v2332
    %2579 = vmatmul.mubr.f32.gmra.mrb[0].mxu0 %v2513
    %v2580 = vpop.f32.mrb[0].mxu0
    %v2581 = vadd.f32 %v762, %v2580
    %v2582 = vpop.f32.mrb[0].mxu0
    %v2583 = vadd.f32 %v766, %v2582
    %2584 = vdwg.mxu0
    %2585 = vmatprep.subr.mxu0 %v632
    %2586 = vmatpush1.msra.mxu0 %v631
    %2587 = vmatprep.subr.mxu0 %v636
    %2588 = vmatpush1.msra.mxu0 %v635
    %2589 = vmatprep.subr.mxu0 %v640
    %2590 = vmatpush1.msra.mxu0 %v639
    %2591 = vmatprep.subr.mxu0 %v644
    %2592 = vmatpush1.msra.mxu0 %v643
    %2593 = vmatprep.subr.mxu0 %v648
    %2594 = vmatpush1.msra.mxu0 %v647
    %2595 = vmatprep.subr.mxu0 %v652
    %2596 = vmatpush1.msra.mxu0 %v651
    %2597 = vmatprep.subr.mxu0 %v656
    %2598 = vmatpush1.msra.mxu0 %v655
    %2599 = vmatprep.subr.mxu0 %v660
    %2600 = vmatpush1.msra.mxu0 %v659
    %2601 = vmatprep.subr.mxu0 %v664
    %2602 = vmatpush1.msra.mxu0 %v663
    %2603 = vmatprep.subr.mxu0 %v668
    %2604 = vmatpush1.msra.mxu0 %v667
    %2605 = vmatprep.subr.mxu0 %v672
    %2606 = vmatpush1.msra.mxu0 %v671
    %2607 = vmatprep.subr.mxu0 %v676
    %2608 = vmatpush1.msra.mxu0 %v675
    %2609 = vmatprep.subr.mxu0 %v680
    %2610 = vmatpush1.msra.mxu0 %v679
    %2611 = vmatprep.subr.mxu0 %v684
    %2612 = vmatpush1.msra.mxu0 %v683
    %2613 = vmatprep.subr.mxu0 %v688
    %2614 = vmatpush1.msra.mxu0 %v687
    %2615 = vmatprep.subr.mxu0 %v692
    %2616 = vmatpush1.msra.mxu0 %v691
    %2617 = vmatprep.subr.mxu0 %v696
    %2618 = vmatpush1.msra.mxu0 %v695
    %2619 = vmatprep.subr.mxu0 %v700
    %2620 = vmatpush1.msra.mxu0 %v699
    %2621 = vmatprep.subr.mxu0 %v704
    %2622 = vmatpush1.msra.mxu0 %v703
    %2623 = vmatprep.subr.mxu0 %v708
    %2624 = vmatpush1.msra.mxu0 %v707
    %2625 = vmatprep.subr.mxu0 %v712
    %2626 = vmatpush1.msra.mxu0 %v711
    %2627 = vmatprep.subr.mxu0 %v716
    %2628 = vmatpush1.msra.mxu0 %v715
    %2629 = vmatprep.subr.mxu0 %v720
    %2630 = vmatpush1.msra.mxu0 %v719
    %2631 = vmatprep.subr.mxu0 %v724
    %2632 = vmatpush1.msra.mxu0 %v723
    %2633 = vmatprep.subr.mxu0 %v728
    %2634 = vmatpush1.msra.mxu0 %v727
    %2635 = vmatprep.subr.mxu0 %v732
    %2636 = vmatpush1.msra.mxu0 %v731
    %2637 = vmatprep.subr.mxu0 %v736
    %2638 = vmatpush1.msra.mxu0 %v735
    %2639 = vmatprep.subr.mxu0 %v740
    %2640 = vmatpush1.msra.mxu0 %v739
    %2641 = vmatprep.subr.mxu0 %v744
    %2642 = vmatpush1.msra.mxu0 %v743
    %2643 = vmatprep.subr.mxu0 %v748
    %2644 = vmatpush1.msra.mxu0 %v747
    %2645 = vmatprep.subr.mxu0 %v752
    %2646 = vmatpush1.msra.mxu0 %v751
    %2647 = vmatprep.subr.mxu0 %v756
    %2648 = vmatpush1.msra.mxu0 %v755
    %2649 = vmatprep.mubr.f32.mxu0 %v2332
    %2650 = vmatmul.mubr.f32.gmra.mrb[0].mxu0 %v2513
    %v2651 = vpop.f32.mrb[0].mxu0
    %v2652 = vadd.f32 %v770, %v2651
    %v2653 = vpop.f32.mrb[0].mxu0
    %v2654 = vadd.f32 %v774, %v2653
    %2655 = vdwg.mxu0
    %v2656 = vxor.u32 %v2581, 2147483648
    %v2657 = vxor.u32 %v2583, 2147483648
    %v2658 = vxor.u32 %v2652, 2147483648
    %v2659 = vmul.f32 %v2656, 1.442695
    %v2660 = vpow.pop %v2659
    %v2661 = vmul.f32 %v2657, 1.442695
    %v2662 = vpow.pop %v2661
    %v2663 = vmul.f32 %v2658, 1.442695
    %v2664 = vpow.pop %v2663
    %v2665 = vadd.f32 %v2660, 1.0
    %v2666 = vadd.f32 %v2662, 1.0
    %v2667 = vadd.f32 %v2664, 1.0
    %v2668 = vrcp.pop %v2665
    %v2669 = vmul.f32 1.0, %v2668
    %v2670 = vrcp.pop %v2666
    %v2671 = vmul.f32 1.0, %v2670
    %v2672 = vrcp.pop %v2667
    %v2673 = vmul.f32 1.0, %v2672
    %v2674 = vtanh.pop %v2654
    %v2675 = vmul.f32 %v2671, %v2330
    %v2676 = vmul.f32 %v2669, %v2674
    %v2677 = vadd.f32 %v2675, %v2676
    %v2678 = vtanh.pop %v2677
    %v2679 = vmul.f32 %v2673, %v2678
    %v2680 = vstv %s2336
    %v2681 = vmul.f32 %v2680, %v2679
    %v2682 = vadd.f32 %v2335, %v2681
    %s2683 = sld [smem:[#allocation8 + $0x6]]
    %s2684 = smul.u32 6, 4
    %s2685 = smul.addr %s2684, 8
    %s2686 = scalar_lea.vmem [#allocation2], %s2685
    %v2687 = vld [vmem:[%s2686] sm:$0xff]
    %v2688 = vld [vmem:[%s2686 + $0x8] sm:$0xff]
    %v2689 = vld [vmem:[%s2686 + $0x10] sm:$0xff]
    %v2690 = vld [vmem:[%s2686 + $0x18] sm:$0xff]
    %2691 = vmatprep.subr.mxu0 %v396
    %2692 = vmatpush1.msra.mxu0 %v395
    %2693 = vmatprep.subr.mxu0 %v400
    %2694 = vmatpush1.msra.mxu0 %v399
    %2695 = vmatprep.subr.mxu0 %v404
    %2696 = vmatpush1.msra.mxu0 %v403
    %2697 = vmatprep.subr.mxu0 %v408
    %2698 = vmatpush1.msra.mxu0 %v407
    %2699 = vmatprep.subr.mxu0 %v412
    %2700 = vmatpush1.msra.mxu0 %v411
    %2701 = vmatprep.subr.mxu0 %v416
    %2702 = vmatpush1.msra.mxu0 %v415
    %2703 = vmatprep.subr.mxu0 %v420
    %2704 = vmatpush1.msra.mxu0 %v419
    %2705 = vmatprep.subr.mxu0 %v424
    %2706 = vmatpush1.msra.mxu0 %v423
    %2707 = vmatprep.subr.mxu0 %v428
    %2708 = vmatpush1.msra.mxu0 %v427
    %2709 = vmatprep.subr.mxu0 %v432
    %2710 = vmatpush1.msra.mxu0 %v431
    %2711 = vmatprep.subr.mxu0 %v436
    %2712 = vmatpush1.msra.mxu0 %v435
    %2713 = vmatprep.subr.mxu0 %v440
    %2714 = vmatpush1.msra.mxu0 %v439
    %2715 = vmatprep.subr.mxu0 %v444
    %2716 = vmatpush1.msra.mxu0 %v443
    %2717 = vmatprep.subr.mxu0 %v448
    %2718 = vmatpush1.msra.mxu0 %v447
    %2719 = vmatprep.subr.mxu0 %v452
    %2720 = vmatpush1.msra.mxu0 %v451
    %2721 = vmatprep.subr.mxu0 %v456
    %2722 = vmatpush1.msra.mxu0 %v455
    %2723 = vmatprep.subr.mxu0 0.0
    %2724 = vmatpush1.msra.mxu0 0.0
    %2725 = vmatprep.subr.mxu0 0.0
    %2726 = vmatpush1.msra.mxu0 0.0
    %2727 = vmatprep.subr.mxu0 0.0
    %2728 = vmatpush1.msra.mxu0 0.0
    %2729 = vmatprep.subr.mxu0 0.0
    %2730 = vmatpush1.msra.mxu0 0.0
    %2731 = vmatprep.subr.mxu0 0.0
    %2732 = vmatpush1.msra.mxu0 0.0
    %2733 = vmatprep.subr.mxu0 0.0
    %2734 = vmatpush1.msra.mxu0 0.0
    %2735 = vmatprep.subr.mxu0 0.0
    %2736 = vmatpush1.msra.mxu0 0.0
    %2737 = vmatprep.subr.mxu0 0.0
    %2738 = vmatpush1.msra.mxu0 0.0
    %2739 = vmatprep.subr.mxu0 0.0
    %2740 = vmatpush1.msra.mxu0 0.0
    %2741 = vmatprep.subr.mxu0 0.0
    %2742 = vmatpush1.msra.mxu0 0.0
    %2743 = vmatprep.subr.mxu0 0.0
    %2744 = vmatpush1.msra.mxu0 0.0
    %2745 = vmatprep.subr.mxu0 0.0
    %2746 = vmatpush1.msra.mxu0 0.0
    %2747 = vmatprep.subr.mxu0 0.0
    %2748 = vmatpush1.msra.mxu0 0.0
    %2749 = vmatprep.subr.mxu0 0.0
    %2750 = vmatpush1.msra.mxu0 0.0
    %2751 = vmatprep.subr.mxu0 0.0
    %2752 = vmatpush1.msra.mxu0 0.0
    %2753 = vmatprep.subr.mxu0 0.0
    %2754 = vmatpush1.msra.mxu0 0.0
    %2755 = vmatprep.mubr.f32.mxu0 0.0
    %2756 = vmatmul.mubr.f32.gmra.mrb[0].mxu0 %v2513
    %v2757 = vpop.f32.mrb[0].mxu0
    %v2758 = vadd.f32 0.0, %v2757
    %v2759 = vpop.f32.mrb[0].mxu0
    %v2760 = vadd.f32 0.0, %v2759
    %2761 = vdwg.mxu0
    %2762 = vmatprep.subr.mxu0 %v398
    %2763 = vmatpush1.msra.mxu0 %v397
    %2764 = vmatprep.subr.mxu0 %v402
    %2765 = vmatpush1.msra.mxu0 %v401
    %2766 = vmatprep.subr.mxu0 %v406
    %2767 = vmatpush1.msra.mxu0 %v405
    %2768 = vmatprep.subr.mxu0 %v410
    %2769 = vmatpush1.msra.mxu0 %v409
    %2770 = vmatprep.subr.mxu0 %v414
    %2771 = vmatpush1.msra.mxu0 %v413
    %2772 = vmatprep.subr.mxu0 %v418
    %2773 = vmatpush1.msra.mxu0 %v417
    %2774 = vmatprep.subr.mxu0 %v422
    %2775 = vmatpush1.msra.mxu0 %v421
    %2776 = vmatprep.subr.mxu0 %v426
    %2777 = vmatpush1.msra.mxu0 %v425
    %2778 = vmatprep.subr.mxu0 %v430
    %2779 = vmatpush1.msra.mxu0 %v429
    %2780 = vmatprep.subr.mxu0 %v434
    %2781 = vmatpush1.msra.mxu0 %v433
    %2782 = vmatprep.subr.mxu0 %v438
    %2783 = vmatpush1.msra.mxu0 %v437
    %2784 = vmatprep.subr.mxu0 %v442
    %2785 = vmatpush1.msra.mxu0 %v441
    %2786 = vmatprep.subr.mxu0 %v446
    %2787 = vmatpush1.msra.mxu0 %v445
    %2788 = vmatprep.subr.mxu0 %v450
    %2789 = vmatpush1.msra.mxu0 %v449
    %2790 = vmatprep.subr.mxu0 %v454
    %2791 = vmatpush1.msra.mxu0 %v453
    %2792 = vmatprep.subr.mxu0 %v458
    %2793 = vmatpush1.msra.mxu0 %v457
    %2794 = vmatprep.subr.mxu0 0.0
    %2795 = vmatpush1.msra.mxu0 0.0
    %2796 = vmatprep.subr.mxu0 0.0
    %2797 = vmatpush1.msra.mxu0 0.0
    %2798 = vmatprep.subr.mxu0 0.0
    %2799 = vmatpush1.msra.mxu0 0.0
    %2800 = vmatprep.subr.mxu0 0.0
    %2801 = vmatpush1.msra.mxu0 0.0
    %2802 = vmatprep.subr.mxu0 0.0
    %2803 = vmatpush1.msra.mxu0 0.0
    %2804 = vmatprep.subr.mxu0 0.0
    %2805 = vmatpush1.msra.mxu0 0.0
    %2806 = vmatprep.subr.mxu0 0.0
    %2807 = vmatpush1.msra.mxu0 0.0
    %2808 = vmatprep.subr.mxu0 0.0
    %2809 = vmatpush1.msra.mxu0 0.0
    %2810 = vmatprep.subr.mxu0 0.0
    %2811 = vmatpush1.msra.mxu0 0.0
    %2812 = vmatprep.subr.mxu0 0.0
    %2813 = vmatpush1.msra.mxu0 0.0
    %2814 = vmatprep.subr.mxu0 0.0
    %2815 = vmatpush1.msra.mxu0 0.0
    %2816 = vmatprep.subr.mxu0 0.0
    %2817 = vmatpush1.msra.mxu0 0.0
    %2818 = vmatprep.subr.mxu0 0.0
    %2819 = vmatpush1.msra.mxu0 0.0
    %2820 = vmatprep.subr.mxu0 0.0
    %2821 = vmatpush1.msra.mxu0 0.0
    %2822 = vmatprep.subr.mxu0 0.0
    %2823 = vmatpush1.msra.mxu0 0.0
    %2824 = vmatprep.subr.mxu0 0.0
    %2825 = vmatpush1.msra.mxu0 0.0
    %2826 = vmatprep.mubr.f32.mxu0 0.0
    %2827 = vmatmul.mubr.f32.gmra.mrb[0].mxu0 %v2513
    %v2828 = vpop.f32.mrb[0].mxu0
    %v2829 = vadd.f32 0.0, %v2828
    %v2830 = vpop.f32.mrb[0].mxu0
    %v2831 = vadd.f32 0.0, %v2830
    %2832 = vdwg.mxu0
    %v2833 = vadd.f32 %v2687, %v2758
    %v2834 = vadd.f32 %v2688, %v2760
    %v2835 = vadd.f32 %v2689, %v2829
    %v2836 = vadd.f32 %v2690, %v2831
    %v2837 = vxor.u32 %v2833, 2147483648
    %v2838 = vxor.u32 %v2834, 2147483648
    %v2839 = vxor.u32 %v2835, 2147483648
    %v2840 = vmul.f32 %v2837, 1.442695
    %v2841 = vpow.pop %v2840
    %v2842 = vmul.f32 %v2838, 1.442695
    %v2843 = vpow.pop %v2842
    %v2844 = vmul.f32 %v2839, 1.442695
    %v2845 = vpow.pop %v2844
    %v2846 = vadd.f32 %v2841, 1.0
    %v2847 = vadd.f32 %v2843, 1.0
    %v2848 = vadd.f32 %v2845, 1.0
    %v2849 = vrcp.pop %v2846
    %v2850 = vmul.f32 1.0, %v2849
    %v2851 = vrcp.pop %v2847
    %v2852 = vmul.f32 1.0, %v2851
    %v2853 = vrcp.pop %v2848
    %v2854 = vmul.f32 1.0, %v2853
    %v2855 = vtanh.pop %v2836
    %v2856 = vmul.f32 %v2852, %v2511
    %v2857 = vmul.f32 %v2850, %v2855
    %v2858 = vadd.f32 %v2856, %v2857
    %v2859 = vtanh.pop %v2858
    %v2860 = vmul.f32 %v2854, %v2859
    %2861 = vmatprep.subr.mxu0 %v630
    %2862 = vmatpush1.msra.mxu0 %v629
    %2863 = vmatprep.subr.mxu0 %v634
    %2864 = vmatpush1.msra.mxu0 %v633
    %2865 = vmatprep.subr.mxu0 %v638
    %2866 = vmatpush1.msra.mxu0 %v637
    %2867 = vmatprep.subr.mxu0 %v642
    %2868 = vmatpush1.msra.mxu0 %v641
    %2869 = vmatprep.subr.mxu0 %v646
    %2870 = vmatpush1.msra.mxu0 %v645
    %2871 = vmatprep.subr.mxu0 %v650
    %2872 = vmatpush1.msra.mxu0 %v649
    %2873 = vmatprep.subr.mxu0 %v654
    %2874 = vmatpush1.msra.mxu0 %v653
    %2875 = vmatprep.subr.mxu0 %v658
    %2876 = vmatpush1.msra.mxu0 %v657
    %2877 = vmatprep.subr.mxu0 %v662
    %2878 = vmatpush1.msra.mxu0 %v661
    %2879 = vmatprep.subr.mxu0 %v666
    %2880 = vmatpush1.msra.mxu0 %v665
    %2881 = vmatprep.subr.mxu0 %v670
    %2882 = vmatpush1.msra.mxu0 %v669
    %2883 = vmatprep.subr.mxu0 %v674
    %2884 = vmatpush1.msra.mxu0 %v673
    %2885 = vmatprep.subr.mxu0 %v678
    %2886 = vmatpush1.msra.mxu0 %v677
    %2887 = vmatprep.subr.mxu0 %v682
    %2888 = vmatpush1.msra.mxu0 %v681
    %2889 = vmatprep.subr.mxu0 %v686
    %2890 = vmatpush1.msra.mxu0 %v685
    %2891 = vmatprep.subr.mxu0 %v690
    %2892 = vmatpush1.msra.mxu0 %v689
    %2893 = vmatprep.subr.mxu0 %v694
    %2894 = vmatpush1.msra.mxu0 %v693
    %2895 = vmatprep.subr.mxu0 %v698
    %2896 = vmatpush1.msra.mxu0 %v697
    %2897 = vmatprep.subr.mxu0 %v702
    %2898 = vmatpush1.msra.mxu0 %v701
    %2899 = vmatprep.subr.mxu0 %v706
    %2900 = vmatpush1.msra.mxu0 %v705
    %2901 = vmatprep.subr.mxu0 %v710
    %2902 = vmatpush1.msra.mxu0 %v709
    %2903 = vmatprep.subr.mxu0 %v714
    %2904 = vmatpush1.msra.mxu0 %v713
    %2905 = vmatprep.subr.mxu0 %v718
    %2906 = vmatpush1.msra.mxu0 %v717
    %2907 = vmatprep.subr.mxu0 %v722
    %2908 = vmatpush1.msra.mxu0 %v721
    %2909 = vmatprep.subr.mxu0 %v726
    %2910 = vmatpush1.msra.mxu0 %v725
    %2911 = vmatprep.subr.mxu0 %v730
    %2912 = vmatpush1.msra.mxu0 %v729
    %2913 = vmatprep.subr.mxu0 %v734
    %2914 = vmatpush1.msra.mxu0 %v733
    %2915 = vmatprep.subr.mxu0 %v738
    %2916 = vmatpush1.msra.mxu0 %v737
    %2917 = vmatprep.subr.mxu0 %v742
    %2918 = vmatpush1.msra.mxu0 %v741
    %2919 = vmatprep.subr.mxu0 %v746
    %2920 = vmatpush1.msra.mxu0 %v745
    %2921 = vmatprep.subr.mxu0 %v750
    %2922 = vmatpush1.msra.mxu0 %v749
    %2923 = vmatprep.subr.mxu0 %v754
    %2924 = vmatpush1.msra.mxu0 %v753
    %2925 = vmatprep.mubr.f32.mxu0 %v2679
    %2926 = vmatmul.mubr.f32.gmra.mrb[0].mxu0 %v2860
    %v2927 = vpop.f32.mrb[0].mxu0
    %v2928 = vadd.f32 %v762, %v2927
    %v2929 = vpop.f32.mrb[0].mxu0
    %v2930 = vadd.f32 %v766, %v2929
    %2931 = vdwg.mxu0
    %2932 = vmatprep.subr.mxu0 %v632
    %2933 = vmatpush1.msra.mxu0 %v631
    %2934 = vmatprep.subr.mxu0 %v636
    %2935 = vmatpush1.msra.mxu0 %v635
    %2936 = vmatprep.subr.mxu0 %v640
    %2937 = vmatpush1.msra.mxu0 %v639
    %2938 = vmatprep.subr.mxu0 %v644
    %2939 = vmatpush1.msra.mxu0 %v643
    %2940 = vmatprep.subr.mxu0 %v648
    %2941 = vmatpush1.msra.mxu0 %v647
    %2942 = vmatprep.subr.mxu0 %v652
    %2943 = vmatpush1.msra.mxu0 %v651
    %2944 = vmatprep.subr.mxu0 %v656
    %2945 = vmatpush1.msra.mxu0 %v655
    %2946 = vmatprep.subr.mxu0 %v660
    %2947 = vmatpush1.msra.mxu0 %v659
    %2948 = vmatprep.subr.mxu0 %v664
    %2949 = vmatpush1.msra.mxu0 %v663
    %2950 = vmatprep.subr.mxu0 %v668
    %2951 = vmatpush1.msra.mxu0 %v667
    %2952 = vmatprep.subr.mxu0 %v672
    %2953 = vmatpush1.msra.mxu0 %v671
    %2954 = vmatprep.subr.mxu0 %v676
    %2955 = vmatpush1.msra.mxu0 %v675
    %2956 = vmatprep.subr.mxu0 %v680
    %2957 = vmatpush1.msra.mxu0 %v679
    %2958 = vmatprep.subr.mxu0 %v684
    %2959 = vmatpush1.msra.mxu0 %v683
    %2960 = vmatprep.subr.mxu0 %v688
    %2961 = vmatpush1.msra.mxu0 %v687
    %2962 = vmatprep.subr.mxu0 %v692
    %2963 = vmatpush1.msra.mxu0 %v691
    %2964 = vmatprep.subr.mxu0 %v696
    %2965 = vmatpush1.msra.mxu0 %v695
    %2966 = vmatprep.subr.mxu0 %v700
    %2967 = vmatpush1.msra.mxu0 %v699
    %2968 = vmatprep.subr.mxu0 %v704
    %2969 = vmatpush1.msra.mxu0 %v703
    %2970 = vmatprep.subr.mxu0 %v708
    %2971 = vmatpush1.msra.mxu0 %v707
    %2972 = vmatprep.subr.mxu0 %v712
    %2973 = vmatpush1.msra.mxu0 %v711
    %2974 = vmatprep.subr.mxu0 %v716
    %2975 = vmatpush1.msra.mxu0 %v715
    %2976 = vmatprep.subr.mxu0 %v720
    %2977 = vmatpush1.msra.mxu0 %v719
    %2978 = vmatprep.subr.mxu0 %v724
    %2979 = vmatpush1.msra.mxu0 %v723
    %2980 = vmatprep.subr.mxu0 %v728
    %2981 = vmatpush1.msra.mxu0 %v727
    %2982 = vmatprep.subr.mxu0 %v732
    %2983 = vmatpush1.msra.mxu0 %v731
    %2984 = vmatprep.subr.mxu0 %v736
    %2985 = vmatpush1.msra.mxu0 %v735
    %2986 = vmatprep.subr.mxu0 %v740
    %2987 = vmatpush1.msra.mxu0 %v739
    %2988 = vmatprep.subr.mxu0 %v744
    %2989 = vmatpush1.msra.mxu0 %v743
    %2990 = vmatprep.subr.mxu0 %v748
    %2991 = vmatpush1.msra.mxu0 %v747
    %2992 = vmatprep.subr.mxu0 %v752
    %2993 = vmatpush1.msra.mxu0 %v751
    %2994 = vmatprep.subr.mxu0 %v756
    %2995 = vmatpush1.msra.mxu0 %v755
    %2996 = vmatprep.mubr.f32.mxu0 %v2679
    %2997 = vmatmul.mubr.f32.gmra.mrb[0].mxu0 %v2860
    %v2998 = vpop.f32.mrb[0].mxu0
    %v2999 = vadd.f32 %v770, %v2998
    %v3000 = vpop.f32.mrb[0].mxu0
    %v3001 = vadd.f32 %v774, %v3000
    %3002 = vdwg.mxu0
    %v3003 = vxor.u32 %v2928, 2147483648
    %v3004 = vxor.u32 %v2930, 2147483648
    %v3005 = vxor.u32 %v2999, 2147483648
    %v3006 = vmul.f32 %v3003, 1.442695
    %v3007 = vpow.pop %v3006
    %v3008 = vmul.f32 %v3004, 1.442695
    %v3009 = vpow.pop %v3008
    %v3010 = vmul.f32 %v3005, 1.442695
    %v3011 = vpow.pop %v3010
    %v3012 = vadd.f32 %v3007, 1.0
    %v3013 = vadd.f32 %v3009, 1.0
    %v3014 = vadd.f32 %v3011, 1.0
    %v3015 = vrcp.pop %v3012
    %v3016 = vmul.f32 1.0, %v3015
    %v3017 = vrcp.pop %v3013
    %v3018 = vmul.f32 1.0, %v3017
    %v3019 = vrcp.pop %v3014
    %v3020 = vmul.f32 1.0, %v3019
    %v3021 = vtanh.pop %v3001
    %v3022 = vmul.f32 %v3018, %v2677
    %v3023 = vmul.f32 %v3016, %v3021
    %v3024 = vadd.f32 %v3022, %v3023
    %v3025 = vtanh.pop %v3024
    %v3026 = vmul.f32 %v3020, %v3025
    %v3027 = vstv %s2683
    %v3028 = vmul.f32 %v3027, %v3026
    %v3029 = vadd.f32 %v2682, %v3028
    %s3030 = sld [smem:[#allocation8 + $0x7]]
    %s3031 = smul.u32 7, 4
    %s3032 = smul.addr %s3031, 8
    %s3033 = scalar_lea.vmem [#allocation2], %s3032
    %v3034 = vld [vmem:[%s3033] sm:$0xff]
    %v3035 = vld [vmem:[%s3033 + $0x8] sm:$0xff]
    %v3036 = vld [vmem:[%s3033 + $0x10] sm:$0xff]
    %v3037 = vld [vmem:[%s3033 + $0x18] sm:$0xff]
    %3038 = vmatprep.subr.mxu0 %v396
    %3039 = vmatpush1.msra.mxu0 %v395
    %3040 = vmatprep.subr.mxu0 %v400
    %3041 = vmatpush1.msra.mxu0 %v399
    %3042 = vmatprep.subr.mxu0 %v404
    %3043 = vmatpush1.msra.mxu0 %v403
    %3044 = vmatprep.subr.mxu0 %v408
    %3045 = vmatpush1.msra.mxu0 %v407
    %3046 = vmatprep.subr.mxu0 %v412
    %3047 = vmatpush1.msra.mxu0 %v411
    %3048 = vmatprep.subr.mxu0 %v416
    %3049 = vmatpush1.msra.mxu0 %v415
    %3050 = vmatprep.subr.mxu0 %v420
    %3051 = vmatpush1.msra.mxu0 %v419
    %3052 = vmatprep.subr.mxu0 %v424
    %3053 = vmatpush1.msra.mxu0 %v423
    %3054 = vmatprep.subr.mxu0 %v428
    %3055 = vmatpush1.msra.mxu0 %v427
    %3056 = vmatprep.subr.mxu0 %v432
    %3057 = vmatpush1.msra.mxu0 %v431
    %3058 = vmatprep.subr.mxu0 %v436
    %3059 = vmatpush1.msra.mxu0 %v435
    %3060 = vmatprep.subr.mxu0 %v440
    %3061 = vmatpush1.msra.mxu0 %v439
    %3062 = vmatprep.subr.mxu0 %v444
    %3063 = vmatpush1.msra.mxu0 %v443
    %3064 = vmatprep.subr.mxu0 %v448
    %3065 = vmatpush1.msra.mxu0 %v447
    %3066 = vmatprep.subr.mxu0 %v452
    %3067 = vmatpush1.msra.mxu0 %v451
    %3068 = vmatprep.subr.mxu0 %v456
    %3069 = vmatpush1.msra.mxu0 %v455
    %3070 = vmatprep.subr.mxu0 0.0
    %3071 = vmatpush1.msra.mxu0 0.0
    %3072 = vmatprep.subr.mxu0 0.0
    %3073 = vmatpush1.msra.mxu0 0.0
    %3074 = vmatprep.subr.mxu0 0.0
    %3075 = vmatpush1.msra.mxu0 0.0
    %3076 = vmatprep.subr.mxu0 0.0
    %3077 = vmatpush1.msra.mxu0 0.0
    %3078 = vmatprep.subr.mxu0 0.0
    %3079 = vmatpush1.msra.mxu0 0.0
    %3080 = vmatprep.subr.mxu0 0.0
    %3081 = vmatpush1.msra.mxu0 0.0
    %3082 = vmatprep.subr.mxu0 0.0
    %3083 = vmatpush1.msra.mxu0 0.0
    %3084 = vmatprep.subr.mxu0 0.0
    %3085 = vmatpush1.msra.mxu0 0.0
    %3086 = vmatprep.subr.mxu0 0.0
    %3087 = vmatpush1.msra.mxu0 0.0
    %3088 = vmatprep.subr.mxu0 0.0
    %3089 = vmatpush1.msra.mxu0 0.0
    %3090 = vmatprep.subr.mxu0 0.0
    %3091 = vmatpush1.msra.mxu0 0.0
    %3092 = vmatprep.subr.mxu0 0.0
    %3093 = vmatpush1.msra.mxu0 0.0
    %3094 = vmatprep.subr.mxu0 0.0
    %3095 = vmatpush1.msra.mxu0 0.0
    %3096 = vmatprep.subr.mxu0 0.0
    %3097 = vmatpush1.msra.mxu0 0.0
    %3098 = vmatprep.subr.mxu0 0.0
    %3099 = vmatpush1.msra.mxu0 0.0
    %3100 = vmatprep.subr.mxu0 0.0
    %3101 = vmatpush1.msra.mxu0 0.0
    %3102 = vmatprep.mubr.f32.mxu0 0.0
    %3103 = vmatmul.mubr.f32.gmra.mrb[0].mxu0 %v2860
    %v3104 = vpop.f32.mrb[0].mxu0
    %v3105 = vadd.f32 0.0, %v3104
    %v3106 = vpop.f32.mrb[0].mxu0
    %v3107 = vadd.f32 0.0, %v3106
    %3108 = vdwg.mxu0
    %3109 = vmatprep.subr.mxu0 %v398
    %3110 = vmatpush1.msra.mxu0 %v397
    %3111 = vmatprep.subr.mxu0 %v402
    %3112 = vmatpush1.msra.mxu0 %v401
    %3113 = vmatprep.subr.mxu0 %v406
    %3114 = vmatpush1.msra.mxu0 %v405
    %3115 = vmatprep.subr.mxu0 %v410
    %3116 = vmatpush1.msra.mxu0 %v409
    %3117 = vmatprep.subr.mxu0 %v414
    %3118 = vmatpush1.msra.mxu0 %v413
    %3119 = vmatprep.subr.mxu0 %v418
    %3120 = vmatpush1.msra.mxu0 %v417
    %3121 = vmatprep.subr.mxu0 %v422
    %3122 = vmatpush1.msra.mxu0 %v421
    %3123 = vmatprep.subr.mxu0 %v426
    %3124 = vmatpush1.msra.mxu0 %v425
    %3125 = vmatprep.subr.mxu0 %v430
    %3126 = vmatpush1.msra.mxu0 %v429
    %3127 = vmatprep.subr.mxu0 %v434
    %3128 = vmatpush1.msra.mxu0 %v433
    %3129 = vmatprep.subr.mxu0 %v438
    %3130 = vmatpush1.msra.mxu0 %v437
    %3131 = vmatprep.subr.mxu0 %v442
    %3132 = vmatpush1.msra.mxu0 %v441
    %3133 = vmatprep.subr.mxu0 %v446
    %3134 = vmatpush1.msra.mxu0 %v445
    %3135 = vmatprep.subr.mxu0 %v450
    %3136 = vmatpush1.msra.mxu0 %v449
    %3137 = vmatprep.subr.mxu0 %v454
    %3138 = vmatpush1.msra.mxu0 %v453
    %3139 = vmatprep.subr.mxu0 %v458
    %3140 = vmatpush1.msra.mxu0 %v457
    %3141 = vmatprep.subr.mxu0 0.0
    %3142 = vmatpush1.msra.mxu0 0.0
    %3143 = vmatprep.subr.mxu0 0.0
    %3144 = vmatpush1.msra.mxu0 0.0
    %3145 = vmatprep.subr.mxu0 0.0
    %3146 = vmatpush1.msra.mxu0 0.0
    %3147 = vmatprep.subr.mxu0 0.0
    %3148 = vmatpush1.msra.mxu0 0.0
    %3149 = vmatprep.subr.mxu0 0.0
    %3150 = vmatpush1.msra.mxu0 0.0
    %3151 = vmatprep.subr.mxu0 0.0
    %3152 = vmatpush1.msra.mxu0 0.0
    %3153 = vmatprep.subr.mxu0 0.0
    %3154 = vmatpush1.msra.mxu0 0.0
    %3155 = vmatprep.subr.mxu0 0.0
    %3156 = vmatpush1.msra.mxu0 0.0
    %3157 = vmatprep.subr.mxu0 0.0
    %3158 = vmatpush1.msra.mxu0 0.0
    %3159 = vmatprep.subr.mxu0 0.0
    %3160 = vmatpush1.msra.mxu0 0.0
    %3161 = vmatprep.subr.mxu0 0.0
    %3162 = vmatpush1.msra.mxu0 0.0
    %3163 = vmatprep.subr.mxu0 0.0
    %3164 = vmatpush1.msra.mxu0 0.0
    %3165 = vmatprep.subr.mxu0 0.0
    %3166 = vmatpush1.msra.mxu0 0.0
    %3167 = vmatprep.subr.mxu0 0.0
    %3168 = vmatpush1.msra.mxu0 0.0
    %3169 = vmatprep.subr.mxu0 0.0
    %3170 = vmatpush1.msra.mxu0 0.0
    %3171 = vmatprep.subr.mxu0 0.0
    %3172 = vmatpush1.msra.mxu0 0.0
    %3173 = vmatprep.mubr.f32.mxu0 0.0
    %3174 = vmatmul.mubr.f32.gmra.mrb[0].mxu0 %v2860
    %v3175 = vpop.f32.mrb[0].mxu0
    %v3176 = vadd.f32 0.0, %v3175
    %v3177 = vpop.f32.mrb[0].mxu0
    %v3178 = vadd.f32 0.0, %v3177
    %3179 = vdwg.mxu0
    %v3180 = vadd.f32 %v3034, %v3105
    %v3181 = vadd.f32 %v3035, %v3107
    %v3182 = vadd.f32 %v3036, %v3176
    %v3183 = vadd.f32 %v3037, %v3178
    %v3184 = vxor.u32 %v3180, 2147483648
    %v3185 = vxor.u32 %v3181, 2147483648
    %v3186 = vxor.u32 %v3182, 2147483648
    %v3187 = vmul.f32 %v3184, 1.442695
    %v3188 = vpow.pop %v3187
    %v3189 = vmul.f32 %v3185, 1.442695
    %v3190 = vpow.pop %v3189
    %v3191 = vmul.f32 %v3186, 1.442695
    %v3192 = vpow.pop %v3191
    %v3193 = vadd.f32 %v3188, 1.0
    %v3194 = vadd.f32 %v3190, 1.0
    %v3195 = vadd.f32 %v3192, 1.0
    %v3196 = vrcp.pop %v3193
    %v3197 = vmul.f32 1.0, %v3196
    %v3198 = vrcp.pop %v3194
    %v3199 = vmul.f32 1.0, %v3198
    %v3200 = vrcp.pop %v3195
    %v3201 = vmul.f32 1.0, %v3200
    %v3202 = vtanh.pop %v3183
    %v3203 = vmul.f32 %v3199, %v2858
    %v3204 = vmul.f32 %v3197, %v3202
    %v3205 = vadd.f32 %v3203, %v3204
    %v3206 = vtanh.pop %v3205
    %v3207 = vmul.f32 %v3201, %v3206
    %3208 = vmatprep.subr.mxu0 %v630
    %3209 = vmatpush1.msra.mxu0 %v629
    %3210 = vmatprep.subr.mxu0 %v634
    %3211 = vmatpush1.msra.mxu0 %v633
    %3212 = vmatprep.subr.mxu0 %v638
    %3213 = vmatpush1.msra.mxu0 %v637
    %3214 = vmatprep.subr.mxu0 %v642
    %3215 = vmatpush1.msra.mxu0 %v641
    %3216 = vmatprep.subr.mxu0 %v646
    %3217 = vmatpush1.msra.mxu0 %v645
    %3218 = vmatprep.subr.mxu0 %v650
    %3219 = vmatpush1.msra.mxu0 %v649
    %3220 = vmatprep.subr.mxu0 %v654
    %3221 = vmatpush1.msra.mxu0 %v653
    %3222 = vmatprep.subr.mxu0 %v658
    %3223 = vmatpush1.msra.mxu0 %v657
    %3224 = vmatprep.subr.mxu0 %v662
    %3225 = vmatpush1.msra.mxu0 %v661
    %3226 = vmatprep.subr.mxu0 %v666
    %3227 = vmatpush1.msra.mxu0 %v665
    %3228 = vmatprep.subr.mxu0 %v670
    %3229 = vmatpush1.msra.mxu0 %v669
    %3230 = vmatprep.subr.mxu0 %v674
    %3231 = vmatpush1.msra.mxu0 %v673
    %3232 = vmatprep.subr.mxu0 %v678
    %3233 = vmatpush1.msra.mxu0 %v677
    %3234 = vmatprep.subr.mxu0 %v682
    %3235 = vmatpush1.msra.mxu0 %v681
    %3236 = vmatprep.subr.mxu0 %v686
    %3237 = vmatpush1.msra.mxu0 %v685
    %3238 = vmatprep.subr.mxu0 %v690
    %3239 = vmatpush1.msra.mxu0 %v689
    %3240 = vmatprep.subr.mxu0 %v694
    %3241 = vmatpush1.msra.mxu0 %v693
    %3242 = vmatprep.subr.mxu0 %v698
    %3243 = vmatpush1.msra.mxu0 %v697
    %3244 = vmatprep.subr.mxu0 %v702
    %3245 = vmatpush1.msra.mxu0 %v701
    %3246 = vmatprep.subr.mxu0 %v706
    %3247 = vmatpush1.msra.mxu0 %v705
    %3248 = vmatprep.subr.mxu0 %v710
    %3249 = vmatpush1.msra.mxu0 %v709
    %3250 = vmatprep.subr.mxu0 %v714
    %3251 = vmatpush1.msra.mxu0 %v713
    %3252 = vmatprep.subr.mxu0 %v718
    %3253 = vmatpush1.msra.mxu0 %v717
    %3254 = vmatprep.subr.mxu0 %v722
    %3255 = vmatpush1.msra.mxu0 %v721
    %3256 = vmatprep.subr.mxu0 %v726
    %3257 = vmatpush1.msra.mxu0 %v725
    %3258 = vmatprep.subr.mxu0 %v730
    %3259 = vmatpush1.msra.mxu0 %v729
    %3260 = vmatprep.subr.mxu0 %v734
    %3261 = vmatpush1.msra.mxu0 %v733
    %3262 = vmatprep.subr.mxu0 %v738
    %3263 = vmatpush1.msra.mxu0 %v737
    %3264 = vmatprep.subr.mxu0 %v742
    %3265 = vmatpush1.msra.mxu0 %v741
    %3266 = vmatprep.subr.mxu0 %v746
    %3267 = vmatpush1.msra.mxu0 %v745
    %3268 = vmatprep.subr.mxu0 %v750
    %3269 = vmatpush1.msra.mxu0 %v749
    %3270 = vmatprep.subr.mxu0 %v754
    %3271 = vmatpush1.msra.mxu0 %v753
    %3272 = vmatprep.mubr.f32.mxu0 %v3026
    %3273 = vmatmul.mubr.f32.gmra.mrb[0].mxu0 %v3207
    %v3274 = vpop.f32.mrb[0].mxu0
    %v3275 = vadd.f32 %v762, %v3274
    %v3276 = vpop.f32.mrb[0].mxu0
    %v3277 = vadd.f32 %v766, %v3276
    %3278 = vdwg.mxu0
    %3279 = vmatprep.subr.mxu0 %v632
    %3280 = vmatpush1.msra.mxu0 %v631
    %3281 = vmatprep.subr.mxu0 %v636
    %3282 = vmatpush1.msra.mxu0 %v635
    %3283 = vmatprep.subr.mxu0 %v640
    %3284 = vmatpush1.msra.mxu0 %v639
    %3285 = vmatprep.subr.mxu0 %v644
    %3286 = vmatpush1.msra.mxu0 %v643
    %3287 = vmatprep.subr.mxu0 %v648
    %3288 = vmatpush1.msra.mxu0 %v647
    %3289 = vmatprep.subr.mxu0 %v652
    %3290 = vmatpush1.msra.mxu0 %v651
    %3291 = vmatprep.subr.mxu0 %v656
    %3292 = vmatpush1.msra.mxu0 %v655
    %3293 = vmatprep.subr.mxu0 %v660
    %3294 = vmatpush1.msra.mxu0 %v659
    %3295 = vmatprep.subr.mxu0 %v664
    %3296 = vmatpush1.msra.mxu0 %v663
    %3297 = vmatprep.subr.mxu0 %v668
    %3298 = vmatpush1.msra.mxu0 %v667
    %3299 = vmatprep.subr.mxu0 %v672
    %3300 = vmatpush1.msra.mxu0 %v671
    %3301 = vmatprep.subr.mxu0 %v676
    %3302 = vmatpush1.msra.mxu0 %v675
    %3303 = vmatprep.subr.mxu0 %v680
    %3304 = vmatpush1.msra.mxu0 %v679
    %3305 = vmatprep.subr.mxu0 %v684
    %3306 = vmatpush1.msra.mxu0 %v683
    %3307 = vmatprep.subr.mxu0 %v688
    %3308 = vmatpush1.msra.mxu0 %v687
    %3309 = vmatprep.subr.mxu0 %v692
    %3310 = vmatpush1.msra.mxu0 %v691
    %3311 = vmatprep.subr.mxu0 %v696
    %3312 = vmatpush1.msra.mxu0 %v695
    %3313 = vmatprep.subr.mxu0 %v700
    %3314 = vmatpush1.msra.mxu0 %v699
    %3315 = vmatprep.subr.mxu0 %v704
    %3316 = vmatpush1.msra.mxu0 %v703
    %3317 = vmatprep.subr.mxu0 %v708
    %3318 = vmatpush1.msra.mxu0 %v707
    %3319 = vmatprep.subr.mxu0 %v712
    %3320 = vmatpush1.msra.mxu0 %v711
    %3321 = vmatprep.subr.mxu0 %v716
    %3322 = vmatpush1.msra.mxu0 %v715
    %3323 = vmatprep.subr.mxu0 %v720
    %3324 = vmatpush1.msra.mxu0 %v719
    %3325 = vmatprep.subr.mxu0 %v724
    %3326 = vmatpush1.msra.mxu0 %v723
    %3327 = vmatprep.subr.mxu0 %v728
    %3328 = vmatpush1.msra.mxu0 %v727
    %3329 = vmatprep.subr.mxu0 %v732
    %3330 = vmatpush1.msra.mxu0 %v731
    %3331 = vmatprep.subr.mxu0 %v736
    %3332 = vmatpush1.msra.mxu0 %v735
    %3333 = vmatprep.subr.mxu0 %v740
    %3334 = vmatpush1.msra.mxu0 %v739
    %3335 = vmatprep.subr.mxu0 %v744
    %3336 = vmatpush1.msra.mxu0 %v743
    %3337 = vmatprep.subr.mxu0 %v748
    %3338 = vmatpush1.msra.mxu0 %v747
    %3339 = vmatprep.subr.mxu0 %v752
    %3340 = vmatpush1.msra.mxu0 %v751
    %3341 = vmatprep.subr.mxu0 %v756
    %3342 = vmatpush1.msra.mxu0 %v755
    %3343 = vmatprep.mubr.f32.mxu0 %v3026
    %3344 = vmatmul.mubr.f32.gmra.mrb[0].mxu0 %v3207
    %v3345 = vpop.f32.mrb[0].mxu0
    %v3346 = vadd.f32 %v770, %v3345
    %v3347 = vpop.f32.mrb[0].mxu0
    %v3348 = vadd.f32 %v774, %v3347
    %3349 = vdwg.mxu0
    %v3350 = vxor.u32 %v3275, 2147483648
    %v3351 = vxor.u32 %v3277, 2147483648
    %v3352 = vxor.u32 %v3346, 2147483648
    %v3353 = vmul.f32 %v3350, 1.442695
    %v3354 = vpow.pop %v3353
    %v3355 = vmul.f32 %v3351, 1.442695
    %v3356 = vpow.pop %v3355
    %v3357 = vmul.f32 %v3352, 1.442695
    %v3358 = vpow.pop %v3357
    %v3359 = vadd.f32 %v3354, 1.0
    %v3360 = vadd.f32 %v3356, 1.0
    %v3361 = vadd.f32 %v3358, 1.0
    %v3362 = vrcp.pop %v3359
    %v3363 = vmul.f32 1.0, %v3362
    %v3364 = vrcp.pop %v3360
    %v3365 = vmul.f32 1.0, %v3364
    %v3366 = vrcp.pop %v3361
    %v3367 = vmul.f32 1.0, %v3366
    %v3368 = vtanh.pop %v3348
    %v3369 = vmul.f32 %v3365, %v3024
    %v3370 = vmul.f32 %v3363, %v3368
    %v3371 = vadd.f32 %v3369, %v3370
    %v3372 = vtanh.pop %v3371
    %v3373 = vmul.f32 %v3367, %v3372
    %v3374 = vstv %s3030
    %v3375 = vmul.f32 %v3374, %v3373
    %v3376 = vadd.f32 %v3029, %v3375
    %v3377 = vld [vmem:[%s7] sm:$0xff]
    %v3378 = vld [vmem:[%s7 + $0x8] sm:$0xff]
    %v3379 = vld [vmem:[%s7 + $0x10] sm:$0xff]
    %v3380 = vld [vmem:[%s7 + $0x18] sm:$0xff]
    %v3381 = vld [vmem:[%s7 + $0x20] sm:$0xff]
    %v3382 = vld [vmem:[%s7 + $0x28] sm:$0xff]
    %v3383 = vld [vmem:[%s7 + $0x30] sm:$0xff]
    %v3384 = vld [vmem:[%s7 + $0x38] sm:$0xff]
    %v3385 = vld [vmem:[%s7 + $0x40] sm:$0xff]
    %v3386 = vld [vmem:[%s7 + $0x48] sm:$0xff]
    %v3387 = vld [vmem:[%s7 + $0x50] sm:$0xff]
    %v3388 = vld [vmem:[%s7 + $0x58] sm:$0xff]
    %v3389 = vld [vmem:[%s7 + $0x60] sm:$0xff]
    %v3390 = vld [vmem:[%s7 + $0x68] sm:$0xff]
    %v3391 = vld [vmem:[%s7 + $0x70] sm:$0xff]
    %v3392 = vld [vmem:[%s7 + $0x78] sm:$0xff]
    %3393 = vmatprep.subr.mxu0 0.0
    %3394 = vmatpush1.msra.mxu0 %v3377
    %3395 = vmatprep.subr.mxu0 0.0
    %3396 = vmatpush1.msra.mxu0 %v3378
    %3397 = vmatprep.subr.mxu0 0.0
    %3398 = vmatpush1.msra.mxu0 %v3379
    %3399 = vmatprep.subr.mxu0 0.0
    %3400 = vmatpush1.msra.mxu0 %v3380
    %3401 = vmatprep.subr.mxu0 0.0
    %3402 = vmatpush1.msra.mxu0 %v3381
    %3403 = vmatprep.subr.mxu0 0.0
    %3404 = vmatpush1.msra.mxu0 %v3382
    %3405 = vmatprep.subr.mxu0 0.0
    %3406 = vmatpush1.msra.mxu0 %v3383
    %3407 = vmatprep.subr.mxu0 0.0
    %3408 = vmatpush1.msra.mxu0 %v3384
    %3409 = vmatprep.subr.mxu0 0.0
    %3410 = vmatpush1.msra.mxu0 %v3385
    %3411 = vmatprep.subr.mxu0 0.0
    %3412 = vmatpush1.msra.mxu0 %v3386
    %3413 = vmatprep.subr.mxu0 0.0
    %3414 = vmatpush1.msra.mxu0 %v3387
    %3415 = vmatprep.subr.mxu0 0.0
    %3416 = vmatpush1.msra.mxu0 %v3388
    %3417 = vmatprep.subr.mxu0 0.0
    %3418 = vmatpush1.msra.mxu0 %v3389
    %3419 = vmatprep.subr.mxu0 0.0
    %3420 = vmatpush1.msra.mxu0 %v3390
    %3421 = vmatprep.subr.mxu0 0.0
    %3422 = vmatpush1.msra.mxu0 %v3391
    %3423 = vmatprep.subr.mxu0 0.0
    %3424 = vmatpush1.msra.mxu0 %v3392
    %3425 = vmatprep.subr.mxu0 0.0
    %3426 = vmatpush1.msra.mxu0 0.0
    %3427 = vmatprep.subr.mxu0 0.0
    %3428 = vmatpush1.msra.mxu0 0.0
    %3429 = vmatprep.subr.mxu0 0.0
    %3430 = vmatpush1.msra.mxu0 0.0
    %3431 = vmatprep.subr.mxu0 0.0
    %3432 = vmatpush1.msra.mxu0 0.0
    %3433 = vmatprep.subr.mxu0 0.0
    %3434 = vmatpush1.msra.mxu0 0.0
    %3435 = vmatprep.subr.mxu0 0.0
    %3436 = vmatpush1.msra.mxu0 0.0
    %3437 = vmatprep.subr.mxu0 0.0
    %3438 = vmatpush1.msra.mxu0 0.0
    %3439 = vmatprep.subr.mxu0 0.0
    %3440 = vmatpush1.msra.mxu0 0.0
    %3441 = vmatprep.subr.mxu0 0.0
    %3442 = vmatpush1.msra.mxu0 0.0
    %3443 = vmatprep.subr.mxu0 0.0
    %3444 = vmatpush1.msra.mxu0 0.0
    %3445 = vmatprep.subr.mxu0 0.0
    %3446 = vmatpush1.msra.mxu0 0.0
    %3447 = vmatprep.subr.mxu0 0.0
    %3448 = vmatpush1.msra.mxu0 0.0
    %3449 = vmatprep.subr.mxu0 0.0
    %3450 = vmatpush1.msra.mxu0 0.0
    %3451 = vmatprep.subr.mxu0 0.0
    %3452 = vmatpush1.msra.mxu0 0.0
    %3453 = vmatprep.subr.mxu0 0.0
    %3454 = vmatpush1.msra.mxu0 0.0
    %3455 = vmatprep.subr.mxu0 0.0
    %3456 = vmatpush1.msra.mxu0 0.0
    %3457 = vmatprep.mubr.f32.mxu0 0.0
    %3458 = vmatmul.mubr.f32.gmra.mrb[0].mxu0 %v3376
    %v3459 = vpop.f32.mrb[0].mxu0
    %v3460 = vadd.f32 0.0, %v3459
    %v3461 = vpop.f32.mrb[0].mxu0
    %3462 = vdwg.mxu0
    %vm3463 = vcmask 23552
    %3464 = vst.msk [vmem:[%s8] sm:$0xff] %vm3463, %v3460
    // Predicated region
    $region46: #{tpu_custom_call.1} parent=1 // pred_check
      _
    $region47: #{tpu_custom_call.1} parent=1 // pred_check_branch
      %3466 = sbr.rel (0) target = $region49
    $region48: #{tpu_custom_call.1} parent=1 // pred_region
      _
    $region49: #{tpu_custom_call.1} parent=1 // pred_fallthru
      _
    // Predicated region
    $region50: #{tpu_custom_call.1} parent=1 // pred_check
      _
    $region51: #{tpu_custom_call.1} parent=1 // pred_check_branch
      %3468 = sbr.rel (0) target = $region53
    $region52: #{tpu_custom_call.1} parent=1 // pred_region
      _
    $region53: #{tpu_custom_call.1} parent=1 // pred_fallthru
      _
    %3469 = vsyncpa [#allocation4], 1
    %3470 = vsyncpa [#allocation7], 1
    %3471 = vsyncpa [#allocation5], 1

</llo_original>
